<compile_context>
chip_gen: v5e
topology: v5e:2x2
jax: 0.10.0
libtpu: 0.0.40
codegen_flags: <defaults>
</compile_context>

<pallas_src>
import math
from functools import partial

import jax
import jax.numpy as jnp
from jax.experimental import pallas as pl
from jax.experimental.pallas import tpu as pltpu

# ----------------------------- configuration -------------------------------
EMBED_DIM = 64            # CLIP joint embedding dim
OUT_PAD   = 128           # lane-dense output width (>= EMBED_DIM)

# shared tower architecture (toy config: both towers identical width/depth)
WIDTH  = 64
LAYERS = 2
HEADS  = 2
MLP    = 4 * WIDTH

# vision tower (VisionTransformer)
IMAGE_SIZE = 16
PATCH_SIZE = 4
GRID_      = IMAGE_SIZE // PATCH_SIZE
V_SEQ      = GRID_ * GRID_ + 1        # 17 (class token + patches)
V_SEQ_PAD  = 24                       # sublane-aligned per-image block

# text tower (TextTransformer)
CONTEXT_LEN = 8
VOCAB_SIZE  = 64

LN_EPS  = 1e-5
NEG_INF = -1e9

# packed small-parameter slab layout (per tower)
ROW_W                = MLP            # 256 lanes per row
SMALL_ROWS_PER_LAYER = 8              # ln1_w, ln1_b, bqkv, bo, ln2_w, ln2_b, b1, b2
SMALL_ROWS           = LAYERS * SMALL_ROWS_PER_LAYER + 4   # + lnpre_w/b, lnf_w/b
SMALL_ROWS_PAD       = ((SMALL_ROWS + 7) // 8) * 8

assert V_SEQ <= V_SEQ_PAD and V_SEQ_PAD % 8 == 0
assert EMBED_DIM <= OUT_PAD


# ------------------------- in-kernel math helpers ---------------------------
def _ln(x, w, b):
    mu = jnp.mean(x, axis=-1, keepdims=True)
    xc = x - mu
    var = jnp.mean(xc * xc, axis=-1, keepdims=True)
    return xc * jax.lax.rsqrt(var + LN_EPS) * w + b


def _erf(x):
    # Abramowitz & Stegun 7.1.26; divide replaced by EUP reciprocal (approx).
    a1, a2, a3, a4, a5 = 0.254829592, -0.284496736, 1.421413741, -1.453152027, 1.061405429
    p = 0.3275911
    s = jnp.where(x >= 0.0, 1.0, -1.0)
    ax = jnp.abs(x)
    t = pl.reciprocal(1.0 + p * ax, approx=True)
    poly = ((((a5 * t + a4) * t + a3) * t + a2) * t + a1) * t
    return s * (1.0 - poly * jnp.exp(-ax * ax))


def _gelu(x):
    # erf-based GELU, matching nn.GELU (default)
    return 0.5 * x * (1.0 + _erf(x * 0.7071067811865476))


# ------------------------------ fused kernel ---------------------------------
def _clip_kernel(x_ref, abias_ref, pool_ref, w_in_ref, b_in_ref, small_ref,
                 wqkv_ref, wo_ref, w1_ref, w2_ref, proj_ref, out_ref,
                 *, num_heads, num_layers, width):
    D = width
    hd = D // num_heads

    def row(r, n):                      # (1, n) slice of the packed small-param slab
        return small_ref[r:r + 1, :n]

    base = num_layers * SMALL_ROWS_PER_LAYER
    lnpre_w, lnpre_b = row(base + 0, D), row(base + 1, D)
    lnf_w, lnf_b = row(base + 2, D), row(base + 3, D)

    # head-selection lane masks (compile-time constants)
    lane = jax.lax.broadcasted_iota(jnp.int32, (1, D), 1)
    head_mask = [((lane >= hh * hd) & (lane < (hh + 1) * hd)).astype(jnp.float32)
                 for hh in range(num_heads)]

    is_vis = (pl.program_id(0) == 0).astype(jnp.float32)

    # vision-only input stage: patch-embed matmul + cls/pos bias + ln_pre
    x0 = x_ref[...]
    xin = jnp.dot(x0, w_in_ref[...], preferred_element_type=jnp.float32) + b_in_ref[...]
    xv = _ln(xin, lnpre_w, lnpre_b)
    x = is_vis * xv + (1.0 - is_vis) * x0        # text tower enters untouched

    abias = abias_ref[...]

    for l in range(num_layers):
        r0 = l * SMALL_ROWS_PER_LAYER
        ln1_w, ln1_b = row(r0 + 0, D), row(r0 + 1, D)
        bqkv = row(r0 + 2, 3 * D)
        bo = row(r0 + 3, D)
        ln2_w, ln2_b = row(r0 + 4, D), row(r0 + 5, D)
        b1 = row(r0 + 6, 4 * D)
        b2 = row(r0 + 7, D)

        # ---- attention: fused QKV, per-head lane slices, fused out-proj ----
        h = _ln(x, ln1_w, ln1_b)
        qkv = jnp.dot(h, wqkv_ref[l], preferred_element_type=jnp.float32) + bqkv
        V = qkv[:, 2 * D:3 * D]                              # (M, D), lane-aligned
        ctx = None
        for hh in range(num_heads):
            q = qkv[:, hh * hd:(hh + 1) * hd]                # scale folded into Wq/bq
            k = qkv[:, D + hh * hd:D + (hh + 1) * hd]
            s = jax.lax.dot_general(q, k, (((1,), (1,)), ((), ())),
                                    preferred_element_type=jnp.float32)
            s = s + abias
            s = s - jnp.max(s, axis=-1, keepdims=True)
            p = jnp.exp(s)
            p = p * pl.reciprocal(jnp.sum(p, axis=-1, keepdims=True), approx=True)
            part = jnp.dot(p, V * head_mask[hh], preferred_element_type=jnp.float32)
            ctx = part if ctx is None else ctx + part        # (M, D) full-width context
        x = x + jnp.dot(ctx, wo_ref[l], preferred_element_type=jnp.float32) + bo

        # ---- MLP ----
        h2 = _ln(x, ln2_w, ln2_b)
        h2 = jnp.dot(h2, w1_ref[l], preferred_element_type=jnp.float32) + b1
        h2 = _gelu(h2)
        h2 = jnp.dot(h2, w2_ref[l], preferred_element_type=jnp.float32) + b2
        x = x + h2

    # ---- pooling (one-hot rows over folded batch), final LN, proj, L2-norm ----
    pooled = jnp.dot(pool_ref[...], x, preferred_element_type=jnp.float32)    # (B, D)
    pooled = _ln(pooled, lnf_w, lnf_b)
    y = jnp.dot(pooled, proj_ref[...], preferred_element_type=jnp.float32)    # (B, OUT_PAD)
    ss = jnp.sum(y * y, axis=-1, keepdims=True)               # pad cols are zero
    out_ref[...] = y * jax.lax.rsqrt(jnp.maximum(ss, 1e-24))   # == y / max(|y|, 1e-12)


# ---------------------------- weight packing ---------------------------------
def _pack_tower_weights(blocks, lnpre_w, lnpre_b, lnf_w, lnf_b, proj, D, num_heads):
    """One tower -> (small_slab, wqkv, wo, w1, w2, proj_padded)."""
    hd = D // num_heads
    scale = hd ** -0.5

    def r(v):
        v = v.reshape(-1).astype(jnp.float32)
        return jnp.pad(v, (0, ROW_W - v.shape[0]))

    rows = []
    for p in blocks:
        bqkv = p['bqkv'].reshape(-1)
        bqkv = jnp.concatenate([bqkv[:D] * scale, bqkv[D:]])     # fold q scale
        rows += [r(p['ln1_w']), r(p['ln1_b']), r(bqkv), r(p['bo']),
                 r(p['ln2_w']), r(p['ln2_b']), r(p['b1']), r(p['b2'])]
    rows += [r(lnpre_w), r(lnpre_b), r(lnf_w), r(lnf_b)]
    small = jnp.stack(rows)
    small = jnp.pad(small, ((0, SMALL_ROWS_PAD - small.shape[0]), (0, 0)))

    wqkv = jnp.stack([jnp.concatenate([p['wqkv'][:, :D] * scale, p['wqkv'][:, D:]], axis=1)
                      for p in blocks])                            # (L, D, 3D)
    wo = jnp.stack([p['wo'] for p in blocks])                      # (L, D, D)
    w1 = jnp.stack([p['w1'] for p in blocks])                      # (L, D, 4D)
    w2 = jnp.stack([p['w2'] for p in blocks])                      # (L, 4D, D)
    proj_pad = jnp.zeros((D, OUT_PAD), jnp.float32).at[:, :proj.shape[1]].set(proj)
    return small, wqkv, wo, w1, w2, proj_pad


# ------------------------------ forward pass ---------------------------------
def custom_text_clip_forward(image, text, params):
    """Matches CustomTextCLIP.forward(image, text) with output_dict=False,
    logit_bias=None: returns (image_features, text_features, logit_scale.exp())."""
    vp, tp = params['visual'], params['text']
    B, C = image.shape[0], image.shape[1]
    S_FOLD = B * V_SEQ_PAD
    assert text.shape[0] == B and B * CONTEXT_LEN <= S_FOLD

    P, g = PATCH_SIZE, GRID_
    K = C * P * P

    # ---------- vision slab: im2col (glue) + batch folded over sublanes ----------
    patches = (image.reshape(B, C, g, P, g, P)
                    .transpose(0, 2, 4, 1, 3, 5)
                    .reshape(B, g * g, K))
    x_vis = jnp.zeros((B, V_SEQ_PAD, WIDTH), jnp.float32)
    x_vis = x_vis.at[:, 1:1 + g * g, :K].set(patches)
    x_vis = x_vis.reshape(S_FOLD, WIDTH)

    w_in_vis = jnp.zeros((WIDTH, WIDTH), jnp.float32)              # K padded 48 -> 64
    w_in_vis = w_in_vis.at[:K, :].set(vp['conv_w'].reshape(WIDTH, K).T)
    b_blk = jnp.zeros((V_SEQ_PAD, WIDTH), jnp.float32)
    b_blk = b_blk.at[:V_SEQ].set(vp['pos']).at[0].add(vp['cls'])   # cls + pos bias
    b_in_vis = jnp.tile(b_blk, (B, 1))

    r = jnp.arange(S_FOLD)
    same_v = (r[:, None] // V_SEQ_PAD) == (r[None, :] // V_SEQ_PAD)
    key_ok_v = (r % V_SEQ_PAD) < V_SEQ
    abias_vis = jnp.where(same_v & key_ok_v[None, :], 0.0, NEG_INF).astype(jnp.float32)

    pool_vis = jnp.zeros((B, S_FOLD), jnp.float32)
    pool_vis = pool_vis.at[jnp.arange(B), jnp.arange(B) * V_SEQ_PAD].set(1.0)   # CLS rows

    # ---------- text slab: token-emb gather + pos (glue), batch folded ----------
    S = CONTEXT_LEN
    x_txt_v = jnp.take(tp['tok_emb'], text, axis=0) + tp['pos'][None, :S]
    x_txt = jnp.zeros((S_FOLD, WIDTH), jnp.float32).at[:B * S].set(
        x_txt_v.reshape(B * S, WIDTH))

    same_t = (r[:, None] // S) == (r[None, :] // S)
    valid_t = r < B * S
    causal_t = (r[None, :] % S) <= (r[:, None] % S)
    abias_txt = jnp.where(same_t & causal_t & valid_t[:, None] & valid_t[None, :],
                          0.0, NEG_INF).astype(jnp.float32)

    eot = jnp.argmax(text, axis=-1)                                # EOT pooling index
    pool_txt = jnp.zeros((B, S_FOLD), jnp.float32)
    pool_txt = pool_txt.at[jnp.arange(B), jnp.arange(B) * S + eot].set(1.0)

    w_in_txt = jnp.zeros((WIDTH, WIDTH), jnp.float32)              # unused branch
    b_in_txt = jnp.zeros((S_FOLD, WIDTH), jnp.float32)

    # ---------- per-tower weight packing (trace-time, free) ----------
    small_v, wqkv_v, wo_v, w1_v, w2_v, proj_v = _pack_tower_weights(
        vp['blocks'], vp['ln_pre_w'], vp['ln_pre_b'], vp['ln_post_w'], vp['ln_post_b'],
        vp['proj'], WIDTH, HEADS)
    ones = jnp.ones((WIDTH,), jnp.float32)
    zeros = jnp.zeros((WIDTH,), jnp.float32)
    small_t, wqkv_t, wo_t, w1_t, w2_t, proj_t = _pack_tower_weights(
        tp['blocks'], ones, zeros, tp['ln_final_w'], tp['ln_final_b'],
        tp['text_proj'], WIDTH, HEADS)

    stk = lambda a, b: jnp.stack([a, b])
    args = (stk(x_vis, x_txt), stk(abias_vis, abias_txt), stk(pool_vis, pool_txt),
            stk(w_in_vis, w_in_txt), stk(b_in_vis, b_in_txt), stk(small_v, small_t),
            stk(wqkv_v, wqkv_t), stk(wo_v, wo_t), stk(w1_v, w1_t), stk(w2_v, w2_t),
            stk(proj_v, proj_t))

    def tower(shape):
        return pl.BlockSpec((None,) + shape, lambda t, _n=len(shape): (t,) + (0,) * _n)

    in_specs = [
        tower((S_FOLD, WIDTH)),             # x
        tower((S_FOLD, S_FOLD)),            # block-diag attention bias
        tower((B, S_FOLD)),                 # pooling one-hot rows
        tower((WIDTH, WIDTH)),              # input projection (patch embed / unused)
        tower((S_FOLD, WIDTH)),             # input bias (cls + pos / zeros)
        tower((SMALL_ROWS_PAD, ROW_W)),     # packed small params
        tower((LAYERS, WIDTH, 3 * WIDTH)),  # wqkv
        tower((LAYERS, WIDTH, WIDTH)),      # wo
        tower((LAYERS, WIDTH, MLP)),        # w1
        tower((LAYERS, MLP, WIDTH)),        # w2
        tower((WIDTH, OUT_PAD)),            # output projection (lane padded)
    ]

    out = pl.pallas_call(
        partial(_clip_kernel, num_heads=HEADS, num_layers=LAYERS, width=WIDTH),
        grid=(2,),                           # tower axis: vision=0, text=1
        in_specs=in_specs,
        out_specs=tower((B, OUT_PAD)),
        out_shape=jax.ShapeDtypeStruct((2, B, OUT_PAD), jnp.float32),
        compiler_params=pltpu.CompilerParams(dimension_semantics=("parallel",)),
    )(*args)

    image_features = out[0, :, :EMBED_DIM]
    text_features = out[1, :, :EMBED_DIM]
    return image_features, text_features, jnp.exp(params['logit_scale'])


# --------------------------- parameter construction -------------------------
def init_params(key):
    keys = iter(jax.random.split(key, 128))

    def nrm(shape, scale=0.02):
        return scale * jax.random.normal(next(keys), shape, jnp.float32)

    def block_params(D, mlp):
        return dict(
            ln1_w=1.0 + nrm((D,)), ln1_b=nrm((D,)),
            wqkv=nrm((D, 3 * D)), bqkv=nrm((3 * D,)),
            wo=nrm((D, D)), bo=nrm((D,)),
            ln2_w=1.0 + nrm((D,)), ln2_b=nrm((D,)),
            w1=nrm((D, mlp)), b1=nrm((mlp,)),
            w2=nrm((mlp, D)), b2=nrm((D,)),
        )

    visual = dict(
        conv_w=nrm((WIDTH, 3, PATCH_SIZE, PATCH_SIZE)),
        cls=nrm((WIDTH,), WIDTH ** -0.5),
        pos=nrm((V_SEQ, WIDTH), WIDTH ** -0.5),
        ln_pre_w=1.0 + nrm((WIDTH,)), ln_pre_b=nrm((WIDTH,)),
        blocks=[block_params(WIDTH, MLP) for _ in range(LAYERS)],
        ln_post_w=1.0 + nrm((WIDTH,)), ln_post_b=nrm((WIDTH,)),
        proj=nrm((WIDTH, EMBED_DIM), WIDTH ** -0.5),
    )
    text = dict(
        tok_emb=nrm((VOCAB_SIZE, WIDTH)),
        pos=nrm((CONTEXT_LEN, WIDTH), 0.01),
        blocks=[block_params(WIDTH, MLP) for _ in range(LAYERS)],
        ln_final_w=1.0 + nrm((WIDTH,)), ln_final_b=nrm((WIDTH,)),
        text_proj=nrm((WIDTH, EMBED_DIM), WIDTH ** -0.5),
    )
    return dict(visual=visual, text=text,
                logit_scale=jnp.array(math.log(1.0 / 0.07), jnp.float32))


# --------------------------------- main --------------------------------------
if __name__ == "__main__":
    root = jax.random.PRNGKey(0)
    pkey, ikey, tkey = jax.random.split(root, 3)
    params = init_params(pkey)

    image = jax.random.normal(ikey, (2, 3, IMAGE_SIZE, IMAGE_SIZE), jnp.float32)  # NCHW
    text = jax.random.randint(tkey, (2, CONTEXT_LEN), 1, VOCAB_SIZE, dtype=jnp.int32)

    img_f, txt_f, logit_scale = jax.jit(custom_text_clip_forward)(image, text, params)
    jax.block_until_ready((img_f, txt_f, logit_scale))

    assert img_f.shape == (2, EMBED_DIM)
    assert txt_f.shape == (2, EMBED_DIM)
    assert logit_scale.shape == ()
    assert bool(jnp.all(jnp.isfinite(img_f))) and bool(jnp.all(jnp.isfinite(txt_f)))
    # outputs are L2-normalized features
    assert bool(jnp.allclose(jnp.sum(img_f * img_f, -1), 1.0, atol=1e-3))
    assert bool(jnp.allclose(jnp.sum(txt_f * txt_f, -1), 1.0, atol=1e-3))
    print("KERNEL_OK")
</pallas_src>

<mosaic_0001>
module attributes {stable_mosaic.version = 11 : i64} {
  func.func @_clip_kernel(%arg0: i32, %arg1: memref<1x48x64xf32, #tpu.memory_space<vmem>>, %arg2: memref<1x48x48xf32, #tpu.memory_space<vmem>>, %arg3: memref<1x2x48xf32, #tpu.memory_space<vmem>>, %arg4: memref<1x64x64xf32, #tpu.memory_space<vmem>>, %arg5: memref<1x48x64xf32, #tpu.memory_space<vmem>>, %arg6: memref<1x24x256xf32, #tpu.memory_space<vmem>>, %arg7: memref<1x2x64x192xf32, #tpu.memory_space<vmem>>, %arg8: memref<1x2x64x64xf32, #tpu.memory_space<vmem>>, %arg9: memref<1x2x64x256xf32, #tpu.memory_space<vmem>>, %arg10: memref<1x2x256x64xf32, #tpu.memory_space<vmem>>, %arg11: memref<1x64x128xf32, #tpu.memory_space<vmem>>, %arg12: memref<1x2x128xf32, #tpu.memory_space<vmem>>) attributes {dimension_semantics = [#tpu.dimension_semantics<parallel>], iteration_bounds = array<i64: 2>, scalar_prefetch = 0 : i64, scratch_operands = 0 : i64, tpu.core_type = #tpu.core_type<tc>, window_params = [{transform_indices = @transform_0, window_bounds = array<i64: 1, 48, 64>}, {transform_indices = @transform_1, window_bounds = array<i64: 1, 48, 48>}, {transform_indices = @transform_2, window_bounds = array<i64: 1, 2, 48>}, {transform_indices = @transform_3, window_bounds = array<i64: 1, 64, 64>}, {transform_indices = @transform_4, window_bounds = array<i64: 1, 48, 64>}, {transform_indices = @transform_5, window_bounds = array<i64: 1, 24, 256>}, {transform_indices = @transform_6, window_bounds = array<i64: 1, 2, 64, 192>}, {transform_indices = @transform_7, window_bounds = array<i64: 1, 2, 64, 64>}, {transform_indices = @transform_8, window_bounds = array<i64: 1, 2, 64, 256>}, {transform_indices = @transform_9, window_bounds = array<i64: 1, 2, 256, 64>}, {transform_indices = @transform_10, window_bounds = array<i64: 1, 64, 128>}, {transform_indices = @transform_11, window_bounds = array<i64: 1, 2, 128>}]} {
    %c0 = arith.constant 0 : index
    %c16 = arith.constant 16 : index
    %c0_0 = arith.constant 0 : index
    %0 = vector.load %arg6[%c0, %c16, %c0_0] : memref<1x24x256xf32, #tpu.memory_space<vmem>>, vector<1x1x64xf32>
    %1 = vector.shape_cast %0 : vector<1x1x64xf32> to vector<1x64xf32>
    %c0_1 = arith.constant 0 : index
    %c17 = arith.constant 17 : index
    %c0_2 = arith.constant 0 : index
    %2 = vector.load %arg6[%c0_1, %c17, %c0_2] : memref<1x24x256xf32, #tpu.memory_space<vmem>>, vector<1x1x64xf32>
    %3 = vector.shape_cast %2 : vector<1x1x64xf32> to vector<1x64xf32>
    %c0_3 = arith.constant 0 : index
    %c18 = arith.constant 18 : index
    %c0_4 = arith.constant 0 : index
    %4 = vector.load %arg6[%c0_3, %c18, %c0_4] : memref<1x24x256xf32, #tpu.memory_space<vmem>>, vector<1x1x64xf32>
    %5 = vector.shape_cast %4 : vector<1x1x64xf32> to vector<1x64xf32>
    %c0_5 = arith.constant 0 : index
    %c19 = arith.constant 19 : index
    %c0_6 = arith.constant 0 : index
    %6 = vector.load %arg6[%c0_5, %c19, %c0_6] : memref<1x24x256xf32, #tpu.memory_space<vmem>>, vector<1x1x64xf32>
    %7 = vector.shape_cast %6 : vector<1x1x64xf32> to vector<1x64xf32>
    %8 = tpu.iota {dimensions = array<i32: 1>} : vector<1x64xi32>
    %c0_i32 = arith.constant 0 : i32
    %9 = vector.broadcast %c0_i32 : i32 to vector<1x64xi32>
    %10 = arith.cmpi sge, %8, %9 : vector<1x64xi32>
    %c32_i32 = arith.constant 32 : i32
    %11 = vector.broadcast %c32_i32 : i32 to vector<1x64xi32>
    %12 = arith.cmpi slt, %8, %11 : vector<1x64xi32>
    %13 = arith.andi %10, %12 : vector<1x64xi1>
    %14 = arith.extui %13 : vector<1x64xi1> to vector<1x64xi32>
    %15 = arith.sitofp %14 : vector<1x64xi32> to vector<1x64xf32>
    %c32_i32_7 = arith.constant 32 : i32
    %16 = vector.broadcast %c32_i32_7 : i32 to vector<1x64xi32>
    %17 = arith.cmpi sge, %8, %16 : vector<1x64xi32>
    %c64_i32 = arith.constant 64 : i32
    %18 = vector.broadcast %c64_i32 : i32 to vector<1x64xi32>
    %19 = arith.cmpi slt, %8, %18 : vector<1x64xi32>
    %20 = arith.andi %17, %19 : vector<1x64xi1>
    %21 = arith.extui %20 : vector<1x64xi1> to vector<1x64xi32>
    %22 = arith.sitofp %21 : vector<1x64xi32> to vector<1x64xf32>
    %c0_i32_8 = arith.constant 0 : i32
    %23 = arith.cmpi eq, %arg0, %c0_i32_8 : i32
    %24 = arith.extui %23 : i1 to i32
    %25 = arith.sitofp %24 : i32 to f32
    %c0_9 = arith.constant 0 : index
    %c0_10 = arith.constant 0 : index
    %c0_11 = arith.constant 0 : index
    %26 = vector.load %arg1[%c0_9, %c0_10, %c0_11] : memref<1x48x64xf32, #tpu.memory_space<vmem>>, vector<1x48x64xf32>
    %27 = vector.shape_cast %26 : vector<1x48x64xf32> to vector<48x64xf32>
    %c0_12 = arith.constant 0 : index
    %c0_13 = arith.constant 0 : index
    %c0_14 = arith.constant 0 : index
    %28 = vector.load %arg4[%c0_12, %c0_13, %c0_14] : memref<1x64x64xf32, #tpu.memory_space<vmem>>, vector<1x64x64xf32>
    %29 = vector.shape_cast %28 : vector<1x64x64xf32> to vector<64x64xf32>
    %cst = arith.constant dense<0.000000e+00> : vector<48x64xf32>
    %30 = tpu.matmul %27, %29, %cst {dimension_numbers = #tpu.dot_dimension_numbers<[1], [0], [0], [1], [0, 0, 1, 1], [], []>} : vector<48x64xf32>, vector<64x64xf32>, vector<48x64xf32> -> vector<48x64xf32>
    %c0_15 = arith.constant 0 : index
    %c0_16 = arith.constant 0 : index
    %c0_17 = arith.constant 0 : index
    %31 = vector.load %arg5[%c0_15, %c0_16, %c0_17] : memref<1x48x64xf32, #tpu.memory_space<vmem>>, vector<1x48x64xf32>
    %32 = vector.shape_cast %31 : vector<1x48x64xf32> to vector<48x64xf32>
    %33 = arith.addf %30, %32 : vector<48x64xf32>
    %cst_18 = arith.constant dense<0.000000e+00> : vector<48xf32>
    %34 = vector.multi_reduction <add>, %33, %cst_18 [1] : vector<48x64xf32> to vector<48xf32>
    %35 = vector.shape_cast %34 : vector<48xf32> to vector<48x1xf32>
    %cst_19 = arith.constant 6.400000e+01 : f32
    %36 = vector.broadcast %cst_19 : f32 to vector<48x1xf32>
    %37 = arith.divf %35, %36 : vector<48x1xf32>
    %38 = vector.broadcast %37 : vector<48x1xf32> to vector<48x64xf32>
    %39 = arith.subf %33, %38 : vector<48x64xf32>
    %40 = arith.mulf %39, %39 : vector<48x64xf32>
    %cst_20 = arith.constant dense<0.000000e+00> : vector<48xf32>
    %41 = vector.multi_reduction <add>, %40, %cst_20 [1] : vector<48x64xf32> to vector<48xf32>
    %42 = vector.shape_cast %41 : vector<48xf32> to vector<48x1xf32>
    %cst_21 = arith.constant 6.400000e+01 : f32
    %43 = vector.broadcast %cst_21 : f32 to vector<48x1xf32>
    %44 = arith.divf %42, %43 : vector<48x1xf32>
    %cst_22 = arith.constant 9.99999974E-6 : f32
    %45 = vector.broadcast %cst_22 : f32 to vector<48x1xf32>
    %46 = arith.addf %44, %45 : vector<48x1xf32>
    %47 = math.rsqrt %46 : vector<48x1xf32>
    %48 = vector.broadcast %47 : vector<48x1xf32> to vector<48x64xf32>
    %49 = arith.mulf %39, %48 : vector<48x64xf32>
    %50 = vector.broadcast %1 : vector<1x64xf32> to vector<48x64xf32>
    %51 = arith.mulf %49, %50 : vector<48x64xf32>
    %52 = vector.broadcast %3 : vector<1x64xf32> to vector<48x64xf32>
    %53 = arith.addf %51, %52 : vector<48x64xf32>
    %54 = vector.broadcast %25 : f32 to vector<48x64xf32>
    %55 = arith.mulf %54, %53 : vector<48x64xf32>
    %cst_23 = arith.constant 1.000000e+00 : f32
    %56 = arith.subf %cst_23, %25 : f32
    %57 = vector.broadcast %56 : f32 to vector<48x64xf32>
    %58 = arith.mulf %57, %27 : vector<48x64xf32>
    %59 = arith.addf %55, %58 : vector<48x64xf32>
    %c0_24 = arith.constant 0 : index
    %c0_25 = arith.constant 0 : index
    %c0_26 = arith.constant 0 : index
    %60 = vector.load %arg2[%c0_24, %c0_25, %c0_26] : memref<1x48x48xf32, #tpu.memory_space<vmem>>, vector<1x48x48xf32>
    %61 = vector.shape_cast %60 : vector<1x48x48xf32> to vector<48x48xf32>
    %c0_27 = arith.constant 0 : index
    %c0_28 = arith.constant 0 : index
    %c0_29 = arith.constant 0 : index
    %62 = vector.load %arg6[%c0_27, %c0_28, %c0_29] : memref<1x24x256xf32, #tpu.memory_space<vmem>>, vector<1x1x64xf32>
    %63 = vector.shape_cast %62 : vector<1x1x64xf32> to vector<1x64xf32>
    %c0_30 = arith.constant 0 : index
    %c1 = arith.constant 1 : index
    %c0_31 = arith.constant 0 : index
    %64 = vector.load %arg6[%c0_30, %c1, %c0_31] : memref<1x24x256xf32, #tpu.memory_space<vmem>>, vector<1x1x64xf32>
    %65 = vector.shape_cast %64 : vector<1x1x64xf32> to vector<1x64xf32>
    %c0_32 = arith.constant 0 : index
    %c2 = arith.constant 2 : index
    %c0_33 = arith.constant 0 : index
    %66 = vector.load %arg6[%c0_32, %c2, %c0_33] : memref<1x24x256xf32, #tpu.memory_space<vmem>>, vector<1x1x192xf32>
    %67 = vector.shape_cast %66 : vector<1x1x192xf32> to vector<1x192xf32>
    %c0_34 = arith.constant 0 : index
    %c3 = arith.constant 3 : index
    %c0_35 = arith.constant 0 : index
    %68 = vector.load %arg6[%c0_34, %c3, %c0_35] : memref<1x24x256xf32, #tpu.memory_space<vmem>>, vector<1x1x64xf32>
    %69 = vector.shape_cast %68 : vector<1x1x64xf32> to vector<1x64xf32>
    %c0_36 = arith.constant 0 : index
    %c4 = arith.constant 4 : index
    %c0_37 = arith.constant 0 : index
    %70 = vector.load %arg6[%c0_36, %c4, %c0_37] : memref<1x24x256xf32, #tpu.memory_space<vmem>>, vector<1x1x64xf32>
    %71 = vector.shape_cast %70 : vector<1x1x64xf32> to vector<1x64xf32>
    %c0_38 = arith.constant 0 : index
    %c5 = arith.constant 5 : index
    %c0_39 = arith.constant 0 : index
    %72 = vector.load %arg6[%c0_38, %c5, %c0_39] : memref<1x24x256xf32, #tpu.memory_space<vmem>>, vector<1x1x64xf32>
    %73 = vector.shape_cast %72 : vector<1x1x64xf32> to vector<1x64xf32>
    %c0_40 = arith.constant 0 : index
    %c6 = arith.constant 6 : index
    %c0_41 = arith.constant 0 : index
    %74 = vector.load %arg6[%c0_40, %c6, %c0_41] : memref<1x24x256xf32, #tpu.memory_space<vmem>>, vector<1x1x256xf32>
    %75 = vector.shape_cast %74 : vector<1x1x256xf32> to vector<1x256xf32>
    %c0_42 = arith.constant 0 : index
    %c7 = arith.constant 7 : index
    %c0_43 = arith.constant 0 : index
    %76 = vector.load %arg6[%c0_42, %c7, %c0_43] : memref<1x24x256xf32, #tpu.memory_space<vmem>>, vector<1x1x64xf32>
    %77 = vector.shape_cast %76 : vector<1x1x64xf32> to vector<1x64xf32>
    %cst_44 = arith.constant dense<0.000000e+00> : vector<48xf32>
    %78 = vector.multi_reduction <add>, %59, %cst_44 [1] : vector<48x64xf32> to vector<48xf32>
    %79 = vector.shape_cast %78 : vector<48xf32> to vector<48x1xf32>
    %cst_45 = arith.constant 6.400000e+01 : f32
    %80 = vector.broadcast %cst_45 : f32 to vector<48x1xf32>
    %81 = arith.divf %79, %80 : vector<48x1xf32>
    %82 = vector.broadcast %81 : vector<48x1xf32> to vector<48x64xf32>
    %83 = arith.subf %59, %82 : vector<48x64xf32>
    %84 = arith.mulf %83, %83 : vector<48x64xf32>
    %cst_46 = arith.constant dense<0.000000e+00> : vector<48xf32>
    %85 = vector.multi_reduction <add>, %84, %cst_46 [1] : vector<48x64xf32> to vector<48xf32>
    %86 = vector.shape_cast %85 : vector<48xf32> to vector<48x1xf32>
    %cst_47 = arith.constant 6.400000e+01 : f32
    %87 = vector.broadcast %cst_47 : f32 to vector<48x1xf32>
    %88 = arith.divf %86, %87 : vector<48x1xf32>
    %cst_48 = arith.constant 9.99999974E-6 : f32
    %89 = vector.broadcast %cst_48 : f32 to vector<48x1xf32>
    %90 = arith.addf %88, %89 : vector<48x1xf32>
    %91 = math.rsqrt %90 : vector<48x1xf32>
    %92 = vector.broadcast %91 : vector<48x1xf32> to vector<48x64xf32>
    %93 = arith.mulf %83, %92 : vector<48x64xf32>
    %94 = vector.broadcast %63 : vector<1x64xf32> to vector<48x64xf32>
    %95 = arith.mulf %93, %94 : vector<48x64xf32>
    %96 = vector.broadcast %65 : vector<1x64xf32> to vector<48x64xf32>
    %97 = arith.addf %95, %96 : vector<48x64xf32>
    %c0_49 = arith.constant 0 : index
    %c0_50 = arith.constant 0 : index
    %c0_51 = arith.constant 0 : index
    %c0_52 = arith.constant 0 : index
    %98 = vector.load %arg7[%c0_49, %c0_50, %c0_51, %c0_52] : memref<1x2x64x192xf32, #tpu.memory_space<vmem>>, vector<1x1x64x192xf32>
    %99 = vector.shape_cast %98 : vector<1x1x64x192xf32> to vector<64x192xf32>
    %cst_53 = arith.constant dense<0.000000e+00> : vector<48x192xf32>
    %100 = tpu.matmul %97, %99, %cst_53 {dimension_numbers = #tpu.dot_dimension_numbers<[1], [0], [0], [1], [0, 0, 1, 1], [], []>} : vector<48x64xf32>, vector<64x192xf32>, vector<48x192xf32> -> vector<48x192xf32>
    %101 = vector.broadcast %67 : vector<1x192xf32> to vector<48x192xf32>
    %102 = arith.addf %100, %101 : vector<48x192xf32>
    %103 = vector.extract_strided_slice %102 {offsets = [0, 128], sizes = [48, 64], strides = [1, 1]} : vector<48x192xf32> to vector<48x64xf32>
    %104 = vector.extract_strided_slice %102 {offsets = [0, 0], sizes = [48, 32], strides = [1, 1]} : vector<48x192xf32> to vector<48x32xf32>
    %105 = vector.extract_strided_slice %102 {offsets = [0, 64], sizes = [48, 32], strides = [1, 1]} : vector<48x192xf32> to vector<48x32xf32>
    %cst_54 = arith.constant dense<0.000000e+00> : vector<48x48xf32>
    %106 = tpu.matmul %104, %105, %cst_54 {dimension_numbers = #tpu.dot_dimension_numbers<[1], [1], [0], [0], [0, 0, 1, 0], [], []>} : vector<48x32xf32>, vector<48x32xf32>, vector<48x48xf32> -> vector<48x48xf32>
    %107 = arith.addf %106, %61 : vector<48x48xf32>
    %cst_55 = arith.constant dense<0xFF800000> : vector<48xf32>
    %108 = vector.multi_reduction <maximumf>, %107, %cst_55 [1] : vector<48x48xf32> to vector<48xf32>
    %109 = vector.shape_cast %108 : vector<48xf32> to vector<48x1xf32>
    %110 = vector.broadcast %109 : vector<48x1xf32> to vector<48x48xf32>
    %111 = arith.subf %107, %110 : vector<48x48xf32>
    %112 = math.exp %111 : vector<48x48xf32>
    %cst_56 = arith.constant dense<0.000000e+00> : vector<48xf32>
    %113 = vector.multi_reduction <add>, %112, %cst_56 [1] : vector<48x48xf32> to vector<48xf32>
    %114 = vector.shape_cast %113 : vector<48xf32> to vector<48x1xf32>
    %115 = tpu.reciprocal %114 {approx = true} : vector<48x1xf32> -> vector<48x1xf32>
    %116 = vector.broadcast %115 : vector<48x1xf32> to vector<48x48xf32>
    %117 = arith.mulf %112, %116 : vector<48x48xf32>
    %118 = vector.broadcast %15 : vector<1x64xf32> to vector<48x64xf32>
    %119 = arith.mulf %103, %118 : vector<48x64xf32>
    %cst_57 = arith.constant dense<0.000000e+00> : vector<48x64xf32>
    %120 = tpu.matmul %117, %119, %cst_57 {dimension_numbers = #tpu.dot_dimension_numbers<[1], [0], [0], [1], [0, 0, 1, 1], [], []>} : vector<48x48xf32>, vector<48x64xf32>, vector<48x64xf32> -> vector<48x64xf32>
    %121 = vector.extract_strided_slice %102 {offsets = [0, 32], sizes = [48, 32], strides = [1, 1]} : vector<48x192xf32> to vector<48x32xf32>
    %122 = vector.extract_strided_slice %102 {offsets = [0, 96], sizes = [48, 32], strides = [1, 1]} : vector<48x192xf32> to vector<48x32xf32>
    %cst_58 = arith.constant dense<0.000000e+00> : vector<48x48xf32>
    %123 = tpu.matmul %121, %122, %cst_58 {dimension_numbers = #tpu.dot_dimension_numbers<[1], [1], [0], [0], [0, 0, 1, 0], [], []>} : vector<48x32xf32>, vector<48x32xf32>, vector<48x48xf32> -> vector<48x48xf32>
    %124 = arith.addf %123, %61 : vector<48x48xf32>
    %cst_59 = arith.constant dense<0xFF800000> : vector<48xf32>
    %125 = vector.multi_reduction <maximumf>, %124, %cst_59 [1] : vector<48x48xf32> to vector<48xf32>
    %126 = vector.shape_cast %125 : vector<48xf32> to vector<48x1xf32>
    %127 = vector.broadcast %126 : vector<48x1xf32> to vector<48x48xf32>
    %128 = arith.subf %124, %127 : vector<48x48xf32>
    %129 = math.exp %128 : vector<48x48xf32>
    %cst_60 = arith.constant dense<0.000000e+00> : vector<48xf32>
    %130 = vector.multi_reduction <add>, %129, %cst_60 [1] : vector<48x48xf32> to vector<48xf32>
    %131 = vector.shape_cast %130 : vector<48xf32> to vector<48x1xf32>
    %132 = tpu.reciprocal %131 {approx = true} : vector<48x1xf32> -> vector<48x1xf32>
    %133 = vector.broadcast %132 : vector<48x1xf32> to vector<48x48xf32>
    %134 = arith.mulf %129, %133 : vector<48x48xf32>
    %135 = vector.broadcast %22 : vector<1x64xf32> to vector<48x64xf32>
    %136 = arith.mulf %103, %135 : vector<48x64xf32>
    %cst_61 = arith.constant dense<0.000000e+00> : vector<48x64xf32>
    %137 = tpu.matmul %134, %136, %cst_61 {dimension_numbers = #tpu.dot_dimension_numbers<[1], [0], [0], [1], [0, 0, 1, 1], [], []>} : vector<48x48xf32>, vector<48x64xf32>, vector<48x64xf32> -> vector<48x64xf32>
    %138 = arith.addf %120, %137 : vector<48x64xf32>
    %c0_62 = arith.constant 0 : index
    %c0_63 = arith.constant 0 : index
    %c0_64 = arith.constant 0 : index
    %c0_65 = arith.constant 0 : index
    %139 = vector.load %arg8[%c0_62, %c0_63, %c0_64, %c0_65] : memref<1x2x64x64xf32, #tpu.memory_space<vmem>>, vector<1x1x64x64xf32>
    %140 = vector.shape_cast %139 : vector<1x1x64x64xf32> to vector<64x64xf32>
    %cst_66 = arith.constant dense<0.000000e+00> : vector<48x64xf32>
    %141 = tpu.matmul %138, %140, %cst_66 {dimension_numbers = #tpu.dot_dimension_numbers<[1], [0], [0], [1], [0, 0, 1, 1], [], []>} : vector<48x64xf32>, vector<64x64xf32>, vector<48x64xf32> -> vector<48x64xf32>
    %142 = arith.addf %59, %141 : vector<48x64xf32>
    %143 = vector.broadcast %69 : vector<1x64xf32> to vector<48x64xf32>
    %144 = arith.addf %142, %143 : vector<48x64xf32>
    %cst_67 = arith.constant dense<0.000000e+00> : vector<48xf32>
    %145 = vector.multi_reduction <add>, %144, %cst_67 [1] : vector<48x64xf32> to vector<48xf32>
    %146 = vector.shape_cast %145 : vector<48xf32> to vector<48x1xf32>
    %cst_68 = arith.constant 6.400000e+01 : f32
    %147 = vector.broadcast %cst_68 : f32 to vector<48x1xf32>
    %148 = arith.divf %146, %147 : vector<48x1xf32>
    %149 = vector.broadcast %148 : vector<48x1xf32> to vector<48x64xf32>
    %150 = arith.subf %144, %149 : vector<48x64xf32>
    %151 = arith.mulf %150, %150 : vector<48x64xf32>
    %cst_69 = arith.constant dense<0.000000e+00> : vector<48xf32>
    %152 = vector.multi_reduction <add>, %151, %cst_69 [1] : vector<48x64xf32> to vector<48xf32>
    %153 = vector.shape_cast %152 : vector<48xf32> to vector<48x1xf32>
    %cst_70 = arith.constant 6.400000e+01 : f32
    %154 = vector.broadcast %cst_70 : f32 to vector<48x1xf32>
    %155 = arith.divf %153, %154 : vector<48x1xf32>
    %cst_71 = arith.constant 9.99999974E-6 : f32
    %156 = vector.broadcast %cst_71 : f32 to vector<48x1xf32>
    %157 = arith.addf %155, %156 : vector<48x1xf32>
    %158 = math.rsqrt %157 : vector<48x1xf32>
    %159 = vector.broadcast %158 : vector<48x1xf32> to vector<48x64xf32>
    %160 = arith.mulf %150, %159 : vector<48x64xf32>
    %161 = vector.broadcast %71 : vector<1x64xf32> to vector<48x64xf32>
    %162 = arith.mulf %160, %161 : vector<48x64xf32>
    %163 = vector.broadcast %73 : vector<1x64xf32> to vector<48x64xf32>
    %164 = arith.addf %162, %163 : vector<48x64xf32>
    %c0_72 = arith.constant 0 : index
    %c0_73 = arith.constant 0 : index
    %c0_74 = arith.constant 0 : index
    %c0_75 = arith.constant 0 : index
    %165 = vector.load %arg9[%c0_72, %c0_73, %c0_74, %c0_75] : memref<1x2x64x256xf32, #tpu.memory_space<vmem>>, vector<1x1x64x256xf32>
    %166 = vector.shape_cast %165 : vector<1x1x64x256xf32> to vector<64x256xf32>
    %cst_76 = arith.constant dense<0.000000e+00> : vector<48x256xf32>
    %167 = tpu.matmul %164, %166, %cst_76 {dimension_numbers = #tpu.dot_dimension_numbers<[1], [0], [0], [1], [0, 0, 1, 1], [], []>} : vector<48x64xf32>, vector<64x256xf32>, vector<48x256xf32> -> vector<48x256xf32>
    %168 = vector.broadcast %75 : vector<1x256xf32> to vector<48x256xf32>
    %169 = arith.addf %167, %168 : vector<48x256xf32>
    %cst_77 = arith.constant 5.000000e-01 : f32
    %170 = vector.broadcast %cst_77 : f32 to vector<48x256xf32>
    %171 = arith.mulf %170, %169 : vector<48x256xf32>
    %cst_78 = arith.constant 0.707106769 : f32
    %172 = vector.broadcast %cst_78 : f32 to vector<48x256xf32>
    %173 = arith.mulf %169, %172 : vector<48x256xf32>
    %cst_79 = arith.constant 0.000000e+00 : f32
    %174 = vector.broadcast %cst_79 : f32 to vector<48x256xf32>
    %175 = arith.cmpf oge, %173, %174 : vector<48x256xf32>
    %cst_80 = arith.constant 1.000000e+00 : f32
    %cst_81 = arith.constant -1.000000e+00 : f32
    %176 = vector.broadcast %cst_80 : f32 to vector<48x256xf32>
    %177 = vector.broadcast %cst_81 : f32 to vector<48x256xf32>
    %178 = arith.select %175, %176, %177 : vector<48x256xi1>, vector<48x256xf32>
    %179 = math.absf %173 : vector<48x256xf32>
    %cst_82 = arith.constant 0.327591091 : f32
    %180 = vector.broadcast %cst_82 : f32 to vector<48x256xf32>
    %181 = arith.mulf %180, %179 : vector<48x256xf32>
    %cst_83 = arith.constant 1.000000e+00 : f32
    %182 = vector.broadcast %cst_83 : f32 to vector<48x256xf32>
    %183 = arith.addf %182, %181 : vector<48x256xf32>
    %184 = tpu.reciprocal %183 {approx = true} : vector<48x256xf32> -> vector<48x256xf32>
    %cst_84 = arith.constant 1.06140542 : f32
    %185 = vector.broadcast %cst_84 : f32 to vector<48x256xf32>
    %186 = arith.mulf %185, %184 : vector<48x256xf32>
    %cst_85 = arith.constant -1.45315206 : f32
    %187 = vector.broadcast %cst_85 : f32 to vector<48x256xf32>
    %188 = arith.addf %186, %187 : vector<48x256xf32>
    %189 = arith.mulf %188, %184 : vector<48x256xf32>
    %cst_86 = arith.constant 1.42141378 : f32
    %190 = vector.broadcast %cst_86 : f32 to vector<48x256xf32>
    %191 = arith.addf %189, %190 : vector<48x256xf32>
    %192 = arith.mulf %191, %184 : vector<48x256xf32>
    %cst_87 = arith.constant -0.284496725 : f32
    %193 = vector.broadcast %cst_87 : f32 to vector<48x256xf32>
    %194 = arith.addf %192, %193 : vector<48x256xf32>
    %195 = arith.mulf %194, %184 : vector<48x256xf32>
    %cst_88 = arith.constant 0.254829586 : f32
    %196 = vector.broadcast %cst_88 : f32 to vector<48x256xf32>
    %197 = arith.addf %195, %196 : vector<48x256xf32>
    %198 = arith.mulf %197, %184 : vector<48x256xf32>
    %cst_89 = arith.constant 0.000000e+00 : f32
    %199 = vector.broadcast %cst_89 : f32 to vector<48x256xf32>
    %200 = arith.subf %199, %179 : vector<48x256xf32>
    %201 = arith.mulf %200, %179 : vector<48x256xf32>
    %202 = math.exp %201 : vector<48x256xf32>
    %203 = arith.mulf %198, %202 : vector<48x256xf32>
    %cst_90 = arith.constant 1.000000e+00 : f32
    %204 = vector.broadcast %cst_90 : f32 to vector<48x256xf32>
    %205 = arith.subf %204, %203 : vector<48x256xf32>
    %206 = arith.mulf %178, %205 : vector<48x256xf32>
    %cst_91 = arith.constant 1.000000e+00 : f32
    %207 = vector.broadcast %cst_91 : f32 to vector<48x256xf32>
    %208 = arith.addf %207, %206 : vector<48x256xf32>
    %209 = arith.mulf %171, %208 : vector<48x256xf32>
    %c0_92 = arith.constant 0 : index
    %c0_93 = arith.constant 0 : index
    %c0_94 = arith.constant 0 : index
    %c0_95 = arith.constant 0 : index
    %210 = vector.load %arg10[%c0_92, %c0_93, %c0_94, %c0_95] : memref<1x2x256x64xf32, #tpu.memory_space<vmem>>, vector<1x1x256x64xf32>
    %211 = vector.shape_cast %210 : vector<1x1x256x64xf32> to vector<256x64xf32>
    %cst_96 = arith.constant dense<0.000000e+00> : vector<48x64xf32>
    %212 = tpu.matmul %209, %211, %cst_96 {dimension_numbers = #tpu.dot_dimension_numbers<[1], [0], [0], [1], [0, 0, 1, 1], [], []>} : vector<48x256xf32>, vector<256x64xf32>, vector<48x64xf32> -> vector<48x64xf32>
    %213 = vector.broadcast %77 : vector<1x64xf32> to vector<48x64xf32>
    %214 = arith.addf %212, %213 : vector<48x64xf32>
    %215 = arith.addf %144, %214 : vector<48x64xf32>
    %c0_97 = arith.constant 0 : index
    %c8 = arith.constant 8 : index
    %c0_98 = arith.constant 0 : index
    %216 = vector.load %arg6[%c0_97, %c8, %c0_98] : memref<1x24x256xf32, #tpu.memory_space<vmem>>, vector<1x1x64xf32>
    %217 = vector.shape_cast %216 : vector<1x1x64xf32> to vector<1x64xf32>
    %c0_99 = arith.constant 0 : index
    %c9 = arith.constant 9 : index
    %c0_100 = arith.constant 0 : index
    %218 = vector.load %arg6[%c0_99, %c9, %c0_100] : memref<1x24x256xf32, #tpu.memory_space<vmem>>, vector<1x1x64xf32>
    %219 = vector.shape_cast %218 : vector<1x1x64xf32> to vector<1x64xf32>
    %c0_101 = arith.constant 0 : index
    %c10 = arith.constant 10 : index
    %c0_102 = arith.constant 0 : index
    %220 = vector.load %arg6[%c0_101, %c10, %c0_102] : memref<1x24x256xf32, #tpu.memory_space<vmem>>, vector<1x1x192xf32>
    %221 = vector.shape_cast %220 : vector<1x1x192xf32> to vector<1x192xf32>
    %c0_103 = arith.constant 0 : index
    %c11 = arith.constant 11 : index
    %c0_104 = arith.constant 0 : index
    %222 = vector.load %arg6[%c0_103, %c11, %c0_104] : memref<1x24x256xf32, #tpu.memory_space<vmem>>, vector<1x1x64xf32>
    %223 = vector.shape_cast %222 : vector<1x1x64xf32> to vector<1x64xf32>
    %c0_105 = arith.constant 0 : index
    %c12 = arith.constant 12 : index
    %c0_106 = arith.constant 0 : index
    %224 = vector.load %arg6[%c0_105, %c12, %c0_106] : memref<1x24x256xf32, #tpu.memory_space<vmem>>, vector<1x1x64xf32>
    %225 = vector.shape_cast %224 : vector<1x1x64xf32> to vector<1x64xf32>
    %c0_107 = arith.constant 0 : index
    %c13 = arith.constant 13 : index
    %c0_108 = arith.constant 0 : index
    %226 = vector.load %arg6[%c0_107, %c13, %c0_108] : memref<1x24x256xf32, #tpu.memory_space<vmem>>, vector<1x1x64xf32>
    %227 = vector.shape_cast %226 : vector<1x1x64xf32> to vector<1x64xf32>
    %c0_109 = arith.constant 0 : index
    %c14 = arith.constant 14 : index
    %c0_110 = arith.constant 0 : index
    %228 = vector.load %arg6[%c0_109, %c14, %c0_110] : memref<1x24x256xf32, #tpu.memory_space<vmem>>, vector<1x1x256xf32>
    %229 = vector.shape_cast %228 : vector<1x1x256xf32> to vector<1x256xf32>
    %c0_111 = arith.constant 0 : index
    %c15 = arith.constant 15 : index
    %c0_112 = arith.constant 0 : index
    %230 = vector.load %arg6[%c0_111, %c15, %c0_112] : memref<1x24x256xf32, #tpu.memory_space<vmem>>, vector<1x1x64xf32>
    %231 = vector.shape_cast %230 : vector<1x1x64xf32> to vector<1x64xf32>
    %cst_113 = arith.constant dense<0.000000e+00> : vector<48xf32>
    %232 = vector.multi_reduction <add>, %215, %cst_113 [1] : vector<48x64xf32> to vector<48xf32>
    %233 = vector.shape_cast %232 : vector<48xf32> to vector<48x1xf32>
    %cst_114 = arith.constant 6.400000e+01 : f32
    %234 = vector.broadcast %cst_114 : f32 to vector<48x1xf32>
    %235 = arith.divf %233, %234 : vector<48x1xf32>
    %236 = vector.broadcast %235 : vector<48x1xf32> to vector<48x64xf32>
    %237 = arith.subf %215, %236 : vector<48x64xf32>
    %238 = arith.mulf %237, %237 : vector<48x64xf32>
    %cst_115 = arith.constant dense<0.000000e+00> : vector<48xf32>
    %239 = vector.multi_reduction <add>, %238, %cst_115 [1] : vector<48x64xf32> to vector<48xf32>
    %240 = vector.shape_cast %239 : vector<48xf32> to vector<48x1xf32>
    %cst_116 = arith.constant 6.400000e+01 : f32
    %241 = vector.broadcast %cst_116 : f32 to vector<48x1xf32>
    %242 = arith.divf %240, %241 : vector<48x1xf32>
    %cst_117 = arith.constant 9.99999974E-6 : f32
    %243 = vector.broadcast %cst_117 : f32 to vector<48x1xf32>
    %244 = arith.addf %242, %243 : vector<48x1xf32>
    %245 = math.rsqrt %244 : vector<48x1xf32>
    %246 = vector.broadcast %245 : vector<48x1xf32> to vector<48x64xf32>
    %247 = arith.mulf %237, %246 : vector<48x64xf32>
    %248 = vector.broadcast %217 : vector<1x64xf32> to vector<48x64xf32>
    %249 = arith.mulf %247, %248 : vector<48x64xf32>
    %250 = vector.broadcast %219 : vector<1x64xf32> to vector<48x64xf32>
    %251 = arith.addf %249, %250 : vector<48x64xf32>
    %c0_118 = arith.constant 0 : index
    %c1_119 = arith.constant 1 : index
    %c0_120 = arith.constant 0 : index
    %c0_121 = arith.constant 0 : index
    %252 = vector.load %arg7[%c0_118, %c1_119, %c0_120, %c0_121] : memref<1x2x64x192xf32, #tpu.memory_space<vmem>>, vector<1x1x64x192xf32>
    %253 = vector.shape_cast %252 : vector<1x1x64x192xf32> to vector<64x192xf32>
    %cst_122 = arith.constant dense<0.000000e+00> : vector<48x192xf32>
    %254 = tpu.matmul %251, %253, %cst_122 {dimension_numbers = #tpu.dot_dimension_numbers<[1], [0], [0], [1], [0, 0, 1, 1], [], []>} : vector<48x64xf32>, vector<64x192xf32>, vector<48x192xf32> -> vector<48x192xf32>
    %255 = vector.broadcast %221 : vector<1x192xf32> to vector<48x192xf32>
    %256 = arith.addf %254, %255 : vector<48x192xf32>
    %257 = vector.extract_strided_slice %256 {offsets = [0, 128], sizes = [48, 64], strides = [1, 1]} : vector<48x192xf32> to vector<48x64xf32>
    %258 = vector.extract_strided_slice %256 {offsets = [0, 0], sizes = [48, 32], strides = [1, 1]} : vector<48x192xf32> to vector<48x32xf32>
    %259 = vector.extract_strided_slice %256 {offsets = [0, 64], sizes = [48, 32], strides = [1, 1]} : vector<48x192xf32> to vector<48x32xf32>
    %cst_123 = arith.constant dense<0.000000e+00> : vector<48x48xf32>
    %260 = tpu.matmul %258, %259, %cst_123 {dimension_numbers = #tpu.dot_dimension_numbers<[1], [1], [0], [0], [0, 0, 1, 0], [], []>} : vector<48x32xf32>, vector<48x32xf32>, vector<48x48xf32> -> vector<48x48xf32>
    %261 = arith.addf %260, %61 : vector<48x48xf32>
    %cst_124 = arith.constant dense<0xFF800000> : vector<48xf32>
    %262 = vector.multi_reduction <maximumf>, %261, %cst_124 [1] : vector<48x48xf32> to vector<48xf32>
    %263 = vector.shape_cast %262 : vector<48xf32> to vector<48x1xf32>
    %264 = vector.broadcast %263 : vector<48x1xf32> to vector<48x48xf32>
    %265 = arith.subf %261, %264 : vector<48x48xf32>
    %266 = math.exp %265 : vector<48x48xf32>
    %cst_125 = arith.constant dense<0.000000e+00> : vector<48xf32>
    %267 = vector.multi_reduction <add>, %266, %cst_125 [1] : vector<48x48xf32> to vector<48xf32>
    %268 = vector.shape_cast %267 : vector<48xf32> to vector<48x1xf32>
    %269 = tpu.reciprocal %268 {approx = true} : vector<48x1xf32> -> vector<48x1xf32>
    %270 = vector.broadcast %269 : vector<48x1xf32> to vector<48x48xf32>
    %271 = arith.mulf %266, %270 : vector<48x48xf32>
    %272 = vector.broadcast %15 : vector<1x64xf32> to vector<48x64xf32>
    %273 = arith.mulf %257, %272 : vector<48x64xf32>
    %cst_126 = arith.constant dense<0.000000e+00> : vector<48x64xf32>
    %274 = tpu.matmul %271, %273, %cst_126 {dimension_numbers = #tpu.dot_dimension_numbers<[1], [0], [0], [1], [0, 0, 1, 1], [], []>} : vector<48x48xf32>, vector<48x64xf32>, vector<48x64xf32> -> vector<48x64xf32>
    %275 = vector.extract_strided_slice %256 {offsets = [0, 32], sizes = [48, 32], strides = [1, 1]} : vector<48x192xf32> to vector<48x32xf32>
    %276 = vector.extract_strided_slice %256 {offsets = [0, 96], sizes = [48, 32], strides = [1, 1]} : vector<48x192xf32> to vector<48x32xf32>
    %cst_127 = arith.constant dense<0.000000e+00> : vector<48x48xf32>
    %277 = tpu.matmul %275, %276, %cst_127 {dimension_numbers = #tpu.dot_dimension_numbers<[1], [1], [0], [0], [0, 0, 1, 0], [], []>} : vector<48x32xf32>, vector<48x32xf32>, vector<48x48xf32> -> vector<48x48xf32>
    %278 = arith.addf %277, %61 : vector<48x48xf32>
    %cst_128 = arith.constant dense<0xFF800000> : vector<48xf32>
    %279 = vector.multi_reduction <maximumf>, %278, %cst_128 [1] : vector<48x48xf32> to vector<48xf32>
    %280 = vector.shape_cast %279 : vector<48xf32> to vector<48x1xf32>
    %281 = vector.broadcast %280 : vector<48x1xf32> to vector<48x48xf32>
    %282 = arith.subf %278, %281 : vector<48x48xf32>
    %283 = math.exp %282 : vector<48x48xf32>
    %cst_129 = arith.constant dense<0.000000e+00> : vector<48xf32>
    %284 = vector.multi_reduction <add>, %283, %cst_129 [1] : vector<48x48xf32> to vector<48xf32>
    %285 = vector.shape_cast %284 : vector<48xf32> to vector<48x1xf32>
    %286 = tpu.reciprocal %285 {approx = true} : vector<48x1xf32> -> vector<48x1xf32>
    %287 = vector.broadcast %286 : vector<48x1xf32> to vector<48x48xf32>
    %288 = arith.mulf %283, %287 : vector<48x48xf32>
    %289 = vector.broadcast %22 : vector<1x64xf32> to vector<48x64xf32>
    %290 = arith.mulf %257, %289 : vector<48x64xf32>
    %cst_130 = arith.constant dense<0.000000e+00> : vector<48x64xf32>
    %291 = tpu.matmul %288, %290, %cst_130 {dimension_numbers = #tpu.dot_dimension_numbers<[1], [0], [0], [1], [0, 0, 1, 1], [], []>} : vector<48x48xf32>, vector<48x64xf32>, vector<48x64xf32> -> vector<48x64xf32>
    %292 = arith.addf %274, %291 : vector<48x64xf32>
    %c0_131 = arith.constant 0 : index
    %c1_132 = arith.constant 1 : index
    %c0_133 = arith.constant 0 : index
    %c0_134 = arith.constant 0 : index
    %293 = vector.load %arg8[%c0_131, %c1_132, %c0_133, %c0_134] : memref<1x2x64x64xf32, #tpu.memory_space<vmem>>, vector<1x1x64x64xf32>
    %294 = vector.shape_cast %293 : vector<1x1x64x64xf32> to vector<64x64xf32>
    %cst_135 = arith.constant dense<0.000000e+00> : vector<48x64xf32>
    %295 = tpu.matmul %292, %294, %cst_135 {dimension_numbers = #tpu.dot_dimension_numbers<[1], [0], [0], [1], [0, 0, 1, 1], [], []>} : vector<48x64xf32>, vector<64x64xf32>, vector<48x64xf32> -> vector<48x64xf32>
    %296 = arith.addf %215, %295 : vector<48x64xf32>
    %297 = vector.broadcast %223 : vector<1x64xf32> to vector<48x64xf32>
    %298 = arith.addf %296, %297 : vector<48x64xf32>
    %cst_136 = arith.constant dense<0.000000e+00> : vector<48xf32>
    %299 = vector.multi_reduction <add>, %298, %cst_136 [1] : vector<48x64xf32> to vector<48xf32>
    %300 = vector.shape_cast %299 : vector<48xf32> to vector<48x1xf32>
    %cst_137 = arith.constant 6.400000e+01 : f32
    %301 = vector.broadcast %cst_137 : f32 to vector<48x1xf32>
    %302 = arith.divf %300, %301 : vector<48x1xf32>
    %303 = vector.broadcast %302 : vector<48x1xf32> to vector<48x64xf32>
    %304 = arith.subf %298, %303 : vector<48x64xf32>
    %305 = arith.mulf %304, %304 : vector<48x64xf32>
    %cst_138 = arith.constant dense<0.000000e+00> : vector<48xf32>
    %306 = vector.multi_reduction <add>, %305, %cst_138 [1] : vector<48x64xf32> to vector<48xf32>
    %307 = vector.shape_cast %306 : vector<48xf32> to vector<48x1xf32>
    %cst_139 = arith.constant 6.400000e+01 : f32
    %308 = vector.broadcast %cst_139 : f32 to vector<48x1xf32>
    %309 = arith.divf %307, %308 : vector<48x1xf32>
    %cst_140 = arith.constant 9.99999974E-6 : f32
    %310 = vector.broadcast %cst_140 : f32 to vector<48x1xf32>
    %311 = arith.addf %309, %310 : vector<48x1xf32>
    %312 = math.rsqrt %311 : vector<48x1xf32>
    %313 = vector.broadcast %312 : vector<48x1xf32> to vector<48x64xf32>
    %314 = arith.mulf %304, %313 : vector<48x64xf32>
    %315 = vector.broadcast %225 : vector<1x64xf32> to vector<48x64xf32>
    %316 = arith.mulf %314, %315 : vector<48x64xf32>
    %317 = vector.broadcast %227 : vector<1x64xf32> to vector<48x64xf32>
    %318 = arith.addf %316, %317 : vector<48x64xf32>
    %c0_141 = arith.constant 0 : index
    %c1_142 = arith.constant 1 : index
    %c0_143 = arith.constant 0 : index
    %c0_144 = arith.constant 0 : index
    %319 = vector.load %arg9[%c0_141, %c1_142, %c0_143, %c0_144] : memref<1x2x64x256xf32, #tpu.memory_space<vmem>>, vector<1x1x64x256xf32>
    %320 = vector.shape_cast %319 : vector<1x1x64x256xf32> to vector<64x256xf32>
    %cst_145 = arith.constant dense<0.000000e+00> : vector<48x256xf32>
    %321 = tpu.matmul %318, %320, %cst_145 {dimension_numbers = #tpu.dot_dimension_numbers<[1], [0], [0], [1], [0, 0, 1, 1], [], []>} : vector<48x64xf32>, vector<64x256xf32>, vector<48x256xf32> -> vector<48x256xf32>
    %322 = vector.broadcast %229 : vector<1x256xf32> to vector<48x256xf32>
    %323 = arith.addf %321, %322 : vector<48x256xf32>
    %cst_146 = arith.constant 5.000000e-01 : f32
    %324 = vector.broadcast %cst_146 : f32 to vector<48x256xf32>
    %325 = arith.mulf %324, %323 : vector<48x256xf32>
    %cst_147 = arith.constant 0.707106769 : f32
    %326 = vector.broadcast %cst_147 : f32 to vector<48x256xf32>
    %327 = arith.mulf %323, %326 : vector<48x256xf32>
    %cst_148 = arith.constant 0.000000e+00 : f32
    %328 = vector.broadcast %cst_148 : f32 to vector<48x256xf32>
    %329 = arith.cmpf oge, %327, %328 : vector<48x256xf32>
    %cst_149 = arith.constant 1.000000e+00 : f32
    %cst_150 = arith.constant -1.000000e+00 : f32
    %330 = vector.broadcast %cst_149 : f32 to vector<48x256xf32>
    %331 = vector.broadcast %cst_150 : f32 to vector<48x256xf32>
    %332 = arith.select %329, %330, %331 : vector<48x256xi1>, vector<48x256xf32>
    %333 = math.absf %327 : vector<48x256xf32>
    %cst_151 = arith.constant 0.327591091 : f32
    %334 = vector.broadcast %cst_151 : f32 to vector<48x256xf32>
    %335 = arith.mulf %334, %333 : vector<48x256xf32>
    %cst_152 = arith.constant 1.000000e+00 : f32
    %336 = vector.broadcast %cst_152 : f32 to vector<48x256xf32>
    %337 = arith.addf %336, %335 : vector<48x256xf32>
    %338 = tpu.reciprocal %337 {approx = true} : vector<48x256xf32> -> vector<48x256xf32>
    %cst_153 = arith.constant 1.06140542 : f32
    %339 = vector.broadcast %cst_153 : f32 to vector<48x256xf32>
    %340 = arith.mulf %339, %338 : vector<48x256xf32>
    %cst_154 = arith.constant -1.45315206 : f32
    %341 = vector.broadcast %cst_154 : f32 to vector<48x256xf32>
    %342 = arith.addf %340, %341 : vector<48x256xf32>
    %343 = arith.mulf %342, %338 : vector<48x256xf32>
    %cst_155 = arith.constant 1.42141378 : f32
    %344 = vector.broadcast %cst_155 : f32 to vector<48x256xf32>
    %345 = arith.addf %343, %344 : vector<48x256xf32>
    %346 = arith.mulf %345, %338 : vector<48x256xf32>
    %cst_156 = arith.constant -0.284496725 : f32
    %347 = vector.broadcast %cst_156 : f32 to vector<48x256xf32>
    %348 = arith.addf %346, %347 : vector<48x256xf32>
    %349 = arith.mulf %348, %338 : vector<48x256xf32>
    %cst_157 = arith.constant 0.254829586 : f32
    %350 = vector.broadcast %cst_157 : f32 to vector<48x256xf32>
    %351 = arith.addf %349, %350 : vector<48x256xf32>
    %352 = arith.mulf %351, %338 : vector<48x256xf32>
    %cst_158 = arith.constant 0.000000e+00 : f32
    %353 = vector.broadcast %cst_158 : f32 to vector<48x256xf32>
    %354 = arith.subf %353, %333 : vector<48x256xf32>
    %355 = arith.mulf %354, %333 : vector<48x256xf32>
    %356 = math.exp %355 : vector<48x256xf32>
    %357 = arith.mulf %352, %356 : vector<48x256xf32>
    %cst_159 = arith.constant 1.000000e+00 : f32
    %358 = vector.broadcast %cst_159 : f32 to vector<48x256xf32>
    %359 = arith.subf %358, %357 : vector<48x256xf32>
    %360 = arith.mulf %332, %359 : vector<48x256xf32>
    %cst_160 = arith.constant 1.000000e+00 : f32
    %361 = vector.broadcast %cst_160 : f32 to vector<48x256xf32>
    %362 = arith.addf %361, %360 : vector<48x256xf32>
    %363 = arith.mulf %325, %362 : vector<48x256xf32>
    %c0_161 = arith.constant 0 : index
    %c1_162 = arith.constant 1 : index
    %c0_163 = arith.constant 0 : index
    %c0_164 = arith.constant 0 : index
    %364 = vector.load %arg10[%c0_161, %c1_162, %c0_163, %c0_164] : memref<1x2x256x64xf32, #tpu.memory_space<vmem>>, vector<1x1x256x64xf32>
    %365 = vector.shape_cast %364 : vector<1x1x256x64xf32> to vector<256x64xf32>
    %cst_165 = arith.constant dense<0.000000e+00> : vector<48x64xf32>
    %366 = tpu.matmul %363, %365, %cst_165 {dimension_numbers = #tpu.dot_dimension_numbers<[1], [0], [0], [1], [0, 0, 1, 1], [], []>} : vector<48x256xf32>, vector<256x64xf32>, vector<48x64xf32> -> vector<48x64xf32>
    %367 = vector.broadcast %231 : vector<1x64xf32> to vector<48x64xf32>
    %368 = arith.addf %366, %367 : vector<48x64xf32>
    %369 = arith.addf %298, %368 : vector<48x64xf32>
    %c0_166 = arith.constant 0 : index
    %c0_167 = arith.constant 0 : index
    %c0_168 = arith.constant 0 : index
    %370 = vector.load %arg3[%c0_166, %c0_167, %c0_168] : memref<1x2x48xf32, #tpu.memory_space<vmem>>, vector<1x2x48xf32>
    %371 = vector.shape_cast %370 : vector<1x2x48xf32> to vector<2x48xf32>
    %cst_169 = arith.constant dense<0.000000e+00> : vector<2x64xf32>
    %372 = tpu.matmul %371, %369, %cst_169 {dimension_numbers = #tpu.dot_dimension_numbers<[1], [0], [0], [1], [0, 0, 1, 1], [], []>} : vector<2x48xf32>, vector<48x64xf32>, vector<2x64xf32> -> vector<2x64xf32>
    %cst_170 = arith.constant dense<0.000000e+00> : vector<2xf32>
    %373 = vector.multi_reduction <add>, %372, %cst_170 [1] : vector<2x64xf32> to vector<2xf32>
    %374 = vector.shape_cast %373 : vector<2xf32> to vector<2x1xf32>
    %cst_171 = arith.constant 6.400000e+01 : f32
    %375 = vector.broadcast %cst_171 : f32 to vector<2x1xf32>
    %376 = arith.divf %374, %375 : vector<2x1xf32>
    %377 = vector.broadcast %376 : vector<2x1xf32> to vector<2x64xf32>
    %378 = arith.subf %372, %377 : vector<2x64xf32>
    %379 = arith.mulf %378, %378 : vector<2x64xf32>
    %cst_172 = arith.constant dense<0.000000e+00> : vector<2xf32>
    %380 = vector.multi_reduction <add>, %379, %cst_172 [1] : vector<2x64xf32> to vector<2xf32>
    %381 = vector.shape_cast %380 : vector<2xf32> to vector<2x1xf32>
    %cst_173 = arith.constant 6.400000e+01 : f32
    %382 = vector.broadcast %cst_173 : f32 to vector<2x1xf32>
    %383 = arith.divf %381, %382 : vector<2x1xf32>
    %cst_174 = arith.constant 9.99999974E-6 : f32
    %384 = vector.broadcast %cst_174 : f32 to vector<2x1xf32>
    %385 = arith.addf %383, %384 : vector<2x1xf32>
    %386 = math.rsqrt %385 : vector<2x1xf32>
    %387 = vector.broadcast %386 : vector<2x1xf32> to vector<2x64xf32>
    %388 = arith.mulf %378, %387 : vector<2x64xf32>
    %389 = vector.broadcast %5 : vector<1x64xf32> to vector<2x64xf32>
    %390 = arith.mulf %388, %389 : vector<2x64xf32>
    %391 = vector.broadcast %7 : vector<1x64xf32> to vector<2x64xf32>
    %392 = arith.addf %390, %391 : vector<2x64xf32>
    %c0_175 = arith.constant 0 : index
    %c0_176 = arith.constant 0 : index
    %c0_177 = arith.constant 0 : index
    %393 = vector.load %arg11[%c0_175, %c0_176, %c0_177] : memref<1x64x128xf32, #tpu.memory_space<vmem>>, vector<1x64x128xf32>
    %394 = vector.shape_cast %393 : vector<1x64x128xf32> to vector<64x128xf32>
    %cst_178 = arith.constant dense<0.000000e+00> : vector<2x128xf32>
    %395 = tpu.matmul %392, %394, %cst_178 {dimension_numbers = #tpu.dot_dimension_numbers<[1], [0], [0], [1], [0, 0, 1, 1], [], []>} : vector<2x64xf32>, vector<64x128xf32>, vector<2x128xf32> -> vector<2x128xf32>
    %396 = arith.mulf %395, %395 : vector<2x128xf32>
    %cst_179 = arith.constant dense<0.000000e+00> : vector<2xf32>
    %397 = vector.multi_reduction <add>, %396, %cst_179 [1] : vector<2x128xf32> to vector<2xf32>
    %398 = vector.shape_cast %397 : vector<2xf32> to vector<2x1xf32>
    %cst_180 = arith.constant 1.000000e-24 : f32
    %399 = vector.broadcast %cst_180 : f32 to vector<2x1xf32>
    %400 = arith.maximumf %398, %399 : vector<2x1xf32>
    %401 = math.rsqrt %400 : vector<2x1xf32>
    %402 = vector.broadcast %401 : vector<2x1xf32> to vector<2x128xf32>
    %403 = arith.mulf %395, %402 : vector<2x128xf32>
    %c0_181 = arith.constant 0 : index
    %c0_182 = arith.constant 0 : index
    %c0_183 = arith.constant 0 : index
    %404 = vector.load %arg12[%c0_181, %c0_182, %c0_183] : memref<1x2x128xf32, #tpu.memory_space<vmem>>, vector<1x2x128xf32>
    %405 = vector.shape_cast %404 : vector<1x2x128xf32> to vector<2x128xf32>
    %406 = vector.shape_cast %403 : vector<2x128xf32> to vector<1x2x128xf32>
    tpu.vector_store %arg12[%c0_181, %c0_182, %c0_183], %406 {strides = array<i32>} : memref<1x2x128xf32, #tpu.memory_space<vmem>>, vector<1x2x128xf32>,
    return
  }
  func.func @transform_0(%arg0: i32) -> (i32, i32, i32) {
    %c0_i32 = arith.constant 0 : i32
    %c0_i32_0 = arith.constant 0 : i32
    %c0_i32_1 = arith.constant 0 : i32
    return %arg0, %c0_i32, %c0_i32_0 : i32, i32, i32
  }
  func.func @transform_1(%arg0: i32) -> (i32, i32, i32) {
    %c0_i32 = arith.constant 0 : i32
    %c0_i32_0 = arith.constant 0 : i32
    %c0_i32_1 = arith.constant 0 : i32
    return %arg0, %c0_i32, %c0_i32_0 : i32, i32, i32
  }
  func.func @transform_2(%arg0: i32) -> (i32, i32, i32) {
    %c0_i32 = arith.constant 0 : i32
    %c0_i32_0 = arith.constant 0 : i32
    %c0_i32_1 = arith.constant 0 : i32
    return %arg0, %c0_i32, %c0_i32_0 : i32, i32, i32
  }
  func.func @transform_3(%arg0: i32) -> (i32, i32, i32) {
    %c0_i32 = arith.constant 0 : i32
    %c0_i32_0 = arith.constant 0 : i32
    %c0_i32_1 = arith.constant 0 : i32
    return %arg0, %c0_i32, %c0_i32_0 : i32, i32, i32
  }
  func.func @transform_4(%arg0: i32) -> (i32, i32, i32) {
    %c0_i32 = arith.constant 0 : i32
    %c0_i32_0 = arith.constant 0 : i32
    %c0_i32_1 = arith.constant 0 : i32
    return %arg0, %c0_i32, %c0_i32_0 : i32, i32, i32
  }
  func.func @transform_5(%arg0: i32) -> (i32, i32, i32) {
    %c0_i32 = arith.constant 0 : i32
    %c0_i32_0 = arith.constant 0 : i32
    %c0_i32_1 = arith.constant 0 : i32
    return %arg0, %c0_i32, %c0_i32_0 : i32, i32, i32
  }
  func.func @transform_6(%arg0: i32) -> (i32, i32, i32, i32) {
    %c0_i32 = arith.constant 0 : i32
    %c0_i32_0 = arith.constant 0 : i32
    %c0_i32_1 = arith.constant 0 : i32
    %c0_i32_2 = arith.constant 0 : i32
    return %arg0, %c0_i32, %c0_i32_0, %c0_i32_1 : i32, i32, i32, i32
  }
  func.func @transform_7(%arg0: i32) -> (i32, i32, i32, i32) {
    %c0_i32 = arith.constant 0 : i32
    %c0_i32_0 = arith.constant 0 : i32
    %c0_i32_1 = arith.constant 0 : i32
    %c0_i32_2 = arith.constant 0 : i32
    return %arg0, %c0_i32, %c0_i32_0, %c0_i32_1 : i32, i32, i32, i32
  }
  func.func @transform_8(%arg0: i32) -> (i32, i32, i32, i32) {
    %c0_i32 = arith.constant 0 : i32
    %c0_i32_0 = arith.constant 0 : i32
    %c0_i32_1 = arith.constant 0 : i32
    %c0_i32_2 = arith.constant 0 : i32
    return %arg0, %c0_i32, %c0_i32_0, %c0_i32_1 : i32, i32, i32, i32
  }
  func.func @transform_9(%arg0: i32) -> (i32, i32, i32, i32) {
    %c0_i32 = arith.constant 0 : i32
    %c0_i32_0 = arith.constant 0 : i32
    %c0_i32_1 = arith.constant 0 : i32
    %c0_i32_2 = arith.constant 0 : i32
    return %arg0, %c0_i32, %c0_i32_0, %c0_i32_1 : i32, i32, i32, i32
  }
  func.func @transform_10(%arg0: i32) -> (i32, i32, i32) {
    %c0_i32 = arith.constant 0 : i32
    %c0_i32_0 = arith.constant 0 : i32
    %c0_i32_1 = arith.constant 0 : i32
    return %arg0, %c0_i32, %c0_i32_0 : i32, i32, i32
  }
  func.func @transform_11(%arg0: i32) -> (i32, i32, i32) {
    %c0_i32 = arith.constant 0 : i32
    %c0_i32_0 = arith.constant 0 : i32
    %c0_i32_1 = arith.constant 0 : i32
    return %arg0, %c0_i32, %c0_i32_0 : i32, i32, i32
  }
}

</mosaic_0001>

<llo_original>
// kernel: custom_text_clip_forward.1
$region0: #{custom_text_clip_forward.1}
  #allocation0 [shape = 'u32[]', space=smem, size = 0x4, offset = 0x4, fixed_abs, tag = 'smem constant byte address 0x4 - core index']
  #allocation1 [shape = 'u32[72,128]{1,0:T(1,128)}', space=vmem, size = 0x9000, scoped, tag = 'internal scratch']
  %s0 = inlined_call_operand.vmem [shape: f32[2,48,64], index: 0, kind: input, shape index: {}]
  %s1 = inlined_call_operand.vmem [shape: f32[2,48,48], index: 1, kind: input, shape index: {}]
  %s2 = inlined_call_operand.vmem [shape: f32[2,2,48], index: 2, kind: input, shape index: {}]
  %s3 = inlined_call_operand.vmem [shape: f32[2,64,64], index: 3, kind: input, shape index: {}]
  %s4 = inlined_call_operand.vmem [shape: f32[2,48,64], index: 4, kind: input, shape index: {}]
  %s5 = inlined_call_operand.vmem [shape: f32[2,24,256], index: 5, kind: input, shape index: {}]
  %s6 = inlined_call_operand.vmem [shape: f32[2,2,64,192], index: 6, kind: input, shape index: {}]
  %s7 = inlined_call_operand.vmem [shape: f32[2,2,64,64], index: 7, kind: input, shape index: {}]
  %s8 = inlined_call_operand.vmem [shape: f32[2,2,64,256], index: 8, kind: input, shape index: {}]
  %s9 = inlined_call_operand.vmem [shape: f32[2,2,256,64], index: 9, kind: input, shape index: {}]
  %s10 = inlined_call_operand.vmem [shape: f32[2,64,128], index: 10, kind: input, shape index: {}]
  %s11 = inlined_call_operand.vmem [shape: f32[2,2,128], index: 11, kind: output, shape index: {}]
  %s12 = sld [smem:[#allocation0]]
  $region77: #{custom_text_clip_forward.1} parent=0
    _
  %s14 = ssub.s32 1, %s12
  %s15 = scalar_select 0, %s14, %s12
  loop: start=0, step=1, limit=4
  $region2: #{custom_text_clip_forward.1} parent=0 // loop_pre_header
    _
  $region3: #{custom_text_clip_forward.1} parent=0 // loop_header
    %s17 = sphi 0, %s21
    %p18 = scmp.ge.s32.totalorder %s17, 4
    %s27 = sphi 0, %s29
    %s30 = sphi 0, %s27
    %s31 = sphi 0, %s30
    %s47 = sphi 0, %s31
    %s53 = sphi 0, %s55
    %s56 = sphi 0, %s53
    %s57 = sphi 0, %s56
    %s73 = sphi 0, %s57
    %s79 = sphi 0, %s81
    %s82 = sphi 0, %s79
    %s83 = sphi 0, %s82
    %s99 = sphi 0, %s83
    %s105 = sphi 0, %s107
    %s108 = sphi 0, %s105
    %s109 = sphi 0, %s108
    %s125 = sphi 0, %s109
    %s131 = sphi 0, %s133
    %s134 = sphi 0, %s131
    %s135 = sphi 0, %s134
    %s151 = sphi 0, %s135
    %s157 = sphi 0, %s159
    %s160 = sphi 0, %s157
    %s161 = sphi 0, %s160
    %s177 = sphi 0, %s161
    %s183 = sphi 0, %s185
    %s186 = sphi 0, %s183
    %s187 = sphi 0, %s186
    %s203 = sphi 0, %s187
    %s209 = sphi 0, %s211
    %s212 = sphi 0, %s209
    %s213 = sphi 0, %s212
    %s229 = sphi 0, %s213
    %s235 = sphi 0, %s237
    %s238 = sphi 0, %s235
    %s239 = sphi 0, %s238
    %s255 = sphi 0, %s239
    %s261 = sphi 0, %s263
    %s264 = sphi 0, %s261
    %s265 = sphi 0, %s264
    %s281 = sphi 0, %s265
    %s287 = sphi 0, %s289
    %s290 = sphi 0, %s287
    %s291 = sphi 0, %s290
    %s307 = sphi 0, %s291
    %s313 = sphi 0, %s315
    %s316 = sphi 0, %s313
    %s317 = sphi 0, %s316
    %s333 = sphi 0, %s317
  $region4: #{custom_text_clip_forward.1} parent=0 // loop_header_branch
    %20 = sbr.rel (%p18) target = $region8
  $region5: #{custom_text_clip_forward.1} parent=0 // loop_body
    %s22 = ssub.s32 %s17, 1
    %s23 = ssub.s32 %s17, 2
    %s24 = sadd.s32 %s17, 1
    %s25 = ssub.s32 %s17, %s24
    %p26 = scmp.eq.s32.totalorder %s25, 0
    %s28 = sadd.s32 %s27, 1
    %s29 = scalar_select %p26, %s27, %s28
    %p32 = pneg %p26
    %p33 = scmp.eq.s32.totalorder %s17, 1
    %p34 = por %p32, %p33
    %p35 = scmp.ne.s32.totalorder %s27, %s30
    %p36 = scmp.eq.s32.totalorder %s17, 0
    %p37 = por %p35, %p36
    %p38 = scmp.ne.s32.totalorder %s27, %s30
    %p39 = scmp.eq.s32.totalorder %s22, 1
    %p40 = por %p38, %p39
    %p41 = scmp.ne.s32.totalorder %s30, %s31
    %p42 = scmp.eq.s32.totalorder %s22, 0
    %p43 = por %p41, %p42
    %p44 = scmp.ne.s32.totalorder %s30, %s31
    %p45 = scmp.eq.s32.totalorder %s23, 1
    %p46 = por %p44, %p45
    %p48 = scmp.ne.s32.totalorder %s31, %s47
    %p49 = scmp.eq.s32.totalorder %s23, 0
    %p50 = por %p48, %p49
    %s51 = ssub.s32 %s17, %s24
    %p52 = scmp.eq.s32.totalorder %s51, 0
    %s54 = sadd.s32 %s53, 1
    %s55 = scalar_select %p52, %s53, %s54
    %p58 = pneg %p52
    %p59 = scmp.eq.s32.totalorder %s17, 1
    %p60 = por %p58, %p59
    %p61 = scmp.ne.s32.totalorder %s53, %s56
    %p62 = scmp.eq.s32.totalorder %s17, 0
    %p63 = por %p61, %p62
    %p64 = scmp.ne.s32.totalorder %s53, %s56
    %p65 = scmp.eq.s32.totalorder %s22, 1
    %p66 = por %p64, %p65
    %p67 = scmp.ne.s32.totalorder %s56, %s57
    %p68 = scmp.eq.s32.totalorder %s22, 0
    %p69 = por %p67, %p68
    %p70 = scmp.ne.s32.totalorder %s56, %s57
    %p71 = scmp.eq.s32.totalorder %s23, 1
    %p72 = por %p70, %p71
    %p74 = scmp.ne.s32.totalorder %s57, %s73
    %p75 = scmp.eq.s32.totalorder %s23, 0
    %p76 = por %p74, %p75
    %s77 = ssub.s32 %s17, %s24
    %p78 = scmp.eq.s32.totalorder %s77, 0
    %s80 = sadd.s32 %s79, 1
    %s81 = scalar_select %p78, %s79, %s80
    %p84 = pneg %p78
    %p85 = scmp.eq.s32.totalorder %s17, 1
    %p86 = por %p84, %p85
    %p87 = scmp.ne.s32.totalorder %s79, %s82
    %p88 = scmp.eq.s32.totalorder %s17, 0
    %p89 = por %p87, %p88
    %p90 = scmp.ne.s32.totalorder %s79, %s82
    %p91 = scmp.eq.s32.totalorder %s22, 1
    %p92 = por %p90, %p91
    %p93 = scmp.ne.s32.totalorder %s82, %s83
    %p94 = scmp.eq.s32.totalorder %s22, 0
    %p95 = por %p93, %p94
    %p96 = scmp.ne.s32.totalorder %s82, %s83
    %p97 = scmp.eq.s32.totalorder %s23, 1
    %p98 = por %p96, %p97
    %p100 = scmp.ne.s32.totalorder %s83, %s99
    %p101 = scmp.eq.s32.totalorder %s23, 0
    %p102 = por %p100, %p101
    %s103 = ssub.s32 %s17, %s24
    %p104 = scmp.eq.s32.totalorder %s103, 0
    %s106 = sadd.s32 %s105, 1
    %s107 = scalar_select %p104, %s105, %s106
    %p110 = pneg %p104
    %p111 = scmp.eq.s32.totalorder %s17, 1
    %p112 = por %p110, %p111
    %p113 = scmp.ne.s32.totalorder %s105, %s108
    %p114 = scmp.eq.s32.totalorder %s17, 0
    %p115 = por %p113, %p114
    %p116 = scmp.ne.s32.totalorder %s105, %s108
    %p117 = scmp.eq.s32.totalorder %s22, 1
    %p118 = por %p116, %p117
    %p119 = scmp.ne.s32.totalorder %s108, %s109
    %p120 = scmp.eq.s32.totalorder %s22, 0
    %p121 = por %p119, %p120
    %p122 = scmp.ne.s32.totalorder %s108, %s109
    %p123 = scmp.eq.s32.totalorder %s23, 1
    %p124 = por %p122, %p123
    %p126 = scmp.ne.s32.totalorder %s109, %s125
    %p127 = scmp.eq.s32.totalorder %s23, 0
    %p128 = por %p126, %p127
    %s129 = ssub.s32 %s17, %s24
    %p130 = scmp.eq.s32.totalorder %s129, 0
    %s132 = sadd.s32 %s131, 1
    %s133 = scalar_select %p130, %s131, %s132
    %p136 = pneg %p130
    %p137 = scmp.eq.s32.totalorder %s17, 1
    %p138 = por %p136, %p137
    %p139 = scmp.ne.s32.totalorder %s131, %s134
    %p140 = scmp.eq.s32.totalorder %s17, 0
    %p141 = por %p139, %p140
    %p142 = scmp.ne.s32.totalorder %s131, %s134
    %p143 = scmp.eq.s32.totalorder %s22, 1
    %p144 = por %p142, %p143
    %p145 = scmp.ne.s32.totalorder %s134, %s135
    %p146 = scmp.eq.s32.totalorder %s22, 0
    %p147 = por %p145, %p146
    %p148 = scmp.ne.s32.totalorder %s134, %s135
    %p149 = scmp.eq.s32.totalorder %s23, 1
    %p150 = por %p148, %p149
    %p152 = scmp.ne.s32.totalorder %s135, %s151
    %p153 = scmp.eq.s32.totalorder %s23, 0
    %p154 = por %p152, %p153
    %s155 = ssub.s32 %s17, %s24
    %p156 = scmp.eq.s32.totalorder %s155, 0
    %s158 = sadd.s32 %s157, 1
    %s159 = scalar_select %p156, %s157, %s158
    %p162 = pneg %p156
    %p163 = scmp.eq.s32.totalorder %s17, 1
    %p164 = por %p162, %p163
    %p165 = scmp.ne.s32.totalorder %s157, %s160
    %p166 = scmp.eq.s32.totalorder %s17, 0
    %p167 = por %p165, %p166
    %p168 = scmp.ne.s32.totalorder %s157, %s160
    %p169 = scmp.eq.s32.totalorder %s22, 1
    %p170 = por %p168, %p169
    %p171 = scmp.ne.s32.totalorder %s160, %s161
    %p172 = scmp.eq.s32.totalorder %s22, 0
    %p173 = por %p171, %p172
    %p174 = scmp.ne.s32.totalorder %s160, %s161
    %p175 = scmp.eq.s32.totalorder %s23, 1
    %p176 = por %p174, %p175
    %p178 = scmp.ne.s32.totalorder %s161, %s177
    %p179 = scmp.eq.s32.totalorder %s23, 0
    %p180 = por %p178, %p179
    %s181 = ssub.s32 %s17, %s24
    %p182 = scmp.eq.s32.totalorder %s181, 0
    %s184 = sadd.s32 %s183, 1
    %s185 = scalar_select %p182, %s183, %s184
    %p188 = pneg %p182
    %p189 = scmp.eq.s32.totalorder %s17, 1
    %p190 = por %p188, %p189
    %p191 = scmp.ne.s32.totalorder %s183, %s186
    %p192 = scmp.eq.s32.totalorder %s17, 0
    %p193 = por %p191, %p192
    %p194 = scmp.ne.s32.totalorder %s183, %s186
    %p195 = scmp.eq.s32.totalorder %s22, 1
    %p196 = por %p194, %p195
    %p197 = scmp.ne.s32.totalorder %s186, %s187
    %p198 = scmp.eq.s32.totalorder %s22, 0
    %p199 = por %p197, %p198
    %p200 = scmp.ne.s32.totalorder %s186, %s187
    %p201 = scmp.eq.s32.totalorder %s23, 1
    %p202 = por %p200, %p201
    %p204 = scmp.ne.s32.totalorder %s187, %s203
    %p205 = scmp.eq.s32.totalorder %s23, 0
    %p206 = por %p204, %p205
    %s207 = ssub.s32 %s17, %s24
    %p208 = scmp.eq.s32.totalorder %s207, 0
    %s210 = sadd.s32 %s209, 1
    %s211 = scalar_select %p208, %s209, %s210
    %p214 = pneg %p208
    %p215 = scmp.eq.s32.totalorder %s17, 1
    %p216 = por %p214, %p215
    %p217 = scmp.ne.s32.totalorder %s209, %s212
    %p218 = scmp.eq.s32.totalorder %s17, 0
    %p219 = por %p217, %p218
    %p220 = scmp.ne.s32.totalorder %s209, %s212
    %p221 = scmp.eq.s32.totalorder %s22, 1
    %p222 = por %p220, %p221
    %p223 = scmp.ne.s32.totalorder %s212, %s213
    %p224 = scmp.eq.s32.totalorder %s22, 0
    %p225 = por %p223, %p224
    %p226 = scmp.ne.s32.totalorder %s212, %s213
    %p227 = scmp.eq.s32.totalorder %s23, 1
    %p228 = por %p226, %p227
    %p230 = scmp.ne.s32.totalorder %s213, %s229
    %p231 = scmp.eq.s32.totalorder %s23, 0
    %p232 = por %p230, %p231
    %s233 = ssub.s32 %s17, %s24
    %p234 = scmp.eq.s32.totalorder %s233, 0
    %s236 = sadd.s32 %s235, 1
    %s237 = scalar_select %p234, %s235, %s236
    %p240 = pneg %p234
    %p241 = scmp.eq.s32.totalorder %s17, 1
    %p242 = por %p240, %p241
    %p243 = scmp.ne.s32.totalorder %s235, %s238
    %p244 = scmp.eq.s32.totalorder %s17, 0
    %p245 = por %p243, %p244
    %p246 = scmp.ne.s32.totalorder %s235, %s238
    %p247 = scmp.eq.s32.totalorder %s22, 1
    %p248 = por %p246, %p247
    %p249 = scmp.ne.s32.totalorder %s238, %s239
    %p250 = scmp.eq.s32.totalorder %s22, 0
    %p251 = por %p249, %p250
    %p252 = scmp.ne.s32.totalorder %s238, %s239
    %p253 = scmp.eq.s32.totalorder %s23, 1
    %p254 = por %p252, %p253
    %p256 = scmp.ne.s32.totalorder %s239, %s255
    %p257 = scmp.eq.s32.totalorder %s23, 0
    %p258 = por %p256, %p257
    %s259 = ssub.s32 %s17, %s24
    %p260 = scmp.eq.s32.totalorder %s259, 0
    %s262 = sadd.s32 %s261, 1
    %s263 = scalar_select %p260, %s261, %s262
    %p266 = pneg %p260
    %p267 = scmp.eq.s32.totalorder %s17, 1
    %p268 = por %p266, %p267
    %p269 = scmp.ne.s32.totalorder %s261, %s264
    %p270 = scmp.eq.s32.totalorder %s17, 0
    %p271 = por %p269, %p270
    %p272 = scmp.ne.s32.totalorder %s261, %s264
    %p273 = scmp.eq.s32.totalorder %s22, 1
    %p274 = por %p272, %p273
    %p275 = scmp.ne.s32.totalorder %s264, %s265
    %p276 = scmp.eq.s32.totalorder %s22, 0
    %p277 = por %p275, %p276
    %p278 = scmp.ne.s32.totalorder %s264, %s265
    %p279 = scmp.eq.s32.totalorder %s23, 1
    %p280 = por %p278, %p279
    %p282 = scmp.ne.s32.totalorder %s265, %s281
    %p283 = scmp.eq.s32.totalorder %s23, 0
    %p284 = por %p282, %p283
    %s285 = ssub.s32 %s17, %s24
    %p286 = scmp.eq.s32.totalorder %s285, 0
    %s288 = sadd.s32 %s287, 1
    %s289 = scalar_select %p286, %s287, %s288
    %p292 = pneg %p286
    %p293 = scmp.eq.s32.totalorder %s17, 1
    %p294 = por %p292, %p293
    %p295 = scmp.ne.s32.totalorder %s287, %s290
    %p296 = scmp.eq.s32.totalorder %s17, 0
    %p297 = por %p295, %p296
    %p298 = scmp.ne.s32.totalorder %s287, %s290
    %p299 = scmp.eq.s32.totalorder %s22, 1
    %p300 = por %p298, %p299
    %p301 = scmp.ne.s32.totalorder %s290, %s291
    %p302 = scmp.eq.s32.totalorder %s22, 0
    %p303 = por %p301, %p302
    %p304 = scmp.ne.s32.totalorder %s290, %s291
    %p305 = scmp.eq.s32.totalorder %s23, 1
    %p306 = por %p304, %p305
    %p308 = scmp.ne.s32.totalorder %s291, %s307
    %p309 = scmp.eq.s32.totalorder %s23, 0
    %p310 = por %p308, %p309
    %s311 = ssub.s32 %s17, %s24
    %p312 = scmp.eq.s32.totalorder %s311, 0
    %s314 = sadd.s32 %s313, 1
    %s315 = scalar_select %p312, %s313, %s314
    %p318 = pneg %p312
    %p319 = scmp.eq.s32.totalorder %s17, 1
    %p320 = por %p318, %p319
    %p321 = scmp.ne.s32.totalorder %s313, %s316
    %p322 = scmp.eq.s32.totalorder %s17, 0
    %p323 = por %p321, %p322
    %p324 = scmp.ne.s32.totalorder %s313, %s316
    %p325 = scmp.eq.s32.totalorder %s22, 1
    %p326 = por %p324, %p325
    %p327 = scmp.ne.s32.totalorder %s316, %s317
    %p328 = scmp.eq.s32.totalorder %s22, 0
    %p329 = por %p327, %p328
    %p330 = scmp.ne.s32.totalorder %s316, %s317
    %p331 = scmp.eq.s32.totalorder %s23, 1
    %p332 = por %p330, %p331
    %p334 = scmp.ne.s32.totalorder %s317, %s333
    %p335 = scmp.eq.s32.totalorder %s23, 0
    %p336 = por %p334, %p335
    %p337 = scmp.le.s32.totalorder 1, %s17
    %p338 = scmp.lt.s32.totalorder %s17, 3
    %p339 = pnand %p337, %p338
    %p340 = pneg %p339
    // Predicated region
    $region9: #{custom_text_clip_forward.1} parent=5 // pred_check
      _
    $region10: #{custom_text_clip_forward.1} parent=5 // pred_check_branch
      %342 = sbr.rel (%p339) target = $region12
    $region11: #{custom_text_clip_forward.1} parent=5 // pred_region
      %s343 = ssub.s32 %s17, 1
    $region12: #{custom_text_clip_forward.1} parent=5 // pred_fallthru
      _
    %p344 = scmp.lt.s32.totalorder %s17, 2
    // Predicated region
    $region13: #{custom_text_clip_forward.1} parent=5 // pred_check
      %p345 = pneg %p344
    $region14: #{custom_text_clip_forward.1} parent=5 // pred_check_branch
      %347 = sbr.rel (%p345) target = $region16
    $region15: #{custom_text_clip_forward.1} parent=5 // pred_region
      // Predicated region
      $region17: #{custom_text_clip_forward.1} parent=15 // pred_check
        %p348 = pneg %p37
      $region18: #{custom_text_clip_forward.1} parent=15 // pred_check_branch
        %350 = sbr.rel (%p348) target = $region20
      $region19: #{custom_text_clip_forward.1} parent=15 // pred_region
        %p351 = scmp.lt.s32.totalorder %s17, 1
        %s352 = scalar_select %p351, %s17, 1
        %s353 = smul.addr %s352, 6
        %s354 = smul.addr %s353, 8
        %s355 = scalar_lea.vmem %s0, %s354
      $region20: #{custom_text_clip_forward.1} parent=15 // pred_fallthru
        _
      // Predicated region
      $region21: #{custom_text_clip_forward.1} parent=15 // pred_check
        %p356 = pneg %p63
      $region22: #{custom_text_clip_forward.1} parent=15 // pred_check_branch
        %358 = sbr.rel (%p356) target = $region24
      $region23: #{custom_text_clip_forward.1} parent=15 // pred_region
        %p359 = scmp.lt.s32.totalorder %s17, 1
        %s360 = scalar_select %p359, %s17, 1
        %s361 = smul.addr %s360, 6
        %s362 = smul.addr %s361, 8
        %s363 = scalar_lea.vmem %s1, %s362
      $region24: #{custom_text_clip_forward.1} parent=15 // pred_fallthru
        _
      // Predicated region
      $region25: #{custom_text_clip_forward.1} parent=15 // pred_check
        %p364 = pneg %p89
      $region26: #{custom_text_clip_forward.1} parent=15 // pred_check_branch
        %366 = sbr.rel (%p364) target = $region28
      $region27: #{custom_text_clip_forward.1} parent=15 // pred_region
        %p367 = scmp.lt.s32.totalorder %s17, 1
        %s368 = scalar_select %p367, %s17, 1
        %s369 = smul.addr %s368, 2
        %s370 = scalar_lea.vmem %s2, %s369
      $region28: #{custom_text_clip_forward.1} parent=15 // pred_fallthru
        _
      // Predicated region
      $region29: #{custom_text_clip_forward.1} parent=15 // pred_check
        %p371 = pneg %p115
      $region30: #{custom_text_clip_forward.1} parent=15 // pred_check_branch
        %373 = sbr.rel (%p371) target = $region32
      $region31: #{custom_text_clip_forward.1} parent=15 // pred_region
        %p374 = scmp.lt.s32.totalorder %s17, 1
        %s375 = scalar_select %p374, %s17, 1
        %s376 = smul.addr %s375, 8
        %s377 = smul.addr %s376, 8
        %s378 = scalar_lea.vmem %s3, %s377
      $region32: #{custom_text_clip_forward.1} parent=15 // pred_fallthru
        _
      // Predicated region
      $region33: #{custom_text_clip_forward.1} parent=15 // pred_check
        %p379 = pneg %p141
      $region34: #{custom_text_clip_forward.1} parent=15 // pred_check_branch
        %381 = sbr.rel (%p379) target = $region36
      $region35: #{custom_text_clip_forward.1} parent=15 // pred_region
        %p382 = scmp.lt.s32.totalorder %s17, 1
        %s383 = scalar_select %p382, %s17, 1
        %s384 = smul.addr %s383, 6
        %s385 = smul.addr %s384, 8
        %s386 = scalar_lea.vmem %s4, %s385
      $region36: #{custom_text_clip_forward.1} parent=15 // pred_fallthru
        _
      // Predicated region
      $region37: #{custom_text_clip_forward.1} parent=15 // pred_check
        %p387 = pneg %p167
      $region38: #{custom_text_clip_forward.1} parent=15 // pred_check_branch
        %389 = sbr.rel (%p387) target = $region40
      $region39: #{custom_text_clip_forward.1} parent=15 // pred_region
        %p390 = scmp.lt.s32.totalorder %s17, 1
        %s391 = scalar_select %p390, %s17, 1
        %s392 = smul.addr %s391, 6
        %s393 = smul.addr %s392, 8
        %s394 = scalar_lea.vmem %s5, %s393
      $region40: #{custom_text_clip_forward.1} parent=15 // pred_fallthru
        _
      // Predicated region
      $region41: #{custom_text_clip_forward.1} parent=15 // pred_check
        %p395 = pneg %p193
      $region42: #{custom_text_clip_forward.1} parent=15 // pred_check_branch
        %397 = sbr.rel (%p395) target = $region44
      $region43: #{custom_text_clip_forward.1} parent=15 // pred_region
        %p398 = scmp.lt.s32.totalorder %s17, 1
        %s399 = scalar_select %p398, %s17, 1
        %s400 = smul.addr %s399, 32
        %s401 = smul.addr %s400, 8
        %s402 = scalar_lea.vmem %s6, %s401
      $region44: #{custom_text_clip_forward.1} parent=15 // pred_fallthru
        _
      // Predicated region
      $region45: #{custom_text_clip_forward.1} parent=15 // pred_check
        %p403 = pneg %p219
      $region46: #{custom_text_clip_forward.1} parent=15 // pred_check_branch
        %405 = sbr.rel (%p403) target = $region48
      $region47: #{custom_text_clip_forward.1} parent=15 // pred_region
        %p406 = scmp.lt.s32.totalorder %s17, 1
        %s407 = scalar_select %p406, %s17, 1
        %s408 = smul.addr %s407, 16
        %s409 = smul.addr %s408, 8
        %s410 = scalar_lea.vmem %s7, %s409
      $region48: #{custom_text_clip_forward.1} parent=15 // pred_fallthru
        _
      // Predicated region
      $region49: #{custom_text_clip_forward.1} parent=15 // pred_check
        %p411 = pneg %p245
      $region50: #{custom_text_clip_forward.1} parent=15 // pred_check_branch
        %413 = sbr.rel (%p411) target = $region52
      $region51: #{custom_text_clip_forward.1} parent=15 // pred_region
        %p414 = scmp.lt.s32.totalorder %s17, 1
        %s415 = scalar_select %p414, %s17, 1
        %s416 = smul.addr %s415, 32
        %s417 = smul.addr %s416, 8
        %s418 = scalar_lea.vmem %s8, %s417
      $region52: #{custom_text_clip_forward.1} parent=15 // pred_fallthru
        _
      // Predicated region
      $region53: #{custom_text_clip_forward.1} parent=15 // pred_check
        %p419 = pneg %p271
      $region54: #{custom_text_clip_forward.1} parent=15 // pred_check_branch
        %421 = sbr.rel (%p419) target = $region56
      $region55: #{custom_text_clip_forward.1} parent=15 // pred_region
        %p422 = scmp.lt.s32.totalorder %s17, 1
        %s423 = scalar_select %p422, %s17, 1
        %s424 = smul.addr %s423, 64
        %s425 = smul.addr %s424, 8
        %s426 = scalar_lea.vmem %s9, %s425
      $region56: #{custom_text_clip_forward.1} parent=15 // pred_fallthru
        _
      // Predicated region
      $region57: #{custom_text_clip_forward.1} parent=15 // pred_check
        %p427 = pneg %p297
      $region58: #{custom_text_clip_forward.1} parent=15 // pred_check_branch
        %429 = sbr.rel (%p427) target = $region60
      $region59: #{custom_text_clip_forward.1} parent=15 // pred_region
        %p430 = scmp.lt.s32.totalorder %s17, 1
        %s431 = scalar_select %p430, %s17, 1
        %s432 = smul.addr %s431, 8
        %s433 = smul.addr %s432, 8
        %s434 = scalar_lea.vmem %s10, %s433
      $region60: #{custom_text_clip_forward.1} parent=15 // pred_fallthru
        _
    $region16: #{custom_text_clip_forward.1} parent=5 // pred_fallthru
      _
    %p435 = scmp.le.s32.totalorder 1, %s17
    %p436 = scmp.lt.s32.totalorder %s17, 3
    %p437 = pnand %p435, %p436
    %p438 = pneg %p437
    // Predicated region
    $region61: #{custom_text_clip_forward.1} parent=5 // pred_check
      _
    $region62: #{custom_text_clip_forward.1} parent=5 // pred_check_branch
      %440 = sbr.rel (%p437) target = $region64
    $region63: #{custom_text_clip_forward.1} parent=5 // pred_region
      %s441 = ssub.s32 %s17, 1
      %p442 = scmp.lt.s32.totalorder %s22, 1
      %s443 = scalar_select %p442, %s22, 1
      %s444 = smul.addr %s443, 6
      %s445 = smul.addr %s444, 8
      %s446 = scalar_lea.vmem %s0, %s445
      %p447 = pneg %p43
      %p448 = pneg %p40
      %p449 = scmp.lt.s32.totalorder %s22, 1
      %s450 = scalar_select %p449, %s22, 1
      %s451 = smul.addr %s450, 6
      %s452 = smul.addr %s451, 8
      %s453 = scalar_lea.vmem %s1, %s452
      %p454 = pneg %p69
      %p455 = pneg %p66
      %p456 = scmp.lt.s32.totalorder %s22, 1
      %s457 = scalar_select %p456, %s22, 1
      %s458 = smul.addr %s457, 2
      %s459 = scalar_lea.vmem %s2, %s458
      %p460 = pneg %p95
      %p461 = pneg %p92
      %p462 = scmp.lt.s32.totalorder %s22, 1
      %s463 = scalar_select %p462, %s22, 1
      %s464 = smul.addr %s463, 8
      %s465 = smul.addr %s464, 8
      %s466 = scalar_lea.vmem %s3, %s465
      %p467 = pneg %p121
      %p468 = pneg %p118
      %p469 = scmp.lt.s32.totalorder %s22, 1
      %s470 = scalar_select %p469, %s22, 1
      %s471 = smul.addr %s470, 6
      %s472 = smul.addr %s471, 8
      %s473 = scalar_lea.vmem %s4, %s472
      %p474 = pneg %p147
      %p475 = pneg %p144
      %p476 = scmp.lt.s32.totalorder %s22, 1
      %s477 = scalar_select %p476, %s22, 1
      %s478 = smul.addr %s477, 6
      %s479 = smul.addr %s478, 8
      %s480 = scalar_lea.vmem %s5, %s479
      %p481 = pneg %p173
      %p482 = pneg %p170
      %p483 = scmp.lt.s32.totalorder %s22, 1
      %s484 = scalar_select %p483, %s22, 1
      %s485 = smul.addr %s484, 32
      %s486 = smul.addr %s485, 8
      %s487 = scalar_lea.vmem %s6, %s486
      %p488 = pneg %p199
      %p489 = pneg %p196
      %p490 = scmp.lt.s32.totalorder %s22, 1
      %s491 = scalar_select %p490, %s22, 1
      %s492 = smul.addr %s491, 16
      %s493 = smul.addr %s492, 8
      %s494 = scalar_lea.vmem %s7, %s493
      %p495 = pneg %p225
      %p496 = pneg %p222
      %p497 = scmp.lt.s32.totalorder %s22, 1
      %s498 = scalar_select %p497, %s22, 1
      %s499 = smul.addr %s498, 32
      %s500 = smul.addr %s499, 8
      %s501 = scalar_lea.vmem %s8, %s500
      %p502 = pneg %p251
      %p503 = pneg %p248
      %p504 = scmp.lt.s32.totalorder %s22, 1
      %s505 = scalar_select %p504, %s22, 1
      %s506 = smul.addr %s505, 64
      %s507 = smul.addr %s506, 8
      %s508 = scalar_lea.vmem %s9, %s507
      %p509 = pneg %p277
      %p510 = pneg %p274
      %p511 = scmp.lt.s32.totalorder %s22, 1
      %s512 = scalar_select %p511, %s22, 1
      %s513 = smul.addr %s512, 8
      %s514 = smul.addr %s513, 8
      %s515 = scalar_lea.vmem %s10, %s514
      %p516 = pneg %p303
      %p517 = pneg %p300
      %p518 = pneg %p329
      %p519 = pneg %p326
      %p520 = scmp.lt.s32.totalorder %s22, 1
      %s521 = scalar_select %p520, %s22, 1
      %s522 = smul.addr %s521, 2
      %s523 = scalar_lea.vmem %s11, %s522
      %p524 = scmp.lt.s32.totalorder %s22, 1
      %s525 = scalar_select %p524, %s22, 1
      %s526 = smul.addr %s525, 6
      %s527 = smul.addr %s526, 8
      %s528 = scalar_lea.vmem %s0, %s527
      %p529 = scmp.lt.s32.totalorder %s22, 1
      %s530 = scalar_select %p529, %s22, 1
      %s531 = smul.addr %s530, 6
      %s532 = smul.addr %s531, 8
      %s533 = scalar_lea.vmem %s1, %s532
      %p534 = scmp.lt.s32.totalorder %s22, 1
      %s535 = scalar_select %p534, %s22, 1
      %s536 = smul.addr %s535, 2
      %s537 = scalar_lea.vmem %s2, %s536
      %p538 = scmp.lt.s32.totalorder %s22, 1
      %s539 = scalar_select %p538, %s22, 1
      %s540 = smul.addr %s539, 8
      %s541 = smul.addr %s540, 8
      %s542 = scalar_lea.vmem %s3, %s541
      %p543 = scmp.lt.s32.totalorder %s22, 1
      %s544 = scalar_select %p543, %s22, 1
      %s545 = smul.addr %s544, 6
      %s546 = smul.addr %s545, 8
      %s547 = scalar_lea.vmem %s4, %s546
      %p548 = scmp.lt.s32.totalorder %s22, 1
      %s549 = scalar_select %p548, %s22, 1
      %s550 = smul.addr %s549, 6
      %s551 = smul.addr %s550, 8
      %s552 = scalar_lea.vmem %s5, %s551
      %p553 = scmp.lt.s32.totalorder %s22, 1
      %s554 = scalar_select %p553, %s22, 1
      %s555 = smul.addr %s554, 32
      %s556 = smul.addr %s555, 8
      %s557 = scalar_lea.vmem %s6, %s556
      %p558 = scmp.lt.s32.totalorder %s22, 1
      %s559 = scalar_select %p558, %s22, 1
      %s560 = smul.addr %s559, 16
      %s561 = smul.addr %s560, 8
      %s562 = scalar_lea.vmem %s7, %s561
      %p563 = scmp.lt.s32.totalorder %s22, 1
      %s564 = scalar_select %p563, %s22, 1
      %s565 = smul.addr %s564, 32
      %s566 = smul.addr %s565, 8
      %s567 = scalar_lea.vmem %s8, %s566
      %p568 = scmp.lt.s32.totalorder %s22, 1
      %s569 = scalar_select %p568, %s22, 1
      %s570 = smul.addr %s569, 64
      %s571 = smul.addr %s570, 8
      %s572 = scalar_lea.vmem %s9, %s571
      %p573 = scmp.lt.s32.totalorder %s22, 1
      %s574 = scalar_select %p573, %s22, 1
      %s575 = smul.addr %s574, 8
      %s576 = smul.addr %s575, 8
      %s577 = scalar_lea.vmem %s10, %s576
      %p578 = scmp.lt.s32.totalorder %s22, 1
      %s579 = scalar_select %p578, %s22, 1
      %s580 = smul.addr %s579, 2
      %s581 = scalar_lea.vmem %s11, %s580
      %v582 = vld [vmem:[%s552 + $0x20] ss:$0 sm:$0xff]
      %v583 = vld [vmem:[%s552 + $0x21] ss:$0 sm:$0xff]
      %v584 = vld [vmem:[%s552 + $0x22] ss:$0 sm:$0xff]
      %v585 = vld [vmem:[%s552 + $0x23] ss:$0 sm:$0xff]
      %v586 = vlaneseq
      %v587 = vand.u32 %v586, 127
      %vm588 = vcmp.ge.s32.totalorder %v587, 0
      %vm589 = vcmp.lt.s32.totalorder %v587, 32
      %vm590 = vmand %vm588, %vm589
      %v591 = vsel %vm590, 1, 0
      %v592 = vcvt.s32.f32 %v591
      %vm593 = vcmp.ge.s32.totalorder %v587, 32
      %vm594 = vcmp.lt.s32.totalorder %v587, 64
      %vm595 = vmand %vm593, %vm594
      %v596 = vsel %vm595, 1, 0
      %v597 = vcvt.s32.f32 %v596
      %p598 = scmp.eq.s32.totalorder %s22, 0
      %s599 = scalar_select %p598, 1, 0
      %s600 = scvt.s32.f32 %s599
      %v601 = vld [vmem:[%s528] sm:$0xff]
      %v602 = vld [vmem:[%s528 + $0x8] sm:$0xff]
      %v603 = vld [vmem:[%s528 + $0x10] sm:$0xff]
      %v604 = vld [vmem:[%s528 + $0x18] sm:$0xff]
      %v605 = vld [vmem:[%s528 + $0x20] sm:$0xff]
      %v606 = vld [vmem:[%s528 + $0x28] sm:$0xff]
      %v607 = vld [vmem:[%s542] sm:$0xff]
      %v608 = vld [vmem:[%s542 + $0x8] sm:$0xff]
      %v609 = vld [vmem:[%s542 + $0x10] sm:$0xff]
      %v610 = vld [vmem:[%s542 + $0x18] sm:$0xff]
      %v611 = vld [vmem:[%s542 + $0x20] sm:$0xff]
      %v612 = vld [vmem:[%s542 + $0x28] sm:$0xff]
      %v613 = vld [vmem:[%s542 + $0x30] sm:$0xff]
      %v614 = vld [vmem:[%s542 + $0x38] sm:$0xff]
      %v615 = vld [vmem:[%s547] sm:$0xff]
      %v616 = vld [vmem:[%s547 + $0x8] sm:$0xff]
      %v617 = vld [vmem:[%s547 + $0x10] sm:$0xff]
      %v618 = vld [vmem:[%s547 + $0x18] sm:$0xff]
      %v619 = vld [vmem:[%s547 + $0x20] sm:$0xff]
      %v620 = vld [vmem:[%s547 + $0x28] sm:$0xff]
      %vm621 = vcmask 523264
      %v623 = vsel %vm621, %v601, 0
      %v626 = vsel %vm621, %v602, 0
      %v629 = vsel %vm621, %v603, 0
      %v632 = vsel %vm621, %v604, 0
      %v635 = vsel %vm621, %v605, 0
      %v638 = vsel %vm621, %v606, 0
      %640 = vmatpush.msra.mxu0 0.0
      %641 = vmatpush.msra.mxu0 0.0
      %642 = vmatpush.msra.mxu0 0.0
      %643 = vmatpush.msra.mxu0 0.0
      %644 = vmatpush.msra.mxu0 0.0
      %645 = vmatpush.msra.mxu0 0.0
      %646 = vmatpush.msra.mxu0 0.0
      %647 = vmatpush.msra.mxu0 0.0
      %648 = vmatpush.msra.mxu0 %v614
      %649 = vmatpush.msra.mxu0 %v613
      %650 = vmatpush.msra.mxu0 %v612
      %651 = vmatpush.msra.mxu0 %v611
      %652 = vmatpush.msra.mxu0 %v610
      %653 = vmatpush.msra.mxu0 %v609
      %654 = vmatpush.msra.mxu0 %v608
      %655 = vmatpush.msra.mxu0 %v607
      %656 = vmatmul.f32.gmra.mxu0 %v623
      %v657 = vpop.f32.mrf.mxu0
      %v658 = vadd.f32 %v615, %v657
      %659 = vmatmul.f32.gmra.mxu0 %v626
      %v660 = vpop.f32.mrf.mxu0
      %v661 = vadd.f32 %v616, %v660
      %662 = vmatmul.f32.gmra.mxu0 %v629
      %v663 = vpop.f32.mrf.mxu0
      %v664 = vadd.f32 %v617, %v663
      %665 = vmatmul.f32.gmra.mxu0 %v632
      %v666 = vpop.f32.mrf.mxu0
      %v667 = vadd.f32 %v618, %v666
      %668 = vmatmul.f32.gmra.mxu0 %v635
      %v669 = vpop.f32.mrf.mxu0
      %v670 = vadd.f32 %v619, %v669
      %671 = vmatmul.f32.gmra.mxu0 %v638
      %v672 = vpop.f32.mrf.mxu0
      %v673 = vadd.f32 %v620, %v672
      %674 = vdwg.mxu0
      %v675 = vsel %vm621, %v658, 0.0
      %676 = vadd.xlane.f32.xlu0 %v675
      %v677 = vpop.xlane.xlu0 %676
      %v678 = vsel %vm621, %v661, 0.0
      %679 = vadd.xlane.f32.xlu0 %v678
      %v680 = vpop.xlane.xlu0 %679
      %v681 = vsel %vm621, %v664, 0.0
      %682 = vadd.xlane.f32.xlu0 %v681
      %v683 = vpop.xlane.xlu0 %682
      %v684 = vsel %vm621, %v667, 0.0
      %685 = vadd.xlane.f32.xlu0 %v684
      %v686 = vpop.xlane.xlu0 %685
      %v687 = vsel %vm621, %v670, 0.0
      %688 = vadd.xlane.f32.xlu0 %v687
      %v689 = vpop.xlane.xlu0 %688
      %v690 = vsel %vm621, %v673, 0.0
      %691 = vadd.xlane.f32.xlu0 %v690
      %v692 = vpop.xlane.xlu0 %691
      %v693 = vrcp.pop 64.0
      %v694 = vmul.f32 64.0, %v693
      %v695 = vsub.f32 1.0, %v694
      %v696 = vmul.f32 %v693, %v695
      %v697 = vadd.f32 %v693, %v696
      %vm698 = vweird.f32 %v693
      %v699 = vsel %vm698, %v693, %v697
      %v700 = vmul.f32 %v677, %v699
      %v701 = vmul.f32 %v680, %v699
      %v702 = vmul.f32 %v683, %v699
      %v703 = vmul.f32 %v686, %v699
      %v704 = vmul.f32 %v689, %v699
      %v705 = vmul.f32 %v692, %v699
      %v706 = vsub.f32 %v658, %v700
      %v707 = vsub.f32 %v661, %v701
      %v708 = vsub.f32 %v664, %v702
      %v709 = vsub.f32 %v667, %v703
      %v710 = vsub.f32 %v670, %v704
      %v711 = vsub.f32 %v673, %v705
      %v712 = vmul.f32 %v706, %v706
      %v713 = vmul.f32 %v707, %v707
      %v714 = vmul.f32 %v708, %v708
      %v715 = vmul.f32 %v709, %v709
      %v716 = vmul.f32 %v710, %v710
      %v717 = vmul.f32 %v711, %v711
      %v718 = vsel %vm621, %v712, 0.0
      %719 = vadd.xlane.f32.xlu0 %v718
      %v720 = vpop.xlane.xlu0 %719
      %v721 = vsel %vm621, %v713, 0.0
      %722 = vadd.xlane.f32.xlu0 %v721
      %v723 = vpop.xlane.xlu0 %722
      %v724 = vsel %vm621, %v714, 0.0
      %725 = vadd.xlane.f32.xlu0 %v724
      %v726 = vpop.xlane.xlu0 %725
      %v727 = vsel %vm621, %v715, 0.0
      %728 = vadd.xlane.f32.xlu0 %v727
      %v729 = vpop.xlane.xlu0 %728
      %v730 = vsel %vm621, %v716, 0.0
      %731 = vadd.xlane.f32.xlu0 %v730
      %v732 = vpop.xlane.xlu0 %731
      %v733 = vsel %vm621, %v717, 0.0
      %734 = vadd.xlane.f32.xlu0 %v733
      %v735 = vpop.xlane.xlu0 %734
      %v736 = vmul.f32 %v720, %v699
      %v737 = vmul.f32 %v723, %v699
      %v738 = vmul.f32 %v726, %v699
      %v739 = vmul.f32 %v729, %v699
      %v740 = vmul.f32 %v732, %v699
      %v741 = vmul.f32 %v735, %v699
      %v742 = vadd.f32 %v736, 1e-05
      %v743 = vadd.f32 %v737, 1e-05
      %v744 = vadd.f32 %v738, 1e-05
      %v745 = vadd.f32 %v739, 1e-05
      %v746 = vadd.f32 %v740, 1e-05
      %v747 = vadd.f32 %v741, 1e-05
      %v748 = vrsqrt.pop %v742
      %v749 = vmul.f32 %v748, %v742
      %v750 = vmul.f32 %v749, %v748
      %v751 = vmul.f32 0.5, %v750
      %v752 = vsub.f32 1.5, %v751
      %v753 = vmul.f32 %v748, %v752
      %vm754 = vweird.f32 %v742
      %vm755 = vweird.f32 %v748
      %vm756 = vmor %vm754, %vm755
      %v757 = vsel %vm756, %v748, %v753
      %v758 = vrsqrt.pop %v743
      %v759 = vmul.f32 %v758, %v743
      %v760 = vmul.f32 %v759, %v758
      %v761 = vmul.f32 0.5, %v760
      %v762 = vsub.f32 1.5, %v761
      %v763 = vmul.f32 %v758, %v762
      %vm764 = vweird.f32 %v743
      %vm765 = vweird.f32 %v758
      %vm766 = vmor %vm764, %vm765
      %v767 = vsel %vm766, %v758, %v763
      %v768 = vrsqrt.pop %v744
      %v769 = vmul.f32 %v768, %v744
      %v770 = vmul.f32 %v769, %v768
      %v771 = vmul.f32 0.5, %v770
      %v772 = vsub.f32 1.5, %v771
      %v773 = vmul.f32 %v768, %v772
      %vm774 = vweird.f32 %v744
      %vm775 = vweird.f32 %v768
      %vm776 = vmor %vm774, %vm775
      %v777 = vsel %vm776, %v768, %v773
      %v778 = vrsqrt.pop %v745
      %v779 = vmul.f32 %v778, %v745
      %v780 = vmul.f32 %v779, %v778
      %v781 = vmul.f32 0.5, %v780
      %v782 = vsub.f32 1.5, %v781
      %v783 = vmul.f32 %v778, %v782
      %vm784 = vweird.f32 %v745
      %vm785 = vweird.f32 %v778
      %vm786 = vmor %vm784, %vm785
      %v787 = vsel %vm786, %v778, %v783
      %v788 = vrsqrt.pop %v746
      %v789 = vmul.f32 %v788, %v746
      %v790 = vmul.f32 %v789, %v788
      %v791 = vmul.f32 0.5, %v790
      %v792 = vsub.f32 1.5, %v791
      %v793 = vmul.f32 %v788, %v792
      %vm794 = vweird.f32 %v746
      %vm795 = vweird.f32 %v788
      %vm796 = vmor %vm794, %vm795
      %v797 = vsel %vm796, %v788, %v793
      %v798 = vrsqrt.pop %v747
      %v799 = vmul.f32 %v798, %v747
      %v800 = vmul.f32 %v799, %v798
      %v801 = vmul.f32 0.5, %v800
      %v802 = vsub.f32 1.5, %v801
      %v803 = vmul.f32 %v798, %v802
      %vm804 = vweird.f32 %v747
      %vm805 = vweird.f32 %v798
      %vm806 = vmor %vm804, %vm805
      %v807 = vsel %vm806, %v798, %v803
      %v808 = vmul.f32 %v706, %v757
      %v809 = vmul.f32 %v707, %v767
      %v810 = vmul.f32 %v708, %v777
      %v811 = vmul.f32 %v709, %v787
      %v812 = vmul.f32 %v710, %v797
      %v813 = vmul.f32 %v711, %v807
      %v814 = vmul.f32 %v808, %v582
      %v815 = vmul.f32 %v809, %v582
      %v816 = vmul.f32 %v810, %v582
      %v817 = vmul.f32 %v811, %v582
      %v818 = vmul.f32 %v812, %v582
      %v819 = vmul.f32 %v813, %v582
      %v820 = vadd.f32 %v814, %v583
      %v821 = vadd.f32 %v815, %v583
      %v822 = vadd.f32 %v816, %v583
      %v823 = vadd.f32 %v817, %v583
      %v824 = vadd.f32 %v818, %v583
      %v825 = vadd.f32 %v819, %v583
      %v826 = vstv %s600
      %v827 = vmul.f32 %v826, %v820
      %v828 = vmul.f32 %v826, %v821
      %v829 = vmul.f32 %v826, %v822
      %v830 = vmul.f32 %v826, %v823
      %v831 = vmul.f32 %v826, %v824
      %v832 = vmul.f32 %v826, %v825
      %s833 = ssub.f32 1.0, %s600
      %v834 = vstv %s833
      %v835 = vmul.f32 %v834, %v601
      %v836 = vmul.f32 %v834, %v602
      %v837 = vmul.f32 %v834, %v603
      %v838 = vmul.f32 %v834, %v604
      %v839 = vmul.f32 %v834, %v605
      %v840 = vmul.f32 %v834, %v606
      %v841 = vadd.f32 %v827, %v835
      %v842 = vadd.f32 %v828, %v836
      %v843 = vadd.f32 %v829, %v837
      %v844 = vadd.f32 %v830, %v838
      %v845 = vadd.f32 %v831, %v839
      %v846 = vadd.f32 %v832, %v840
      %v847 = vld [vmem:[%s533] sm:$0xff]
      %v848 = vld [vmem:[%s533 + $0x8] sm:$0xff]
      %v849 = vld [vmem:[%s533 + $0x10] sm:$0xff]
      %v850 = vld [vmem:[%s533 + $0x18] sm:$0xff]
      %v851 = vld [vmem:[%s533 + $0x20] sm:$0xff]
      %v852 = vld [vmem:[%s533 + $0x28] sm:$0xff]
      %v853 = vld [vmem:[%s552] ss:$0 sm:$0xff]
      %v854 = vld [vmem:[%s552 + $0x1] ss:$0 sm:$0xff]
      %s855 = scalar_lea.vmem %s552, 2
      %v856 = vld [vmem:[%s855] ss:$8 sm:$0x3]
      %v857 = vld [vmem:[%s552 + $0x3] ss:$0 sm:$0xff]
      %v858 = vld [vmem:[%s552 + $0x4] ss:$0 sm:$0xff]
      %v859 = vld [vmem:[%s552 + $0x5] ss:$0 sm:$0xff]
      %s860 = scalar_lea.vmem %s552, 6
      %v861 = vld [vmem:[%s860] ss:$8 sm:$0x3]
      %v862 = vld [vmem:[%s552 + $0x7] ss:$0 sm:$0xff]
      %v863 = vsel %vm621, %v841, 0.0
      %864 = vadd.xlane.f32.xlu0 %v863
      %v865 = vpop.xlane.xlu0 %864
      %v866 = vsel %vm621, %v842, 0.0
      %867 = vadd.xlane.f32.xlu0 %v866
      %v868 = vpop.xlane.xlu0 %867
      %v869 = vsel %vm621, %v843, 0.0
      %870 = vadd.xlane.f32.xlu0 %v869
      %v871 = vpop.xlane.xlu0 %870
      %v872 = vsel %vm621, %v844, 0.0
      %873 = vadd.xlane.f32.xlu0 %v872
      %v874 = vpop.xlane.xlu0 %873
      %v875 = vsel %vm621, %v845, 0.0
      %876 = vadd.xlane.f32.xlu0 %v875
      %v877 = vpop.xlane.xlu0 %876
      %v878 = vsel %vm621, %v846, 0.0
      %879 = vadd.xlane.f32.xlu0 %v878
      %v880 = vpop.xlane.xlu0 %879
      %v881 = vmul.f32 %v865, %v699
      %v882 = vmul.f32 %v868, %v699
      %v883 = vmul.f32 %v871, %v699
      %v884 = vmul.f32 %v874, %v699
      %v885 = vmul.f32 %v877, %v699
      %v886 = vmul.f32 %v880, %v699
      %v887 = vsub.f32 %v841, %v881
      %v888 = vsub.f32 %v842, %v882
      %v889 = vsub.f32 %v843, %v883
      %v890 = vsub.f32 %v844, %v884
      %v891 = vsub.f32 %v845, %v885
      %v892 = vsub.f32 %v846, %v886
      %v893 = vmul.f32 %v887, %v887
      %v894 = vmul.f32 %v888, %v888
      %v895 = vmul.f32 %v889, %v889
      %v896 = vmul.f32 %v890, %v890
      %v897 = vmul.f32 %v891, %v891
      %v898 = vmul.f32 %v892, %v892
      %v899 = vsel %vm621, %v893, 0.0
      %900 = vadd.xlane.f32.xlu0 %v899
      %v901 = vpop.xlane.xlu0 %900
      %v902 = vsel %vm621, %v894, 0.0
      %903 = vadd.xlane.f32.xlu0 %v902
      %v904 = vpop.xlane.xlu0 %903
      %v905 = vsel %vm621, %v895, 0.0
      %906 = vadd.xlane.f32.xlu0 %v905
      %v907 = vpop.xlane.xlu0 %906
      %v908 = vsel %vm621, %v896, 0.0
      %909 = vadd.xlane.f32.xlu0 %v908
      %v910 = vpop.xlane.xlu0 %909
      %v911 = vsel %vm621, %v897, 0.0
      %912 = vadd.xlane.f32.xlu0 %v911
      %v913 = vpop.xlane.xlu0 %912
      %v914 = vsel %vm621, %v898, 0.0
      %915 = vadd.xlane.f32.xlu0 %v914
      %v916 = vpop.xlane.xlu0 %915
      %v917 = vmul.f32 %v901, %v699
      %v918 = vmul.f32 %v904, %v699
      %v919 = vmul.f32 %v907, %v699
      %v920 = vmul.f32 %v910, %v699
      %v921 = vmul.f32 %v913, %v699
      %v922 = vmul.f32 %v916, %v699
      %v923 = vadd.f32 %v917, 1e-05
      %v924 = vadd.f32 %v918, 1e-05
      %v925 = vadd.f32 %v919, 1e-05
      %v926 = vadd.f32 %v920, 1e-05
      %v927 = vadd.f32 %v921, 1e-05
      %v928 = vadd.f32 %v922, 1e-05
      %v929 = vrsqrt.pop %v923
      %v930 = vmul.f32 %v929, %v923
      %v931 = vmul.f32 %v930, %v929
      %v932 = vmul.f32 0.5, %v931
      %v933 = vsub.f32 1.5, %v932
      %v934 = vmul.f32 %v929, %v933
      %vm935 = vweird.f32 %v923
      %vm936 = vweird.f32 %v929
      %vm937 = vmor %vm935, %vm936
      %v938 = vsel %vm937, %v929, %v934
      %v939 = vrsqrt.pop %v924
      %v940 = vmul.f32 %v939, %v924
      %v941 = vmul.f32 %v940, %v939
      %v942 = vmul.f32 0.5, %v941
      %v943 = vsub.f32 1.5, %v942
      %v944 = vmul.f32 %v939, %v943
      %vm945 = vweird.f32 %v924
      %vm946 = vweird.f32 %v939
      %vm947 = vmor %vm945, %vm946
      %v948 = vsel %vm947, %v939, %v944
      %v949 = vrsqrt.pop %v925
      %v950 = vmul.f32 %v949, %v925
      %v951 = vmul.f32 %v950, %v949
      %v952 = vmul.f32 0.5, %v951
      %v953 = vsub.f32 1.5, %v952
      %v954 = vmul.f32 %v949, %v953
      %vm955 = vweird.f32 %v925
      %vm956 = vweird.f32 %v949
      %vm957 = vmor %vm955, %vm956
      %v958 = vsel %vm957, %v949, %v954
      %v959 = vrsqrt.pop %v926
      %v960 = vmul.f32 %v959, %v926
      %v961 = vmul.f32 %v960, %v959
      %v962 = vmul.f32 0.5, %v961
      %v963 = vsub.f32 1.5, %v962
      %v964 = vmul.f32 %v959, %v963
      %vm965 = vweird.f32 %v926
      %vm966 = vweird.f32 %v959
      %vm967 = vmor %vm965, %vm966
      %v968 = vsel %vm967, %v959, %v964
      %v969 = vrsqrt.pop %v927
      %v970 = vmul.f32 %v969, %v927
      %v971 = vmul.f32 %v970, %v969
      %v972 = vmul.f32 0.5, %v971
      %v973 = vsub.f32 1.5, %v972
      %v974 = vmul.f32 %v969, %v973
      %vm975 = vweird.f32 %v927
      %vm976 = vweird.f32 %v969
      %vm977 = vmor %vm975, %vm976
      %v978 = vsel %vm977, %v969, %v974
      %v979 = vrsqrt.pop %v928
      %v980 = vmul.f32 %v979, %v928
      %v981 = vmul.f32 %v980, %v979
      %v982 = vmul.f32 0.5, %v981
      %v983 = vsub.f32 1.5, %v982
      %v984 = vmul.f32 %v979, %v983
      %vm985 = vweird.f32 %v928
      %vm986 = vweird.f32 %v979
      %vm987 = vmor %vm985, %vm986
      %v988 = vsel %vm987, %v979, %v984
      %v989 = vmul.f32 %v887, %v938
      %v990 = vmul.f32 %v888, %v948
      %v991 = vmul.f32 %v889, %v958
      %v992 = vmul.f32 %v890, %v968
      %v993 = vmul.f32 %v891, %v978
      %v994 = vmul.f32 %v892, %v988
      %v995 = vmul.f32 %v989, %v853
      %v996 = vmul.f32 %v990, %v853
      %v997 = vmul.f32 %v991, %v853
      %v998 = vmul.f32 %v992, %v853
      %v999 = vmul.f32 %v993, %v853
      %v1000 = vmul.f32 %v994, %v853
      %v1001 = vadd.f32 %v995, %v854
      %v1002 = vadd.f32 %v996, %v854
      %v1003 = vadd.f32 %v997, %v854
      %v1004 = vadd.f32 %v998, %v854
      %v1005 = vadd.f32 %v999, %v854
      %v1006 = vadd.f32 %v1000, %v854
      %v1007 = vld [vmem:[%s557] sm:$0xff]
      %v1008 = vld [vmem:[%s557 + $0x8] sm:$0xff]
      %v1009 = vld [vmem:[%s557 + $0x10] sm:$0xff]
      %v1010 = vld [vmem:[%s557 + $0x18] sm:$0xff]
      %v1011 = vld [vmem:[%s557 + $0x20] sm:$0xff]
      %v1012 = vld [vmem:[%s557 + $0x28] sm:$0xff]
      %v1013 = vld [vmem:[%s557 + $0x30] sm:$0xff]
      %v1014 = vld [vmem:[%s557 + $0x38] sm:$0xff]
      %v1015 = vld [vmem:[%s557 + $0x40] sm:$0xff]
      %v1016 = vld [vmem:[%s557 + $0x48] sm:$0xff]
      %v1017 = vld [vmem:[%s557 + $0x50] sm:$0xff]
      %v1018 = vld [vmem:[%s557 + $0x58] sm:$0xff]
      %v1019 = vld [vmem:[%s557 + $0x60] sm:$0xff]
      %v1020 = vld [vmem:[%s557 + $0x68] sm:$0xff]
      %v1021 = vld [vmem:[%s557 + $0x70] sm:$0xff]
      %v1022 = vld [vmem:[%s557 + $0x78] sm:$0xff]
      %v1024 = vperm.slane %v856, 0
      %v1025 = vperm.slane %v856, 1
      %v1029 = vsel %vm621, %v1001, 0
      %v1032 = vsel %vm621, %v1002, 0
      %v1035 = vsel %vm621, %v1003, 0
      %v1038 = vsel %vm621, %v1004, 0
      %v1041 = vsel %vm621, %v1005, 0
      %v1044 = vsel %vm621, %v1006, 0
      %1046 = vmatpush.msra.mxu0 0.0
      %1047 = vmatpush.msra.mxu0 0.0
      %1048 = vmatpush.msra.mxu0 0.0
      %1049 = vmatpush.msra.mxu0 0.0
      %1050 = vmatpush.msra.mxu0 0.0
      %1051 = vmatpush.msra.mxu0 0.0
      %1052 = vmatpush.msra.mxu0 0.0
      %1053 = vmatpush.msra.mxu0 0.0
      %1054 = vmatpush.msra.mxu0 %v1021
      %1055 = vmatpush.msra.mxu0 %v1019
      %1056 = vmatpush.msra.mxu0 %v1017
      %1057 = vmatpush.msra.mxu0 %v1015
      %1058 = vmatpush.msra.mxu0 %v1013
      %1059 = vmatpush.msra.mxu0 %v1011
      %1060 = vmatpush.msra.mxu0 %v1009
      %1061 = vmatpush.msra.mxu0 %v1007
      %1062 = vmatmul.f32.gmra.mxu0 %v1029
      %v1063 = vpop.f32.mrf.mxu0
      %v1064 = vadd.f32 %v1024, %v1063
      %1065 = vmatmul.f32.gmra.mxu0 %v1032
      %v1066 = vpop.f32.mrf.mxu0
      %v1067 = vadd.f32 %v1024, %v1066
      %1068 = vmatmul.f32.gmra.mxu0 %v1035
      %v1069 = vpop.f32.mrf.mxu0
      %v1070 = vadd.f32 %v1024, %v1069
      %1071 = vmatmul.f32.gmra.mxu0 %v1038
      %v1072 = vpop.f32.mrf.mxu0
      %v1073 = vadd.f32 %v1024, %v1072
      %1074 = vmatmul.f32.gmra.mxu0 %v1041
      %v1075 = vpop.f32.mrf.mxu0
      %v1076 = vadd.f32 %v1024, %v1075
      %1077 = vmatmul.f32.gmra.mxu0 %v1044
      %v1078 = vpop.f32.mrf.mxu0
      %v1079 = vadd.f32 %v1024, %v1078
      %1080 = vdwg.mxu0
      %1081 = vmatpush.msra.mxu0 0.0
      %1082 = vmatpush.msra.mxu0 0.0
      %1083 = vmatpush.msra.mxu0 0.0
      %1084 = vmatpush.msra.mxu0 0.0
      %1085 = vmatpush.msra.mxu0 0.0
      %1086 = vmatpush.msra.mxu0 0.0
      %1087 = vmatpush.msra.mxu0 0.0
      %1088 = vmatpush.msra.mxu0 0.0
      %1089 = vmatpush.msra.mxu0 %v1022
      %1090 = vmatpush.msra.mxu0 %v1020
      %1091 = vmatpush.msra.mxu0 %v1018
      %1092 = vmatpush.msra.mxu0 %v1016
      %1093 = vmatpush.msra.mxu0 %v1014
      %1094 = vmatpush.msra.mxu0 %v1012
      %1095 = vmatpush.msra.mxu0 %v1010
      %1096 = vmatpush.msra.mxu0 %v1008
      %1097 = vmatmul.f32.gmra.mxu0 %v1029
      %v1098 = vpop.f32.mrf.mxu0
      %v1099 = vadd.f32 %v1025, %v1098
      %1100 = vmatmul.f32.gmra.mxu0 %v1032
      %v1101 = vpop.f32.mrf.mxu0
      %v1102 = vadd.f32 %v1025, %v1101
      %1103 = vmatmul.f32.gmra.mxu0 %v1035
      %v1104 = vpop.f32.mrf.mxu0
      %v1105 = vadd.f32 %v1025, %v1104
      %1106 = vmatmul.f32.gmra.mxu0 %v1038
      %v1107 = vpop.f32.mrf.mxu0
      %v1108 = vadd.f32 %v1025, %v1107
      %1109 = vmatmul.f32.gmra.mxu0 %v1041
      %v1110 = vpop.f32.mrf.mxu0
      %v1111 = vadd.f32 %v1025, %v1110
      %1112 = vmatmul.f32.gmra.mxu0 %v1044
      %v1113 = vpop.f32.mrf.mxu0
      %v1114 = vadd.f32 %v1025, %v1113
      %1115 = vdwg.mxu0
      %1122 = vrot.lane.b32.xlu0 %v1064, 64
      %v1123 = vpop.permute.xlu0 %1122
      %1124 = vrot.lane.b32.xlu0 %v1067, 64
      %v1125 = vpop.permute.xlu0 %1124
      %1126 = vrot.lane.b32.xlu0 %v1070, 64
      %v1127 = vpop.permute.xlu0 %1126
      %1128 = vrot.lane.b32.xlu0 %v1073, 64
      %v1129 = vpop.permute.xlu0 %1128
      %1130 = vrot.lane.b32.xlu0 %v1076, 64
      %v1131 = vpop.permute.xlu0 %1130
      %1132 = vrot.lane.b32.xlu0 %v1079, 64
      %v1133 = vpop.permute.xlu0 %1132
      %vm1134 = vcmask 261120
      %v1135 = vsel %vm1134, %v1064, 0
      %v1137 = vsel %vm1134, %v1067, 0
      %v1139 = vsel %vm1134, %v1070, 0
      %v1141 = vsel %vm1134, %v1073, 0
      %v1143 = vsel %vm1134, %v1076, 0
      %v1145 = vsel %vm1134, %v1079, 0
      %v1147 = vsel %vm1134, %v1123, 0
      %v1149 = vsel %vm1134, %v1125, 0
      %v1151 = vsel %vm1134, %v1127, 0
      %v1153 = vsel %vm1134, %v1129, 0
      %v1155 = vsel %vm1134, %v1131, 0
      %v1157 = vsel %vm1134, %v1133, 0
      %1159 = vmatpush.xpose.msra.mxu0 0.0
      %1160 = vmatpush.xpose.msra.mxu0 0.0
      %1161 = vmatpush.xpose.msra.mxu0 0.0
      %1162 = vmatpush.xpose.msra.mxu0 0.0
      %1163 = vmatpush.xpose.msra.mxu0 0.0
      %1164 = vmatpush.xpose.msra.mxu0 0.0
      %1165 = vmatpush.xpose.msra.mxu0 0.0
      %1166 = vmatpush.xpose.msra.mxu0 0.0
      %1167 = vmatpush.xpose.msra.mxu0 0.0
      %1168 = vmatpush.xpose.msra.mxu0 0.0
      %1169 = vmatpush.xpose.msra.mxu0 %v1157
      %1170 = vmatpush.xpose.msra.mxu0 %v1155
      %1171 = vmatpush.xpose.msra.mxu0 %v1153
      %1172 = vmatpush.xpose.msra.mxu0 %v1151
      %1173 = vmatpush.xpose.msra.mxu0 %v1149
      %1174 = vmatpush.xpose.msra.mxu0 %v1147
      %1175 = vmatmul.f32.gmra.mxu0 %v1135
      %v1176 = vpop.f32.mrf.mxu0
      %v1177 = vadd.f32 %v847, %v1176
      %1178 = vmatmul.f32.gmra.mxu0 %v1137
      %v1179 = vpop.f32.mrf.mxu0
      %v1180 = vadd.f32 %v848, %v1179
      %1181 = vmatmul.f32.gmra.mxu0 %v1139
      %v1182 = vpop.f32.mrf.mxu0
      %v1183 = vadd.f32 %v849, %v1182
      %1184 = vmatmul.f32.gmra.mxu0 %v1141
      %v1185 = vpop.f32.mrf.mxu0
      %v1186 = vadd.f32 %v850, %v1185
      %1187 = vmatmul.f32.gmra.mxu0 %v1143
      %v1188 = vpop.f32.mrf.mxu0
      %v1189 = vadd.f32 %v851, %v1188
      %1190 = vmatmul.f32.gmra.mxu0 %v1145
      %v1191 = vpop.f32.mrf.mxu0
      %v1192 = vadd.f32 %v852, %v1191
      %1193 = vdwg.mxu0
      %vm1194 = vcmask 392192
      %v1195 = vsel %vm1194, %v1177, -inf
      %1196 = vmax.xlane.f32.xlu0 %v1195
      %v1197 = vpop.xlane.xlu0 %1196
      %v1198 = vsel %vm1194, %v1180, -inf
      %1199 = vmax.xlane.f32.xlu0 %v1198
      %v1200 = vpop.xlane.xlu0 %1199
      %v1201 = vsel %vm1194, %v1183, -inf
      %1202 = vmax.xlane.f32.xlu0 %v1201
      %v1203 = vpop.xlane.xlu0 %1202
      %v1204 = vsel %vm1194, %v1186, -inf
      %1205 = vmax.xlane.f32.xlu0 %v1204
      %v1206 = vpop.xlane.xlu0 %1205
      %v1207 = vsel %vm1194, %v1189, -inf
      %1208 = vmax.xlane.f32.xlu0 %v1207
      %v1209 = vpop.xlane.xlu0 %1208
      %v1210 = vsel %vm1194, %v1192, -inf
      %1211 = vmax.xlane.f32.xlu0 %v1210
      %v1212 = vpop.xlane.xlu0 %1211
      %v1213 = vsub.f32 %v1177, %v1197
      %v1214 = vsub.f32 %v1180, %v1200
      %v1215 = vsub.f32 %v1183, %v1203
      %v1216 = vsub.f32 %v1186, %v1206
      %v1217 = vsub.f32 %v1189, %v1209
      %v1218 = vsub.f32 %v1192, %v1212
      %v1219 = vmul.f32 %v1213, 1.442695
      %v1220 = vpow.pop %v1219
      %v1221 = vmul.f32 %v1214, 1.442695
      %v1222 = vpow.pop %v1221
      %v1223 = vmul.f32 %v1215, 1.442695
      %v1224 = vpow.pop %v1223
      %v1225 = vmul.f32 %v1216, 1.442695
      %v1226 = vpow.pop %v1225
      %v1227 = vmul.f32 %v1217, 1.442695
      %v1228 = vpow.pop %v1227
      %v1229 = vmul.f32 %v1218, 1.442695
      %v1230 = vpow.pop %v1229
      %v1231 = vsel %vm1194, %v1220, 0.0
      %1232 = vadd.xlane.f32.xlu0 %v1231
      %v1233 = vpop.xlane.xlu0 %1232
      %v1234 = vsel %vm1194, %v1222, 0.0
      %1235 = vadd.xlane.f32.xlu0 %v1234
      %v1236 = vpop.xlane.xlu0 %1235
      %v1237 = vsel %vm1194, %v1224, 0.0
      %1238 = vadd.xlane.f32.xlu0 %v1237
      %v1239 = vpop.xlane.xlu0 %1238
      %v1240 = vsel %vm1194, %v1226, 0.0
      %1241 = vadd.xlane.f32.xlu0 %v1240
      %v1242 = vpop.xlane.xlu0 %1241
      %v1243 = vsel %vm1194, %v1228, 0.0
      %1244 = vadd.xlane.f32.xlu0 %v1243
      %v1245 = vpop.xlane.xlu0 %1244
      %v1246 = vsel %vm1194, %v1230, 0.0
      %1247 = vadd.xlane.f32.xlu0 %v1246
      %v1248 = vpop.xlane.xlu0 %1247
      %v1249 = vrcp.pop %v1233
      %v1250 = vrcp.pop %v1236
      %v1251 = vrcp.pop %v1239
      %v1252 = vrcp.pop %v1242
      %v1253 = vrcp.pop %v1245
      %v1254 = vrcp.pop %v1248
      %v1255 = vmul.f32 %v1220, %v1249
      %v1256 = vmul.f32 %v1222, %v1250
      %v1257 = vmul.f32 %v1224, %v1251
      %v1258 = vmul.f32 %v1226, %v1252
      %v1259 = vmul.f32 %v1228, %v1253
      %v1260 = vmul.f32 %v1230, %v1254
      %v1261 = vmul.f32 %v1099, %v592
      %v1262 = vmul.f32 %v1102, %v592
      %v1263 = vmul.f32 %v1105, %v592
      %v1264 = vmul.f32 %v1108, %v592
      %v1265 = vmul.f32 %v1111, %v592
      %v1266 = vmul.f32 %v1114, %v592
      %1267 = vrot.lane.b32.xlu0 %v1064, 96
      %v1268 = vpop.permute.xlu0 %1267
      %1269 = vrot.lane.b32.xlu0 %v1067, 96
      %v1270 = vpop.permute.xlu0 %1269
      %1271 = vrot.lane.b32.xlu0 %v1070, 96
      %v1272 = vpop.permute.xlu0 %1271
      %1273 = vrot.lane.b32.xlu0 %v1073, 96
      %v1274 = vpop.permute.xlu0 %1273
      %1275 = vrot.lane.b32.xlu0 %v1076, 96
      %v1276 = vpop.permute.xlu0 %1275
      %1277 = vrot.lane.b32.xlu0 %v1079, 96
      %v1278 = vpop.permute.xlu0 %1277
      %1279 = vrot.lane.b32.xlu0 %v1064, 32
      %v1280 = vpop.permute.xlu0 %1279
      %1281 = vrot.lane.b32.xlu0 %v1067, 32
      %v1282 = vpop.permute.xlu0 %1281
      %1283 = vrot.lane.b32.xlu0 %v1070, 32
      %v1284 = vpop.permute.xlu0 %1283
      %1285 = vrot.lane.b32.xlu0 %v1073, 32
      %v1286 = vpop.permute.xlu0 %1285
      %1287 = vrot.lane.b32.xlu0 %v1076, 32
      %v1288 = vpop.permute.xlu0 %1287
      %1289 = vrot.lane.b32.xlu0 %v1079, 32
      %v1290 = vpop.permute.xlu0 %1289
      %v1291 = vsel %vm1134, %v1268, 0
      %v1293 = vsel %vm1134, %v1270, 0
      %v1295 = vsel %vm1134, %v1272, 0
      %v1297 = vsel %vm1134, %v1274, 0
      %v1299 = vsel %vm1134, %v1276, 0
      %v1301 = vsel %vm1134, %v1278, 0
      %v1303 = vsel %vm1134, %v1280, 0
      %v1305 = vsel %vm1134, %v1282, 0
      %v1307 = vsel %vm1134, %v1284, 0
      %v1309 = vsel %vm1134, %v1286, 0
      %v1311 = vsel %vm1134, %v1288, 0
      %v1313 = vsel %vm1134, %v1290, 0
      %1315 = vmatpush.xpose.msra.mxu0 0.0
      %1316 = vmatpush.xpose.msra.mxu0 0.0
      %1317 = vmatpush.xpose.msra.mxu0 0.0
      %1318 = vmatpush.xpose.msra.mxu0 0.0
      %1319 = vmatpush.xpose.msra.mxu0 0.0
      %1320 = vmatpush.xpose.msra.mxu0 0.0
      %1321 = vmatpush.xpose.msra.mxu0 0.0
      %1322 = vmatpush.xpose.msra.mxu0 0.0
      %1323 = vmatpush.xpose.msra.mxu0 0.0
      %1324 = vmatpush.xpose.msra.mxu0 0.0
      %1325 = vmatpush.xpose.msra.mxu0 %v1313
      %1326 = vmatpush.xpose.msra.mxu0 %v1311
      %1327 = vmatpush.xpose.msra.mxu0 %v1309
      %1328 = vmatpush.xpose.msra.mxu0 %v1307
      %1329 = vmatpush.xpose.msra.mxu0 %v1305
      %1330 = vmatpush.xpose.msra.mxu0 %v1303
      %1331 = vmatmul.f32.gmra.mxu0 %v1291
      %v1332 = vpop.f32.mrf.mxu0
      %v1333 = vadd.f32 %v847, %v1332
      %1334 = vmatmul.f32.gmra.mxu0 %v1293
      %v1335 = vpop.f32.mrf.mxu0
      %v1336 = vadd.f32 %v848, %v1335
      %1337 = vmatmul.f32.gmra.mxu0 %v1295
      %v1338 = vpop.f32.mrf.mxu0
      %v1339 = vadd.f32 %v849, %v1338
      %1340 = vmatmul.f32.gmra.mxu0 %v1297
      %v1341 = vpop.f32.mrf.mxu0
      %v1342 = vadd.f32 %v850, %v1341
      %1343 = vmatmul.f32.gmra.mxu0 %v1299
      %v1344 = vpop.f32.mrf.mxu0
      %v1345 = vadd.f32 %v851, %v1344
      %1346 = vmatmul.f32.gmra.mxu0 %v1301
      %v1347 = vpop.f32.mrf.mxu0
      %v1348 = vadd.f32 %v852, %v1347
      %1349 = vdwg.mxu0
      %v1350 = vsel %vm1194, %v1333, -inf
      %1351 = vmax.xlane.f32.xlu0 %v1350
      %v1352 = vpop.xlane.xlu0 %1351
      %v1353 = vsel %vm1194, %v1336, -inf
      %1354 = vmax.xlane.f32.xlu0 %v1353
      %v1355 = vpop.xlane.xlu0 %1354
      %v1356 = vsel %vm1194, %v1339, -inf
      %1357 = vmax.xlane.f32.xlu0 %v1356
      %v1358 = vpop.xlane.xlu0 %1357
      %v1359 = vsel %vm1194, %v1342, -inf
      %1360 = vmax.xlane.f32.xlu0 %v1359
      %v1361 = vpop.xlane.xlu0 %1360
      %v1362 = vsel %vm1194, %v1345, -inf
      %1363 = vmax.xlane.f32.xlu0 %v1362
      %v1364 = vpop.xlane.xlu0 %1363
      %v1365 = vsel %vm1194, %v1348, -inf
      %1366 = vmax.xlane.f32.xlu0 %v1365
      %v1367 = vpop.xlane.xlu0 %1366
      %v1368 = vsub.f32 %v1333, %v1352
      %v1369 = vsub.f32 %v1336, %v1355
      %v1370 = vsub.f32 %v1339, %v1358
      %v1371 = vsub.f32 %v1342, %v1361
      %v1372 = vsub.f32 %v1345, %v1364
      %v1373 = vsub.f32 %v1348, %v1367
      %v1374 = vmul.f32 %v1368, 1.442695
      %v1375 = vpow.pop %v1374
      %v1376 = vmul.f32 %v1369, 1.442695
      %v1377 = vpow.pop %v1376
      %v1378 = vmul.f32 %v1370, 1.442695
      %v1379 = vpow.pop %v1378
      %v1380 = vmul.f32 %v1371, 1.442695
      %v1381 = vpow.pop %v1380
      %v1382 = vmul.f32 %v1372, 1.442695
      %v1383 = vpow.pop %v1382
      %v1384 = vmul.f32 %v1373, 1.442695
      %v1385 = vpow.pop %v1384
      %v1386 = vsel %vm1194, %v1375, 0.0
      %1387 = vadd.xlane.f32.xlu0 %v1386
      %v1388 = vpop.xlane.xlu0 %1387
      %v1389 = vsel %vm1194, %v1377, 0.0
      %1390 = vadd.xlane.f32.xlu0 %v1389
      %v1391 = vpop.xlane.xlu0 %1390
      %v1392 = vsel %vm1194, %v1379, 0.0
      %1393 = vadd.xlane.f32.xlu0 %v1392
      %v1394 = vpop.xlane.xlu0 %1393
      %v1395 = vsel %vm1194, %v1381, 0.0
      %1396 = vadd.xlane.f32.xlu0 %v1395
      %v1397 = vpop.xlane.xlu0 %1396
      %v1398 = vsel %vm1194, %v1383, 0.0
      %1399 = vadd.xlane.f32.xlu0 %v1398
      %v1400 = vpop.xlane.xlu0 %1399
      %v1401 = vsel %vm1194, %v1385, 0.0
      %1402 = vadd.xlane.f32.xlu0 %v1401
      %v1403 = vpop.xlane.xlu0 %1402
      %v1404 = vrcp.pop %v1388
      %v1405 = vrcp.pop %v1391
      %v1406 = vrcp.pop %v1394
      %v1407 = vrcp.pop %v1397
      %v1408 = vrcp.pop %v1400
      %v1409 = vrcp.pop %v1403
      %v1410 = vmul.f32 %v1375, %v1404
      %v1411 = vmul.f32 %v1377, %v1405
      %v1412 = vmul.f32 %v1379, %v1406
      %v1413 = vmul.f32 %v1381, %v1407
      %v1414 = vmul.f32 %v1383, %v1408
      %v1415 = vmul.f32 %v1385, %v1409
      %v1416 = vmul.f32 %v1099, %v597
      %v1417 = vmul.f32 %v1102, %v597
      %v1418 = vmul.f32 %v1105, %v597
      %v1419 = vmul.f32 %v1108, %v597
      %v1420 = vmul.f32 %v1111, %v597
      %v1421 = vmul.f32 %v1114, %v597
      %v1423 = vsel %vm1194, %v1410, 0
      %v1426 = vsel %vm1194, %v1411, 0
      %v1429 = vsel %vm1194, %v1412, 0
      %v1432 = vsel %vm1194, %v1413, 0
      %v1435 = vsel %vm1194, %v1414, 0
      %v1438 = vsel %vm1194, %v1415, 0
      %1440 = vmatpush.msra.mxu0 0.0
      %1441 = vmatpush.msra.mxu0 0.0
      %1442 = vmatpush.msra.mxu0 0.0
      %1443 = vmatpush.msra.mxu0 0.0
      %1444 = vmatpush.msra.mxu0 0.0
      %1445 = vmatpush.msra.mxu0 0.0
      %1446 = vmatpush.msra.mxu0 0.0
      %1447 = vmatpush.msra.mxu0 0.0
      %1448 = vmatpush.msra.mxu0 0.0
      %1449 = vmatpush.msra.mxu0 0.0
      %1450 = vmatpush.msra.mxu0 %v1421
      %1451 = vmatpush.msra.mxu0 %v1420
      %1452 = vmatpush.msra.mxu0 %v1419
      %1453 = vmatpush.msra.mxu0 %v1418
      %1454 = vmatpush.msra.mxu0 %v1417
      %1455 = vmatpush.msra.mxu0 %v1416
      %1456 = vmatmul.f32.gmra.mxu0 %v1423
      %v1457 = vpop.f32.mrf.mxu0
      %v1458 = vadd.f32 0.0, %v1457
      %1459 = vmatmul.f32.gmra.mxu0 %v1426
      %v1460 = vpop.f32.mrf.mxu0
      %v1461 = vadd.f32 0.0, %v1460
      %1462 = vmatmul.f32.gmra.mxu0 %v1429
      %v1463 = vpop.f32.mrf.mxu0
      %v1464 = vadd.f32 0.0, %v1463
      %1465 = vmatmul.f32.gmra.mxu0 %v1432
      %v1466 = vpop.f32.mrf.mxu0
      %v1467 = vadd.f32 0.0, %v1466
      %1468 = vmatmul.f32.gmra.mxu0 %v1435
      %v1469 = vpop.f32.mrf.mxu0
      %v1470 = vadd.f32 0.0, %v1469
      %1471 = vmatmul.f32.gmra.mxu0 %v1438
      %v1472 = vpop.f32.mrf.mxu0
      %v1473 = vadd.f32 0.0, %v1472
      %1474 = vdwg.mxu0
      %v1476 = vsel %vm1194, %v1255, 0
      %v1479 = vsel %vm1194, %v1256, 0
      %v1482 = vsel %vm1194, %v1257, 0
      %v1485 = vsel %vm1194, %v1258, 0
      %v1488 = vsel %vm1194, %v1259, 0
      %v1491 = vsel %vm1194, %v1260, 0
      %1493 = vmatpush.msra.mxu0 0.0
      %1494 = vmatpush.msra.mxu0 0.0
      %1495 = vmatpush.msra.mxu0 0.0
      %1496 = vmatpush.msra.mxu0 0.0
      %1497 = vmatpush.msra.mxu0 0.0
      %1498 = vmatpush.msra.mxu0 0.0
      %1499 = vmatpush.msra.mxu0 0.0
      %1500 = vmatpush.msra.mxu0 0.0
      %1501 = vmatpush.msra.mxu0 0.0
      %1502 = vmatpush.msra.mxu0 0.0
      %1503 = vmatpush.msra.mxu0 %v1266
      %1504 = vmatpush.msra.mxu0 %v1265
      %1505 = vmatpush.msra.mxu0 %v1264
      %1506 = vmatpush.msra.mxu0 %v1263
      %1507 = vmatpush.msra.mxu0 %v1262
      %1508 = vmatpush.msra.mxu0 %v1261
      %1509 = vmatmul.f32.gmra.mxu0 %v1476
      %v1510 = vpop.f32.mrf.mxu0
      %v1511 = vadd.f32 %v1458, %v1510
      %1512 = vmatmul.f32.gmra.mxu0 %v1479
      %v1513 = vpop.f32.mrf.mxu0
      %v1514 = vadd.f32 %v1461, %v1513
      %1515 = vmatmul.f32.gmra.mxu0 %v1482
      %v1516 = vpop.f32.mrf.mxu0
      %v1517 = vadd.f32 %v1464, %v1516
      %1518 = vmatmul.f32.gmra.mxu0 %v1485
      %v1519 = vpop.f32.mrf.mxu0
      %v1520 = vadd.f32 %v1467, %v1519
      %1521 = vmatmul.f32.gmra.mxu0 %v1488
      %v1522 = vpop.f32.mrf.mxu0
      %v1523 = vadd.f32 %v1470, %v1522
      %1524 = vmatmul.f32.gmra.mxu0 %v1491
      %v1525 = vpop.f32.mrf.mxu0
      %v1526 = vadd.f32 %v1473, %v1525
      %1527 = vdwg.mxu0
      %v1528 = vld [vmem:[%s562] sm:$0xff]
      %v1529 = vld [vmem:[%s562 + $0x8] sm:$0xff]
      %v1530 = vld [vmem:[%s562 + $0x10] sm:$0xff]
      %v1531 = vld [vmem:[%s562 + $0x18] sm:$0xff]
      %v1532 = vld [vmem:[%s562 + $0x20] sm:$0xff]
      %v1533 = vld [vmem:[%s562 + $0x28] sm:$0xff]
      %v1534 = vld [vmem:[%s562 + $0x30] sm:$0xff]
      %v1535 = vld [vmem:[%s562 + $0x38] sm:$0xff]
      %v1537 = vsel %vm621, %v1511, 0
      %v1540 = vsel %vm621, %v1514, 0
      %v1543 = vsel %vm621, %v1517, 0
      %v1546 = vsel %vm621, %v1520, 0
      %v1549 = vsel %vm621, %v1523, 0
      %v1552 = vsel %vm621, %v1526, 0
      %1554 = vmatpush.msra.mxu0 0.0
      %1555 = vmatpush.msra.mxu0 0.0
      %1556 = vmatpush.msra.mxu0 0.0
      %1557 = vmatpush.msra.mxu0 0.0
      %1558 = vmatpush.msra.mxu0 0.0
      %1559 = vmatpush.msra.mxu0 0.0
      %1560 = vmatpush.msra.mxu0 0.0
      %1561 = vmatpush.msra.mxu0 0.0
      %1562 = vmatpush.msra.mxu0 %v1535
      %1563 = vmatpush.msra.mxu0 %v1534
      %1564 = vmatpush.msra.mxu0 %v1533
      %1565 = vmatpush.msra.mxu0 %v1532
      %1566 = vmatpush.msra.mxu0 %v1531
      %1567 = vmatpush.msra.mxu0 %v1530
      %1568 = vmatpush.msra.mxu0 %v1529
      %1569 = vmatpush.msra.mxu0 %v1528
      %1570 = vmatmul.f32.gmra.mxu0 %v1537
      %v1571 = vpop.f32.mrf.mxu0
      %v1572 = vadd.f32 0.0, %v1571
      %1573 = vmatmul.f32.gmra.mxu0 %v1540
      %v1574 = vpop.f32.mrf.mxu0
      %v1575 = vadd.f32 0.0, %v1574
      %1576 = vmatmul.f32.gmra.mxu0 %v1543
      %v1577 = vpop.f32.mrf.mxu0
      %v1578 = vadd.f32 0.0, %v1577
      %1579 = vmatmul.f32.gmra.mxu0 %v1546
      %v1580 = vpop.f32.mrf.mxu0
      %v1581 = vadd.f32 0.0, %v1580
      %1582 = vmatmul.f32.gmra.mxu0 %v1549
      %v1583 = vpop.f32.mrf.mxu0
      %v1584 = vadd.f32 0.0, %v1583
      %1585 = vmatmul.f32.gmra.mxu0 %v1552
      %v1586 = vpop.f32.mrf.mxu0
      %v1587 = vadd.f32 0.0, %v1586
      %1588 = vdwg.mxu0
      %v1589 = vadd.f32 %v841, %v1572
      %v1590 = vadd.f32 %v842, %v1575
      %v1591 = vadd.f32 %v843, %v1578
      %v1592 = vadd.f32 %v844, %v1581
      %v1593 = vadd.f32 %v845, %v1584
      %v1594 = vadd.f32 %v846, %v1587
      %v1595 = vadd.f32 %v1589, %v857
      %v1596 = vadd.f32 %v1590, %v857
      %v1597 = vadd.f32 %v1591, %v857
      %v1598 = vadd.f32 %v1592, %v857
      %v1599 = vadd.f32 %v1593, %v857
      %v1600 = vadd.f32 %v1594, %v857
      %v1601 = vsel %vm621, %v1595, 0.0
      %1602 = vadd.xlane.f32.xlu0 %v1601
      %v1603 = vpop.xlane.xlu0 %1602
      %v1604 = vsel %vm621, %v1596, 0.0
      %1605 = vadd.xlane.f32.xlu0 %v1604
      %v1606 = vpop.xlane.xlu0 %1605
      %v1607 = vsel %vm621, %v1597, 0.0
      %1608 = vadd.xlane.f32.xlu0 %v1607
      %v1609 = vpop.xlane.xlu0 %1608
      %v1610 = vsel %vm621, %v1598, 0.0
      %1611 = vadd.xlane.f32.xlu0 %v1610
      %v1612 = vpop.xlane.xlu0 %1611
      %v1613 = vsel %vm621, %v1599, 0.0
      %1614 = vadd.xlane.f32.xlu0 %v1613
      %v1615 = vpop.xlane.xlu0 %1614
      %v1616 = vsel %vm621, %v1600, 0.0
      %1617 = vadd.xlane.f32.xlu0 %v1616
      %v1618 = vpop.xlane.xlu0 %1617
      %v1619 = vmul.f32 %v1603, %v699
      %v1620 = vmul.f32 %v1606, %v699
      %v1621 = vmul.f32 %v1609, %v699
      %v1622 = vmul.f32 %v1612, %v699
      %v1623 = vmul.f32 %v1615, %v699
      %v1624 = vmul.f32 %v1618, %v699
      %v1625 = vsub.f32 %v1595, %v1619
      %v1626 = vsub.f32 %v1596, %v1620
      %v1627 = vsub.f32 %v1597, %v1621
      %v1628 = vsub.f32 %v1598, %v1622
      %v1629 = vsub.f32 %v1599, %v1623
      %v1630 = vsub.f32 %v1600, %v1624
      %v1631 = vmul.f32 %v1625, %v1625
      %v1632 = vmul.f32 %v1626, %v1626
      %v1633 = vmul.f32 %v1627, %v1627
      %v1634 = vmul.f32 %v1628, %v1628
      %v1635 = vmul.f32 %v1629, %v1629
      %v1636 = vmul.f32 %v1630, %v1630
      %v1637 = vsel %vm621, %v1631, 0.0
      %1638 = vadd.xlane.f32.xlu0 %v1637
      %v1639 = vpop.xlane.xlu0 %1638
      %v1640 = vsel %vm621, %v1632, 0.0
      %1641 = vadd.xlane.f32.xlu0 %v1640
      %v1642 = vpop.xlane.xlu0 %1641
      %v1643 = vsel %vm621, %v1633, 0.0
      %1644 = vadd.xlane.f32.xlu0 %v1643
      %v1645 = vpop.xlane.xlu0 %1644
      %v1646 = vsel %vm621, %v1634, 0.0
      %1647 = vadd.xlane.f32.xlu0 %v1646
      %v1648 = vpop.xlane.xlu0 %1647
      %v1649 = vsel %vm621, %v1635, 0.0
      %1650 = vadd.xlane.f32.xlu0 %v1649
      %v1651 = vpop.xlane.xlu0 %1650
      %v1652 = vsel %vm621, %v1636, 0.0
      %1653 = vadd.xlane.f32.xlu0 %v1652
      %v1654 = vpop.xlane.xlu0 %1653
      %v1655 = vmul.f32 %v1639, %v699
      %v1656 = vmul.f32 %v1642, %v699
      %v1657 = vmul.f32 %v1645, %v699
      %v1658 = vmul.f32 %v1648, %v699
      %v1659 = vmul.f32 %v1651, %v699
      %v1660 = vmul.f32 %v1654, %v699
      %v1661 = vadd.f32 %v1655, 1e-05
      %v1662 = vadd.f32 %v1656, 1e-05
      %v1663 = vadd.f32 %v1657, 1e-05
      %v1664 = vadd.f32 %v1658, 1e-05
      %v1665 = vadd.f32 %v1659, 1e-05
      %v1666 = vadd.f32 %v1660, 1e-05
      %v1667 = vrsqrt.pop %v1661
      %v1668 = vmul.f32 %v1667, %v1661
      %v1669 = vmul.f32 %v1668, %v1667
      %v1670 = vmul.f32 0.5, %v1669
      %v1671 = vsub.f32 1.5, %v1670
      %v1672 = vmul.f32 %v1667, %v1671
      %vm1673 = vweird.f32 %v1661
      %vm1674 = vweird.f32 %v1667
      %vm1675 = vmor %vm1673, %vm1674
      %v1676 = vsel %vm1675, %v1667, %v1672
      %v1677 = vrsqrt.pop %v1662
      %v1678 = vmul.f32 %v1677, %v1662
      %v1679 = vmul.f32 %v1678, %v1677
      %v1680 = vmul.f32 0.5, %v1679
      %v1681 = vsub.f32 1.5, %v1680
      %v1682 = vmul.f32 %v1677, %v1681
      %vm1683 = vweird.f32 %v1662
      %vm1684 = vweird.f32 %v1677
      %vm1685 = vmor %vm1683, %vm1684
      %v1686 = vsel %vm1685, %v1677, %v1682
      %v1687 = vrsqrt.pop %v1663
      %v1688 = vmul.f32 %v1687, %v1663
      %v1689 = vmul.f32 %v1688, %v1687
      %v1690 = vmul.f32 0.5, %v1689
      %v1691 = vsub.f32 1.5, %v1690
      %v1692 = vmul.f32 %v1687, %v1691
      %vm1693 = vweird.f32 %v1663
      %vm1694 = vweird.f32 %v1687
      %vm1695 = vmor %vm1693, %vm1694
      %v1696 = vsel %vm1695, %v1687, %v1692
      %v1697 = vrsqrt.pop %v1664
      %v1698 = vmul.f32 %v1697, %v1664
      %v1699 = vmul.f32 %v1698, %v1697
      %v1700 = vmul.f32 0.5, %v1699
      %v1701 = vsub.f32 1.5, %v1700
      %v1702 = vmul.f32 %v1697, %v1701
      %vm1703 = vweird.f32 %v1664
      %vm1704 = vweird.f32 %v1697
      %vm1705 = vmor %vm1703, %vm1704
      %v1706 = vsel %vm1705, %v1697, %v1702
      %v1707 = vrsqrt.pop %v1665
      %v1708 = vmul.f32 %v1707, %v1665
      %v1709 = vmul.f32 %v1708, %v1707
      %v1710 = vmul.f32 0.5, %v1709
      %v1711 = vsub.f32 1.5, %v1710
      %v1712 = vmul.f32 %v1707, %v1711
      %vm1713 = vweird.f32 %v1665
      %vm1714 = vweird.f32 %v1707
      %vm1715 = vmor %vm1713, %vm1714
      %v1716 = vsel %vm1715, %v1707, %v1712
      %v1717 = vrsqrt.pop %v1666
      %v1718 = vmul.f32 %v1717, %v1666
      %v1719 = vmul.f32 %v1718, %v1717
      %v1720 = vmul.f32 0.5, %v1719
      %v1721 = vsub.f32 1.5, %v1720
      %v1722 = vmul.f32 %v1717, %v1721
      %vm1723 = vweird.f32 %v1666
      %vm1724 = vweird.f32 %v1717
      %vm1725 = vmor %vm1723, %vm1724
      %v1726 = vsel %vm1725, %v1717, %v1722
      %v1727 = vmul.f32 %v1625, %v1676
      %v1728 = vmul.f32 %v1626, %v1686
      %v1729 = vmul.f32 %v1627, %v1696
      %v1730 = vmul.f32 %v1628, %v1706
      %v1731 = vmul.f32 %v1629, %v1716
      %v1732 = vmul.f32 %v1630, %v1726
      %v1733 = vmul.f32 %v1727, %v858
      %v1734 = vmul.f32 %v1728, %v858
      %v1735 = vmul.f32 %v1729, %v858
      %v1736 = vmul.f32 %v1730, %v858
      %v1737 = vmul.f32 %v1731, %v858
      %v1738 = vmul.f32 %v1732, %v858
      %v1739 = vadd.f32 %v1733, %v859
      %v1740 = vadd.f32 %v1734, %v859
      %v1741 = vadd.f32 %v1735, %v859
      %v1742 = vadd.f32 %v1736, %v859
      %v1743 = vadd.f32 %v1737, %v859
      %v1744 = vadd.f32 %v1738, %v859
      %v1745 = vld [vmem:[%s567] sm:$0xff]
      %v1746 = vld [vmem:[%s567 + $0x8] sm:$0xff]
      %v1747 = vld [vmem:[%s567 + $0x10] sm:$0xff]
      %v1748 = vld [vmem:[%s567 + $0x18] sm:$0xff]
      %v1749 = vld [vmem:[%s567 + $0x20] sm:$0xff]
      %v1750 = vld [vmem:[%s567 + $0x28] sm:$0xff]
      %v1751 = vld [vmem:[%s567 + $0x30] sm:$0xff]
      %v1752 = vld [vmem:[%s567 + $0x38] sm:$0xff]
      %v1753 = vld [vmem:[%s567 + $0x40] sm:$0xff]
      %v1754 = vld [vmem:[%s567 + $0x48] sm:$0xff]
      %v1755 = vld [vmem:[%s567 + $0x50] sm:$0xff]
      %v1756 = vld [vmem:[%s567 + $0x58] sm:$0xff]
      %v1757 = vld [vmem:[%s567 + $0x60] sm:$0xff]
      %v1758 = vld [vmem:[%s567 + $0x68] sm:$0xff]
      %v1759 = vld [vmem:[%s567 + $0x70] sm:$0xff]
      %v1760 = vld [vmem:[%s567 + $0x78] sm:$0xff]
      %v1762 = vperm.slane %v861, 0
      %v1763 = vperm.slane %v861, 1
      %v1767 = vsel %vm621, %v1739, 0
      %v1770 = vsel %vm621, %v1740, 0
      %v1773 = vsel %vm621, %v1741, 0
      %v1776 = vsel %vm621, %v1742, 0
      %v1779 = vsel %vm621, %v1743, 0
      %v1782 = vsel %vm621, %v1744, 0
      %1784 = vmatpush.msra.mxu0 0.0
      %1785 = vmatpush.msra.mxu0 0.0
      %1786 = vmatpush.msra.mxu0 0.0
      %1787 = vmatpush.msra.mxu0 0.0
      %1788 = vmatpush.msra.mxu0 0.0
      %1789 = vmatpush.msra.mxu0 0.0
      %1790 = vmatpush.msra.mxu0 0.0
      %1791 = vmatpush.msra.mxu0 0.0
      %1792 = vmatpush.msra.mxu0 %v1759
      %1793 = vmatpush.msra.mxu0 %v1757
      %1794 = vmatpush.msra.mxu0 %v1755
      %1795 = vmatpush.msra.mxu0 %v1753
      %1796 = vmatpush.msra.mxu0 %v1751
      %1797 = vmatpush.msra.mxu0 %v1749
      %1798 = vmatpush.msra.mxu0 %v1747
      %1799 = vmatpush.msra.mxu0 %v1745
      %1800 = vmatmul.f32.gmra.mxu0 %v1767
      %v1801 = vpop.f32.mrf.mxu0
      %v1802 = vadd.f32 %v1762, %v1801
      %1803 = vmatmul.f32.gmra.mxu0 %v1770
      %v1804 = vpop.f32.mrf.mxu0
      %v1805 = vadd.f32 %v1762, %v1804
      %1806 = vmatmul.f32.gmra.mxu0 %v1773
      %v1807 = vpop.f32.mrf.mxu0
      %v1808 = vadd.f32 %v1762, %v1807
      %1809 = vmatmul.f32.gmra.mxu0 %v1776
      %v1810 = vpop.f32.mrf.mxu0
      %v1811 = vadd.f32 %v1762, %v1810
      %1812 = vmatmul.f32.gmra.mxu0 %v1779
      %v1813 = vpop.f32.mrf.mxu0
      %v1814 = vadd.f32 %v1762, %v1813
      %1815 = vmatmul.f32.gmra.mxu0 %v1782
      %v1816 = vpop.f32.mrf.mxu0
      %v1817 = vadd.f32 %v1762, %v1816
      %1818 = vdwg.mxu0
      %1819 = vmatpush.msra.mxu0 0.0
      %1820 = vmatpush.msra.mxu0 0.0
      %1821 = vmatpush.msra.mxu0 0.0
      %1822 = vmatpush.msra.mxu0 0.0
      %1823 = vmatpush.msra.mxu0 0.0
      %1824 = vmatpush.msra.mxu0 0.0
      %1825 = vmatpush.msra.mxu0 0.0
      %1826 = vmatpush.msra.mxu0 0.0
      %1827 = vmatpush.msra.mxu0 %v1760
      %1828 = vmatpush.msra.mxu0 %v1758
      %1829 = vmatpush.msra.mxu0 %v1756
      %1830 = vmatpush.msra.mxu0 %v1754
      %1831 = vmatpush.msra.mxu0 %v1752
      %1832 = vmatpush.msra.mxu0 %v1750
      %1833 = vmatpush.msra.mxu0 %v1748
      %1834 = vmatpush.msra.mxu0 %v1746
      %1835 = vmatmul.f32.gmra.mxu0 %v1767
      %v1836 = vpop.f32.mrf.mxu0
      %v1837 = vadd.f32 %v1763, %v1836
      %1838 = vmatmul.f32.gmra.mxu0 %v1770
      %v1839 = vpop.f32.mrf.mxu0
      %v1840 = vadd.f32 %v1763, %v1839
      %1841 = vmatmul.f32.gmra.mxu0 %v1773
      %v1842 = vpop.f32.mrf.mxu0
      %v1843 = vadd.f32 %v1763, %v1842
      %1844 = vmatmul.f32.gmra.mxu0 %v1776
      %v1845 = vpop.f32.mrf.mxu0
      %v1846 = vadd.f32 %v1763, %v1845
      %1847 = vmatmul.f32.gmra.mxu0 %v1779
      %v1848 = vpop.f32.mrf.mxu0
      %v1849 = vadd.f32 %v1763, %v1848
      %1850 = vmatmul.f32.gmra.mxu0 %v1782
      %v1851 = vpop.f32.mrf.mxu0
      %v1852 = vadd.f32 %v1763, %v1851
      %1853 = vdwg.mxu0
      %v1854 = vmul.f32 %v1802, 0.5
      %v1855 = vmul.f32 %v1837, 0.5
      %v1856 = vmul.f32 %v1805, 0.5
      %v1857 = vmul.f32 %v1840, 0.5
      %v1858 = vmul.f32 %v1808, 0.5
      %v1859 = vmul.f32 %v1843, 0.5
      %v1860 = vmul.f32 %v1811, 0.5
      %v1861 = vmul.f32 %v1846, 0.5
      %v1862 = vmul.f32 %v1814, 0.5
      %v1863 = vmul.f32 %v1849, 0.5
      %v1864 = vmul.f32 %v1817, 0.5
      %v1865 = vmul.f32 %v1852, 0.5
      %v1866 = vmul.f32 %v1802, 0.70710677
      %v1867 = vmul.f32 %v1837, 0.70710677
      %v1868 = vmul.f32 %v1805, 0.70710677
      %v1869 = vmul.f32 %v1840, 0.70710677
      %v1870 = vmul.f32 %v1808, 0.70710677
      %v1871 = vmul.f32 %v1843, 0.70710677
      %v1872 = vmul.f32 %v1811, 0.70710677
      %v1873 = vmul.f32 %v1846, 0.70710677
      %v1874 = vmul.f32 %v1814, 0.70710677
      %v1875 = vmul.f32 %v1849, 0.70710677
      %v1876 = vmul.f32 %v1817, 0.70710677
      %v1877 = vmul.f32 %v1852, 0.70710677
      %vm1878 = vcmp.ge.f32.partialorder %v1866, 0.0
      %vm1879 = vcmp.ge.f32.partialorder %v1867, 0.0
      %vm1880 = vcmp.ge.f32.partialorder %v1868, 0.0
      %vm1881 = vcmp.ge.f32.partialorder %v1869, 0.0
      %vm1882 = vcmp.ge.f32.partialorder %v1870, 0.0
      %vm1883 = vcmp.ge.f32.partialorder %v1871, 0.0
      %vm1884 = vcmp.ge.f32.partialorder %v1872, 0.0
      %vm1885 = vcmp.ge.f32.partialorder %v1873, 0.0
      %vm1886 = vcmp.ge.f32.partialorder %v1874, 0.0
      %vm1887 = vcmp.ge.f32.partialorder %v1875, 0.0
      %vm1888 = vcmp.ge.f32.partialorder %v1876, 0.0
      %vm1889 = vcmp.ge.f32.partialorder %v1877, 0.0
      %v1890 = vsel %vm1878, 1.0, -1.0
      %v1891 = vsel %vm1879, 1.0, -1.0
      %v1892 = vsel %vm1880, 1.0, -1.0
      %v1893 = vsel %vm1881, 1.0, -1.0
      %v1894 = vsel %vm1882, 1.0, -1.0
      %v1895 = vsel %vm1883, 1.0, -1.0
      %v1896 = vsel %vm1884, 1.0, -1.0
      %v1897 = vsel %vm1885, 1.0, -1.0
      %v1898 = vsel %vm1886, 1.0, -1.0
      %v1899 = vsel %vm1887, 1.0, -1.0
      %v1900 = vsel %vm1888, 1.0, -1.0
      %v1901 = vsel %vm1889, 1.0, -1.0
      %v1902 = vand.u32 2147483647, %v1866
      %v1903 = vand.u32 2147483647, %v1867
      %v1904 = vand.u32 2147483647, %v1868
      %v1905 = vand.u32 2147483647, %v1869
      %v1906 = vand.u32 2147483647, %v1870
      %v1907 = vand.u32 2147483647, %v1871
      %v1908 = vand.u32 2147483647, %v1872
      %v1909 = vand.u32 2147483647, %v1873
      %v1910 = vand.u32 2147483647, %v1874
      %v1911 = vand.u32 2147483647, %v1875
      %v1912 = vand.u32 2147483647, %v1876
      %v1913 = vand.u32 2147483647, %v1877
      %v1914 = vmul.f32 %v1902, 0.3275911
      %v1915 = vmul.f32 %v1903, 0.3275911
      %v1916 = vmul.f32 %v1904, 0.3275911
      %v1917 = vmul.f32 %v1905, 0.3275911
      %v1918 = vmul.f32 %v1906, 0.3275911
      %v1919 = vmul.f32 %v1907, 0.3275911
      %v1920 = vmul.f32 %v1908, 0.3275911
      %v1921 = vmul.f32 %v1909, 0.3275911
      %v1922 = vmul.f32 %v1910, 0.3275911
      %v1923 = vmul.f32 %v1911, 0.3275911
      %v1924 = vmul.f32 %v1912, 0.3275911
      %v1925 = vmul.f32 %v1913, 0.3275911
      %v1926 = vadd.f32 %v1914, 1.0
      %v1927 = vadd.f32 %v1915, 1.0
      %v1928 = vadd.f32 %v1916, 1.0
      %v1929 = vadd.f32 %v1917, 1.0
      %v1930 = vadd.f32 %v1918, 1.0
      %v1931 = vadd.f32 %v1919, 1.0
      %v1932 = vadd.f32 %v1920, 1.0
      %v1933 = vadd.f32 %v1921, 1.0
      %v1934 = vadd.f32 %v1922, 1.0
      %v1935 = vadd.f32 %v1923, 1.0
      %v1936 = vadd.f32 %v1924, 1.0
      %v1937 = vadd.f32 %v1925, 1.0
      %v1938 = vrcp.pop %v1926
      %v1939 = vrcp.pop %v1927
      %v1940 = vrcp.pop %v1928
      %v1941 = vrcp.pop %v1929
      %v1942 = vrcp.pop %v1930
      %v1943 = vrcp.pop %v1931
      %v1944 = vrcp.pop %v1932
      %v1945 = vrcp.pop %v1933
      %v1946 = vrcp.pop %v1934
      %v1947 = vrcp.pop %v1935
      %v1948 = vrcp.pop %v1936
      %v1949 = vrcp.pop %v1937
      %v1950 = vmul.f32 %v1938, 1.0614054
      %v1951 = vmul.f32 %v1939, 1.0614054
      %v1952 = vmul.f32 %v1940, 1.0614054
      %v1953 = vmul.f32 %v1941, 1.0614054
      %v1954 = vmul.f32 %v1942, 1.0614054
      %v1955 = vmul.f32 %v1943, 1.0614054
      %v1956 = vmul.f32 %v1944, 1.0614054
      %v1957 = vmul.f32 %v1945, 1.0614054
      %v1958 = vmul.f32 %v1946, 1.0614054
      %v1959 = vmul.f32 %v1947, 1.0614054
      %v1960 = vmul.f32 %v1948, 1.0614054
      %v1961 = vmul.f32 %v1949, 1.0614054
      %v1962 = vadd.f32 %v1950, -1.4531521
      %v1963 = vadd.f32 %v1951, -1.4531521
      %v1964 = vadd.f32 %v1952, -1.4531521
      %v1965 = vadd.f32 %v1953, -1.4531521
      %v1966 = vadd.f32 %v1954, -1.4531521
      %v1967 = vadd.f32 %v1955, -1.4531521
      %v1968 = vadd.f32 %v1956, -1.4531521
      %v1969 = vadd.f32 %v1957, -1.4531521
      %v1970 = vadd.f32 %v1958, -1.4531521
      %v1971 = vadd.f32 %v1959, -1.4531521
      %v1972 = vadd.f32 %v1960, -1.4531521
      %v1973 = vadd.f32 %v1961, -1.4531521
      %v1974 = vmul.f32 %v1962, %v1938
      %v1975 = vmul.f32 %v1963, %v1939
      %v1976 = vmul.f32 %v1964, %v1940
      %v1977 = vmul.f32 %v1965, %v1941
      %v1978 = vmul.f32 %v1966, %v1942
      %v1979 = vmul.f32 %v1967, %v1943
      %v1980 = vmul.f32 %v1968, %v1944
      %v1981 = vmul.f32 %v1969, %v1945
      %v1982 = vmul.f32 %v1970, %v1946
      %v1983 = vmul.f32 %v1971, %v1947
      %v1984 = vmul.f32 %v1972, %v1948
      %v1985 = vmul.f32 %v1973, %v1949
      %v1986 = vadd.f32 %v1974, 1.4214138
      %v1987 = vadd.f32 %v1975, 1.4214138
      %v1988 = vadd.f32 %v1976, 1.4214138
      %v1989 = vadd.f32 %v1977, 1.4214138
      %v1990 = vadd.f32 %v1978, 1.4214138
      %v1991 = vadd.f32 %v1979, 1.4214138
      %v1992 = vadd.f32 %v1980, 1.4214138
      %v1993 = vadd.f32 %v1981, 1.4214138
      %v1994 = vadd.f32 %v1982, 1.4214138
      %v1995 = vadd.f32 %v1983, 1.4214138
      %v1996 = vadd.f32 %v1984, 1.4214138
      %v1997 = vadd.f32 %v1985, 1.4214138
      %v1998 = vmul.f32 %v1986, %v1938
      %v1999 = vmul.f32 %v1987, %v1939
      %v2000 = vmul.f32 %v1988, %v1940
      %v2001 = vmul.f32 %v1989, %v1941
      %v2002 = vmul.f32 %v1990, %v1942
      %v2003 = vmul.f32 %v1991, %v1943
      %v2004 = vmul.f32 %v1992, %v1944
      %v2005 = vmul.f32 %v1993, %v1945
      %v2006 = vmul.f32 %v1994, %v1946
      %v2007 = vmul.f32 %v1995, %v1947
      %v2008 = vmul.f32 %v1996, %v1948
      %v2009 = vmul.f32 %v1997, %v1949
      %v2010 = vadd.f32 %v1998, -0.28449672
      %v2011 = vadd.f32 %v1999, -0.28449672
      %v2012 = vadd.f32 %v2000, -0.28449672
      %v2013 = vadd.f32 %v2001, -0.28449672
      %v2014 = vadd.f32 %v2002, -0.28449672
      %v2015 = vadd.f32 %v2003, -0.28449672
      %v2016 = vadd.f32 %v2004, -0.28449672
      %v2017 = vadd.f32 %v2005, -0.28449672
      %v2018 = vadd.f32 %v2006, -0.28449672
      %v2019 = vadd.f32 %v2007, -0.28449672
      %v2020 = vadd.f32 %v2008, -0.28449672
      %v2021 = vadd.f32 %v2009, -0.28449672
      %v2022 = vmul.f32 %v2010, %v1938
      %v2023 = vmul.f32 %v2011, %v1939
      %v2024 = vmul.f32 %v2012, %v1940
      %v2025 = vmul.f32 %v2013, %v1941
      %v2026 = vmul.f32 %v2014, %v1942
      %v2027 = vmul.f32 %v2015, %v1943
      %v2028 = vmul.f32 %v2016, %v1944
      %v2029 = vmul.f32 %v2017, %v1945
      %v2030 = vmul.f32 %v2018, %v1946
      %v2031 = vmul.f32 %v2019, %v1947
      %v2032 = vmul.f32 %v2020, %v1948
      %v2033 = vmul.f32 %v2021, %v1949
      %v2034 = vadd.f32 %v2022, 0.2548296
      %v2035 = vadd.f32 %v2023, 0.2548296
      %v2036 = vadd.f32 %v2024, 0.2548296
      %v2037 = vadd.f32 %v2025, 0.2548296
      %v2038 = vadd.f32 %v2026, 0.2548296
      %v2039 = vadd.f32 %v2027, 0.2548296
      %v2040 = vadd.f32 %v2028, 0.2548296
      %v2041 = vadd.f32 %v2029, 0.2548296
      %v2042 = vadd.f32 %v2030, 0.2548296
      %v2043 = vadd.f32 %v2031, 0.2548296
      %v2044 = vadd.f32 %v2032, 0.2548296
      %v2045 = vadd.f32 %v2033, 0.2548296
      %v2046 = vmul.f32 %v2034, %v1938
      %v2047 = vmul.f32 %v2035, %v1939
      %v2048 = vmul.f32 %v2036, %v1940
      %v2049 = vmul.f32 %v2037, %v1941
      %v2050 = vmul.f32 %v2038, %v1942
      %v2051 = vmul.f32 %v2039, %v1943
      %v2052 = vmul.f32 %v2040, %v1944
      %v2053 = vmul.f32 %v2041, %v1945
      %v2054 = vmul.f32 %v2042, %v1946
      %v2055 = vmul.f32 %v2043, %v1947
      %v2056 = vmul.f32 %v2044, %v1948
      %v2057 = vmul.f32 %v2045, %v1949
      %v2058 = vsub.f32 0.0, %v1902
      %v2059 = vsub.f32 0.0, %v1903
      %v2060 = vsub.f32 0.0, %v1904
      %v2061 = vsub.f32 0.0, %v1905
      %v2062 = vsub.f32 0.0, %v1906
      %v2063 = vsub.f32 0.0, %v1907
      %v2064 = vsub.f32 0.0, %v1908
      %v2065 = vsub.f32 0.0, %v1909
      %v2066 = vsub.f32 0.0, %v1910
      %v2067 = vsub.f32 0.0, %v1911
      %v2068 = vsub.f32 0.0, %v1912
      %v2069 = vsub.f32 0.0, %v1913
      %v2070 = vmul.f32 %v2058, %v1902
      %v2071 = vmul.f32 %v2059, %v1903
      %v2072 = vmul.f32 %v2060, %v1904
      %v2073 = vmul.f32 %v2061, %v1905
      %v2074 = vmul.f32 %v2062, %v1906
      %v2075 = vmul.f32 %v2063, %v1907
      %v2076 = vmul.f32 %v2064, %v1908
      %v2077 = vmul.f32 %v2065, %v1909
      %v2078 = vmul.f32 %v2066, %v1910
      %v2079 = vmul.f32 %v2067, %v1911
      %v2080 = vmul.f32 %v2068, %v1912
      %v2081 = vmul.f32 %v2069, %v1913
      %v2082 = vmul.f32 %v2070, 1.442695
      %v2083 = vpow.pop %v2082
      %v2084 = vmul.f32 %v2071, 1.442695
      %v2085 = vpow.pop %v2084
      %v2086 = vmul.f32 %v2072, 1.442695
      %v2087 = vpow.pop %v2086
      %v2088 = vmul.f32 %v2073, 1.442695
      %v2089 = vpow.pop %v2088
      %v2090 = vmul.f32 %v2074, 1.442695
      %v2091 = vpow.pop %v2090
      %v2092 = vmul.f32 %v2075, 1.442695
      %v2093 = vpow.pop %v2092
      %v2094 = vmul.f32 %v2076, 1.442695
      %v2095 = vpow.pop %v2094
      %v2096 = vmul.f32 %v2077, 1.442695
      %v2097 = vpow.pop %v2096
      %v2098 = vmul.f32 %v2078, 1.442695
      %v2099 = vpow.pop %v2098
      %v2100 = vmul.f32 %v2079, 1.442695
      %v2101 = vpow.pop %v2100
      %v2102 = vmul.f32 %v2080, 1.442695
      %v2103 = vpow.pop %v2102
      %v2104 = vmul.f32 %v2081, 1.442695
      %v2105 = vpow.pop %v2104
      %v2106 = vmul.f32 %v2046, %v2083
      %v2107 = vmul.f32 %v2047, %v2085
      %v2108 = vmul.f32 %v2048, %v2087
      %v2109 = vmul.f32 %v2049, %v2089
      %v2110 = vmul.f32 %v2050, %v2091
      %v2111 = vmul.f32 %v2051, %v2093
      %v2112 = vmul.f32 %v2052, %v2095
      %v2113 = vmul.f32 %v2053, %v2097
      %v2114 = vmul.f32 %v2054, %v2099
      %v2115 = vmul.f32 %v2055, %v2101
      %v2116 = vmul.f32 %v2056, %v2103
      %v2117 = vmul.f32 %v2057, %v2105
      %v2118 = vsub.f32 1.0, %v2106
      %v2119 = vsub.f32 1.0, %v2107
      %v2120 = vsub.f32 1.0, %v2108
      %v2121 = vsub.f32 1.0, %v2109
      %v2122 = vsub.f32 1.0, %v2110
      %v2123 = vsub.f32 1.0, %v2111
      %v2124 = vsub.f32 1.0, %v2112
      %v2125 = vsub.f32 1.0, %v2113
      %v2126 = vsub.f32 1.0, %v2114
      %v2127 = vsub.f32 1.0, %v2115
      %v2128 = vsub.f32 1.0, %v2116
      %v2129 = vsub.f32 1.0, %v2117
      %v2130 = vmul.f32 %v1890, %v2118
      %v2131 = vmul.f32 %v1891, %v2119
      %v2132 = vmul.f32 %v1892, %v2120
      %v2133 = vmul.f32 %v1893, %v2121
      %v2134 = vmul.f32 %v1894, %v2122
      %v2135 = vmul.f32 %v1895, %v2123
      %v2136 = vmul.f32 %v1896, %v2124
      %v2137 = vmul.f32 %v1897, %v2125
      %v2138 = vmul.f32 %v1898, %v2126
      %v2139 = vmul.f32 %v1899, %v2127
      %v2140 = vmul.f32 %v1900, %v2128
      %v2141 = vmul.f32 %v1901, %v2129
      %v2142 = vadd.f32 %v2130, 1.0
      %v2143 = vadd.f32 %v2131, 1.0
      %v2144 = vadd.f32 %v2132, 1.0
      %v2145 = vadd.f32 %v2133, 1.0
      %v2146 = vadd.f32 %v2134, 1.0
      %v2147 = vadd.f32 %v2135, 1.0
      %v2148 = vadd.f32 %v2136, 1.0
      %v2149 = vadd.f32 %v2137, 1.0
      %v2150 = vadd.f32 %v2138, 1.0
      %v2151 = vadd.f32 %v2139, 1.0
      %v2152 = vadd.f32 %v2140, 1.0
      %v2153 = vadd.f32 %v2141, 1.0
      %v2154 = vmul.f32 %v1854, %v2142
      %v2155 = vmul.f32 %v1855, %v2143
      %v2156 = vmul.f32 %v1856, %v2144
      %v2157 = vmul.f32 %v1857, %v2145
      %v2158 = vmul.f32 %v1858, %v2146
      %v2159 = vmul.f32 %v1859, %v2147
      %v2160 = vmul.f32 %v1860, %v2148
      %v2161 = vmul.f32 %v1861, %v2149
      %v2162 = vmul.f32 %v1862, %v2150
      %v2163 = vmul.f32 %v1863, %v2151
      %v2164 = vmul.f32 %v1864, %v2152
      %v2165 = vmul.f32 %v1865, %v2153
      %v2166 = vld [vmem:[%s572] sm:$0xff]
      %v2167 = vld [vmem:[%s572 + $0x8] sm:$0xff]
      %v2168 = vld [vmem:[%s572 + $0x10] sm:$0xff]
      %v2169 = vld [vmem:[%s572 + $0x18] sm:$0xff]
      %v2170 = vld [vmem:[%s572 + $0x20] sm:$0xff]
      %v2171 = vld [vmem:[%s572 + $0x28] sm:$0xff]
      %v2172 = vld [vmem:[%s572 + $0x30] sm:$0xff]
      %v2173 = vld [vmem:[%s572 + $0x38] sm:$0xff]
      %v2174 = vld [vmem:[%s572 + $0x40] sm:$0xff]
      %v2175 = vld [vmem:[%s572 + $0x48] sm:$0xff]
      %v2176 = vld [vmem:[%s572 + $0x50] sm:$0xff]
      %v2177 = vld [vmem:[%s572 + $0x58] sm:$0xff]
      %v2178 = vld [vmem:[%s572 + $0x60] sm:$0xff]
      %v2179 = vld [vmem:[%s572 + $0x68] sm:$0xff]
      %v2180 = vld [vmem:[%s572 + $0x70] sm:$0xff]
      %v2181 = vld [vmem:[%s572 + $0x78] sm:$0xff]
      %v2182 = vld [vmem:[%s572 + $0x80] sm:$0xff]
      %v2183 = vld [vmem:[%s572 + $0x88] sm:$0xff]
      %v2184 = vld [vmem:[%s572 + $0x90] sm:$0xff]
      %v2185 = vld [vmem:[%s572 + $0x98] sm:$0xff]
      %v2186 = vld [vmem:[%s572 + $0xa0] sm:$0xff]
      %v2187 = vld [vmem:[%s572 + $0xa8] sm:$0xff]
      %v2188 = vld [vmem:[%s572 + $0xb0] sm:$0xff]
      %v2189 = vld [vmem:[%s572 + $0xb8] sm:$0xff]
      %v2190 = vld [vmem:[%s572 + $0xc0] sm:$0xff]
      %v2191 = vld [vmem:[%s572 + $0xc8] sm:$0xff]
      %v2192 = vld [vmem:[%s572 + $0xd0] sm:$0xff]
      %v2193 = vld [vmem:[%s572 + $0xd8] sm:$0xff]
      %v2194 = vld [vmem:[%s572 + $0xe0] sm:$0xff]
      %v2195 = vld [vmem:[%s572 + $0xe8] sm:$0xff]
      %v2196 = vld [vmem:[%s572 + $0xf0] sm:$0xff]
      %v2197 = vld [vmem:[%s572 + $0xf8] sm:$0xff]
      %2198 = vmatpush.msra.mxu0 %v2181
      %2199 = vmatpush.msra.mxu0 %v2180
      %2200 = vmatpush.msra.mxu0 %v2179
      %2201 = vmatpush.msra.mxu0 %v2178
      %2202 = vmatpush.msra.mxu0 %v2177
      %2203 = vmatpush.msra.mxu0 %v2176
      %2204 = vmatpush.msra.mxu0 %v2175
      %2205 = vmatpush.msra.mxu0 %v2174
      %2206 = vmatpush.msra.mxu0 %v2173
      %2207 = vmatpush.msra.mxu0 %v2172
      %2208 = vmatpush.msra.mxu0 %v2171
      %2209 = vmatpush.msra.mxu0 %v2170
      %2210 = vmatpush.msra.mxu0 %v2169
      %2211 = vmatpush.msra.mxu0 %v2168
      %2212 = vmatpush.msra.mxu0 %v2167
      %2213 = vmatpush.msra.mxu0 %v2166
      %2214 = vmatmul.f32.gmra.mxu0 %v2154
      %v2215 = vpop.f32.mrf.mxu0
      %v2216 = vadd.f32 %v862, %v2215
      %2217 = vmatmul.f32.gmra.mxu0 %v2156
      %v2218 = vpop.f32.mrf.mxu0
      %v2219 = vadd.f32 %v862, %v2218
      %2220 = vmatmul.f32.gmra.mxu0 %v2158
      %v2221 = vpop.f32.mrf.mxu0
      %v2222 = vadd.f32 %v862, %v2221
      %2223 = vmatmul.f32.gmra.mxu0 %v2160
      %v2224 = vpop.f32.mrf.mxu0
      %v2225 = vadd.f32 %v862, %v2224
      %2226 = vmatmul.f32.gmra.mxu0 %v2162
      %v2227 = vpop.f32.mrf.mxu0
      %v2228 = vadd.f32 %v862, %v2227
      %2229 = vmatmul.f32.gmra.mxu0 %v2164
      %v2230 = vpop.f32.mrf.mxu0
      %v2231 = vadd.f32 %v862, %v2230
      %2232 = vdwg.mxu0
      %2233 = vmatpush.msra.mxu0 %v2197
      %2234 = vmatpush.msra.mxu0 %v2196
      %2235 = vmatpush.msra.mxu0 %v2195
      %2236 = vmatpush.msra.mxu0 %v2194
      %2237 = vmatpush.msra.mxu0 %v2193
      %2238 = vmatpush.msra.mxu0 %v2192
      %2239 = vmatpush.msra.mxu0 %v2191
      %2240 = vmatpush.msra.mxu0 %v2190
      %2241 = vmatpush.msra.mxu0 %v2189
      %2242 = vmatpush.msra.mxu0 %v2188
      %2243 = vmatpush.msra.mxu0 %v2187
      %2244 = vmatpush.msra.mxu0 %v2186
      %2245 = vmatpush.msra.mxu0 %v2185
      %2246 = vmatpush.msra.mxu0 %v2184
      %2247 = vmatpush.msra.mxu0 %v2183
      %2248 = vmatpush.msra.mxu0 %v2182
      %2249 = vmatmul.f32.gmra.mxu0 %v2155
      %v2250 = vpop.f32.mrf.mxu0
      %v2251 = vadd.f32 %v2216, %v2250
      %2252 = vmatmul.f32.gmra.mxu0 %v2157
      %v2253 = vpop.f32.mrf.mxu0
      %v2254 = vadd.f32 %v2219, %v2253
      %2255 = vmatmul.f32.gmra.mxu0 %v2159
      %v2256 = vpop.f32.mrf.mxu0
      %v2257 = vadd.f32 %v2222, %v2256
      %2258 = vmatmul.f32.gmra.mxu0 %v2161
      %v2259 = vpop.f32.mrf.mxu0
      %v2260 = vadd.f32 %v2225, %v2259
      %2261 = vmatmul.f32.gmra.mxu0 %v2163
      %v2262 = vpop.f32.mrf.mxu0
      %v2263 = vadd.f32 %v2228, %v2262
      %2264 = vmatmul.f32.gmra.mxu0 %v2165
      %v2265 = vpop.f32.mrf.mxu0
      %v2266 = vadd.f32 %v2231, %v2265
      %2267 = vdwg.mxu0
      %v2268 = vadd.f32 %v1595, %v2251
      %v2269 = vadd.f32 %v1596, %v2254
      %v2270 = vadd.f32 %v1597, %v2257
      %v2271 = vadd.f32 %v1598, %v2260
      %v2272 = vadd.f32 %v1599, %v2263
      %v2273 = vadd.f32 %v1600, %v2266
      %v2274 = vld [vmem:[%s552 + $0x10] ss:$0 sm:$0xff]
      %v2275 = vld [vmem:[%s552 + $0x11] ss:$0 sm:$0xff]
      %s2276 = scalar_lea.vmem %s552, 18
      %v2277 = vld [vmem:[%s2276] ss:$8 sm:$0x3]
      %v2278 = vld [vmem:[%s552 + $0x13] ss:$0 sm:$0xff]
      %v2279 = vld [vmem:[%s552 + $0x14] ss:$0 sm:$0xff]
      %v2280 = vld [vmem:[%s552 + $0x15] ss:$0 sm:$0xff]
      %s2281 = scalar_lea.vmem %s552, 22
      %v2282 = vld [vmem:[%s2281] ss:$8 sm:$0x3]
      %v2283 = vld [vmem:[%s552 + $0x17] ss:$0 sm:$0xff]
      %v2284 = vsel %vm621, %v2268, 0.0
      %2285 = vadd.xlane.f32.xlu0 %v2284
      %v2286 = vpop.xlane.xlu0 %2285
      %v2287 = vsel %vm621, %v2269, 0.0
      %2288 = vadd.xlane.f32.xlu0 %v2287
      %v2289 = vpop.xlane.xlu0 %2288
      %v2290 = vsel %vm621, %v2270, 0.0
      %2291 = vadd.xlane.f32.xlu0 %v2290
      %v2292 = vpop.xlane.xlu0 %2291
      %v2293 = vsel %vm621, %v2271, 0.0
      %2294 = vadd.xlane.f32.xlu0 %v2293
      %v2295 = vpop.xlane.xlu0 %2294
      %v2296 = vsel %vm621, %v2272, 0.0
      %2297 = vadd.xlane.f32.xlu0 %v2296
      %v2298 = vpop.xlane.xlu0 %2297
      %v2299 = vsel %vm621, %v2273, 0.0
      %2300 = vadd.xlane.f32.xlu0 %v2299
      %v2301 = vpop.xlane.xlu0 %2300
      %v2302 = vmul.f32 %v2286, %v699
      %v2303 = vmul.f32 %v2289, %v699
      %v2304 = vmul.f32 %v2292, %v699
      %v2305 = vmul.f32 %v2295, %v699
      %v2306 = vmul.f32 %v2298, %v699
      %v2307 = vmul.f32 %v2301, %v699
      %v2308 = vsub.f32 %v2268, %v2302
      %v2309 = vsub.f32 %v2269, %v2303
      %v2310 = vsub.f32 %v2270, %v2304
      %v2311 = vsub.f32 %v2271, %v2305
      %v2312 = vsub.f32 %v2272, %v2306
      %v2313 = vsub.f32 %v2273, %v2307
      %v2314 = vmul.f32 %v2308, %v2308
      %v2315 = vmul.f32 %v2309, %v2309
      %v2316 = vmul.f32 %v2310, %v2310
      %v2317 = vmul.f32 %v2311, %v2311
      %v2318 = vmul.f32 %v2312, %v2312
      %v2319 = vmul.f32 %v2313, %v2313
      %v2320 = vsel %vm621, %v2314, 0.0
      %2321 = vadd.xlane.f32.xlu0 %v2320
      %v2322 = vpop.xlane.xlu0 %2321
      %v2323 = vsel %vm621, %v2315, 0.0
      %2324 = vadd.xlane.f32.xlu0 %v2323
      %v2325 = vpop.xlane.xlu0 %2324
      %v2326 = vsel %vm621, %v2316, 0.0
      %2327 = vadd.xlane.f32.xlu0 %v2326
      %v2328 = vpop.xlane.xlu0 %2327
      %v2329 = vsel %vm621, %v2317, 0.0
      %2330 = vadd.xlane.f32.xlu0 %v2329
      %v2331 = vpop.xlane.xlu0 %2330
      %v2332 = vsel %vm621, %v2318, 0.0
      %2333 = vadd.xlane.f32.xlu0 %v2332
      %v2334 = vpop.xlane.xlu0 %2333
      %v2335 = vsel %vm621, %v2319, 0.0
      %2336 = vadd.xlane.f32.xlu0 %v2335
      %v2337 = vpop.xlane.xlu0 %2336
      %v2338 = vmul.f32 %v2322, %v699
      %v2339 = vmul.f32 %v2325, %v699
      %v2340 = vmul.f32 %v2328, %v699
      %v2341 = vmul.f32 %v2331, %v699
      %v2342 = vmul.f32 %v2334, %v699
      %v2343 = vmul.f32 %v2337, %v699
      %v2344 = vadd.f32 %v2338, 1e-05
      %v2345 = vadd.f32 %v2339, 1e-05
      %v2346 = vadd.f32 %v2340, 1e-05
      %v2347 = vadd.f32 %v2341, 1e-05
      %v2348 = vadd.f32 %v2342, 1e-05
      %v2349 = vadd.f32 %v2343, 1e-05
      %v2350 = vrsqrt.pop %v2344
      %v2351 = vmul.f32 %v2350, %v2344
      %v2352 = vmul.f32 %v2351, %v2350
      %v2353 = vmul.f32 0.5, %v2352
      %v2354 = vsub.f32 1.5, %v2353
      %v2355 = vmul.f32 %v2350, %v2354
      %vm2356 = vweird.f32 %v2344
      %vm2357 = vweird.f32 %v2350
      %vm2358 = vmor %vm2356, %vm2357
      %v2359 = vsel %vm2358, %v2350, %v2355
      %v2360 = vrsqrt.pop %v2345
      %v2361 = vmul.f32 %v2360, %v2345
      %v2362 = vmul.f32 %v2361, %v2360
      %v2363 = vmul.f32 0.5, %v2362
      %v2364 = vsub.f32 1.5, %v2363
      %v2365 = vmul.f32 %v2360, %v2364
      %vm2366 = vweird.f32 %v2345
      %vm2367 = vweird.f32 %v2360
      %vm2368 = vmor %vm2366, %vm2367
      %v2369 = vsel %vm2368, %v2360, %v2365
      %v2370 = vrsqrt.pop %v2346
      %v2371 = vmul.f32 %v2370, %v2346
      %v2372 = vmul.f32 %v2371, %v2370
      %v2373 = vmul.f32 0.5, %v2372
      %v2374 = vsub.f32 1.5, %v2373
      %v2375 = vmul.f32 %v2370, %v2374
      %vm2376 = vweird.f32 %v2346
      %vm2377 = vweird.f32 %v2370
      %vm2378 = vmor %vm2376, %vm2377
      %v2379 = vsel %vm2378, %v2370, %v2375
      %v2380 = vrsqrt.pop %v2347
      %v2381 = vmul.f32 %v2380, %v2347
      %v2382 = vmul.f32 %v2381, %v2380
      %v2383 = vmul.f32 0.5, %v2382
      %v2384 = vsub.f32 1.5, %v2383
      %v2385 = vmul.f32 %v2380, %v2384
      %vm2386 = vweird.f32 %v2347
      %vm2387 = vweird.f32 %v2380
      %vm2388 = vmor %vm2386, %vm2387
      %v2389 = vsel %vm2388, %v2380, %v2385
      %v2390 = vrsqrt.pop %v2348
      %v2391 = vmul.f32 %v2390, %v2348
      %v2392 = vmul.f32 %v2391, %v2390
      %v2393 = vmul.f32 0.5, %v2392
      %v2394 = vsub.f32 1.5, %v2393
      %v2395 = vmul.f32 %v2390, %v2394
      %vm2396 = vweird.f32 %v2348
      %vm2397 = vweird.f32 %v2390
      %vm2398 = vmor %vm2396, %vm2397
      %v2399 = vsel %vm2398, %v2390, %v2395
      %v2400 = vrsqrt.pop %v2349
      %v2401 = vmul.f32 %v2400, %v2349
      %v2402 = vmul.f32 %v2401, %v2400
      %v2403 = vmul.f32 0.5, %v2402
      %v2404 = vsub.f32 1.5, %v2403
      %v2405 = vmul.f32 %v2400, %v2404
      %vm2406 = vweird.f32 %v2349
      %vm2407 = vweird.f32 %v2400
      %vm2408 = vmor %vm2406, %vm2407
      %v2409 = vsel %vm2408, %v2400, %v2405
      %v2410 = vmul.f32 %v2308, %v2359
      %v2411 = vmul.f32 %v2309, %v2369
      %v2412 = vmul.f32 %v2310, %v2379
      %v2413 = vmul.f32 %v2311, %v2389
      %v2414 = vmul.f32 %v2312, %v2399
      %v2415 = vmul.f32 %v2313, %v2409
      %v2416 = vmul.f32 %v2410, %v2274
      %v2417 = vmul.f32 %v2411, %v2274
      %v2418 = vmul.f32 %v2412, %v2274
      %v2419 = vmul.f32 %v2413, %v2274
      %v2420 = vmul.f32 %v2414, %v2274
      %v2421 = vmul.f32 %v2415, %v2274
      %v2422 = vadd.f32 %v2416, %v2275
      %v2423 = vadd.f32 %v2417, %v2275
      %v2424 = vadd.f32 %v2418, %v2275
      %v2425 = vadd.f32 %v2419, %v2275
      %v2426 = vadd.f32 %v2420, %v2275
      %v2427 = vadd.f32 %v2421, %v2275
      %s2428 = scalar_lea.vmem %s557, 128
      %v2429 = vld [vmem:[%s2428] sm:$0xff]
      %v2430 = vld [vmem:[%s2428 + $0x8] sm:$0xff]
      %v2431 = vld [vmem:[%s2428 + $0x10] sm:$0xff]
      %v2432 = vld [vmem:[%s2428 + $0x18] sm:$0xff]
      %v2433 = vld [vmem:[%s2428 + $0x20] sm:$0xff]
      %v2434 = vld [vmem:[%s2428 + $0x28] sm:$0xff]
      %v2435 = vld [vmem:[%s2428 + $0x30] sm:$0xff]
      %v2436 = vld [vmem:[%s2428 + $0x38] sm:$0xff]
      %v2437 = vld [vmem:[%s2428 + $0x40] sm:$0xff]
      %v2438 = vld [vmem:[%s2428 + $0x48] sm:$0xff]
      %v2439 = vld [vmem:[%s2428 + $0x50] sm:$0xff]
      %v2440 = vld [vmem:[%s2428 + $0x58] sm:$0xff]
      %v2441 = vld [vmem:[%s2428 + $0x60] sm:$0xff]
      %v2442 = vld [vmem:[%s2428 + $0x68] sm:$0xff]
      %v2443 = vld [vmem:[%s2428 + $0x70] sm:$0xff]
      %v2444 = vld [vmem:[%s2428 + $0x78] sm:$0xff]
      %v2446 = vperm.slane %v2277, 0
      %v2447 = vperm.slane %v2277, 1
      %v2451 = vsel %vm621, %v2422, 0
      %v2454 = vsel %vm621, %v2423, 0
      %v2457 = vsel %vm621, %v2424, 0
      %v2460 = vsel %vm621, %v2425, 0
      %v2463 = vsel %vm621, %v2426, 0
      %v2466 = vsel %vm621, %v2427, 0
      %2468 = vmatpush.msra.mxu0 0.0
      %2469 = vmatpush.msra.mxu0 0.0
      %2470 = vmatpush.msra.mxu0 0.0
      %2471 = vmatpush.msra.mxu0 0.0
      %2472 = vmatpush.msra.mxu0 0.0
      %2473 = vmatpush.msra.mxu0 0.0
      %2474 = vmatpush.msra.mxu0 0.0
      %2475 = vmatpush.msra.mxu0 0.0
      %2476 = vmatpush.msra.mxu0 %v2443
      %2477 = vmatpush.msra.mxu0 %v2441
      %2478 = vmatpush.msra.mxu0 %v2439
      %2479 = vmatpush.msra.mxu0 %v2437
      %2480 = vmatpush.msra.mxu0 %v2435
      %2481 = vmatpush.msra.mxu0 %v2433
      %2482 = vmatpush.msra.mxu0 %v2431
      %2483 = vmatpush.msra.mxu0 %v2429
      %2484 = vmatmul.f32.gmra.mxu0 %v2451
      %v2485 = vpop.f32.mrf.mxu0
      %v2486 = vadd.f32 %v2446, %v2485
      %2487 = vmatmul.f32.gmra.mxu0 %v2454
      %v2488 = vpop.f32.mrf.mxu0
      %v2489 = vadd.f32 %v2446, %v2488
      %2490 = vmatmul.f32.gmra.mxu0 %v2457
      %v2491 = vpop.f32.mrf.mxu0
      %v2492 = vadd.f32 %v2446, %v2491
      %2493 = vmatmul.f32.gmra.mxu0 %v2460
      %v2494 = vpop.f32.mrf.mxu0
      %v2495 = vadd.f32 %v2446, %v2494
      %2496 = vmatmul.f32.gmra.mxu0 %v2463
      %v2497 = vpop.f32.mrf.mxu0
      %v2498 = vadd.f32 %v2446, %v2497
      %2499 = vmatmul.f32.gmra.mxu0 %v2466
      %v2500 = vpop.f32.mrf.mxu0
      %v2501 = vadd.f32 %v2446, %v2500
      %2502 = vdwg.mxu0
      %2503 = vmatpush.msra.mxu0 0.0
      %2504 = vmatpush.msra.mxu0 0.0
      %2505 = vmatpush.msra.mxu0 0.0
      %2506 = vmatpush.msra.mxu0 0.0
      %2507 = vmatpush.msra.mxu0 0.0
      %2508 = vmatpush.msra.mxu0 0.0
      %2509 = vmatpush.msra.mxu0 0.0
      %2510 = vmatpush.msra.mxu0 0.0
      %2511 = vmatpush.msra.mxu0 %v2444
      %2512 = vmatpush.msra.mxu0 %v2442
      %2513 = vmatpush.msra.mxu0 %v2440
      %2514 = vmatpush.msra.mxu0 %v2438
      %2515 = vmatpush.msra.mxu0 %v2436
      %2516 = vmatpush.msra.mxu0 %v2434
      %2517 = vmatpush.msra.mxu0 %v2432
      %2518 = vmatpush.msra.mxu0 %v2430
      %2519 = vmatmul.f32.gmra.mxu0 %v2451
      %v2520 = vpop.f32.mrf.mxu0
      %v2521 = vadd.f32 %v2447, %v2520
      %2522 = vmatmul.f32.gmra.mxu0 %v2454
      %v2523 = vpop.f32.mrf.mxu0
      %v2524 = vadd.f32 %v2447, %v2523
      %2525 = vmatmul.f32.gmra.mxu0 %v2457
      %v2526 = vpop.f32.mrf.mxu0
      %v2527 = vadd.f32 %v2447, %v2526
      %2528 = vmatmul.f32.gmra.mxu0 %v2460
      %v2529 = vpop.f32.mrf.mxu0
      %v2530 = vadd.f32 %v2447, %v2529
      %2531 = vmatmul.f32.gmra.mxu0 %v2463
      %v2532 = vpop.f32.mrf.mxu0
      %v2533 = vadd.f32 %v2447, %v2532
      %2534 = vmatmul.f32.gmra.mxu0 %v2466
      %v2535 = vpop.f32.mrf.mxu0
      %v2536 = vadd.f32 %v2447, %v2535
      %2537 = vdwg.mxu0
      %2544 = vrot.lane.b32.xlu0 %v2486, 64
      %v2545 = vpop.permute.xlu0 %2544
      %2546 = vrot.lane.b32.xlu0 %v2489, 64
      %v2547 = vpop.permute.xlu0 %2546
      %2548 = vrot.lane.b32.xlu0 %v2492, 64
      %v2549 = vpop.permute.xlu0 %2548
      %2550 = vrot.lane.b32.xlu0 %v2495, 64
      %v2551 = vpop.permute.xlu0 %2550
      %2552 = vrot.lane.b32.xlu0 %v2498, 64
      %v2553 = vpop.permute.xlu0 %2552
      %2554 = vrot.lane.b32.xlu0 %v2501, 64
      %v2555 = vpop.permute.xlu0 %2554
      %v2556 = vsel %vm1134, %v2486, 0
      %v2558 = vsel %vm1134, %v2489, 0
      %v2560 = vsel %vm1134, %v2492, 0
      %v2562 = vsel %vm1134, %v2495, 0
      %v2564 = vsel %vm1134, %v2498, 0
      %v2566 = vsel %vm1134, %v2501, 0
      %v2568 = vsel %vm1134, %v2545, 0
      %v2570 = vsel %vm1134, %v2547, 0
      %v2572 = vsel %vm1134, %v2549, 0
      %v2574 = vsel %vm1134, %v2551, 0
      %v2576 = vsel %vm1134, %v2553, 0
      %v2578 = vsel %vm1134, %v2555, 0
      %2580 = vmatpush.xpose.msra.mxu0 0.0
      %2581 = vmatpush.xpose.msra.mxu0 0.0
      %2582 = vmatpush.xpose.msra.mxu0 0.0
      %2583 = vmatpush.xpose.msra.mxu0 0.0
      %2584 = vmatpush.xpose.msra.mxu0 0.0
      %2585 = vmatpush.xpose.msra.mxu0 0.0
      %2586 = vmatpush.xpose.msra.mxu0 0.0
      %2587 = vmatpush.xpose.msra.mxu0 0.0
      %2588 = vmatpush.xpose.msra.mxu0 0.0
      %2589 = vmatpush.xpose.msra.mxu0 0.0
      %2590 = vmatpush.xpose.msra.mxu0 %v2578
      %2591 = vmatpush.xpose.msra.mxu0 %v2576
      %2592 = vmatpush.xpose.msra.mxu0 %v2574
      %2593 = vmatpush.xpose.msra.mxu0 %v2572
      %2594 = vmatpush.xpose.msra.mxu0 %v2570
      %2595 = vmatpush.xpose.msra.mxu0 %v2568
      %2596 = vmatmul.f32.gmra.mxu0 %v2556
      %v2597 = vpop.f32.mrf.mxu0
      %v2598 = vadd.f32 %v847, %v2597
      %2599 = vmatmul.f32.gmra.mxu0 %v2558
      %v2600 = vpop.f32.mrf.mxu0
      %v2601 = vadd.f32 %v848, %v2600
      %2602 = vmatmul.f32.gmra.mxu0 %v2560
      %v2603 = vpop.f32.mrf.mxu0
      %v2604 = vadd.f32 %v849, %v2603
      %2605 = vmatmul.f32.gmra.mxu0 %v2562
      %v2606 = vpop.f32.mrf.mxu0
      %v2607 = vadd.f32 %v850, %v2606
      %2608 = vmatmul.f32.gmra.mxu0 %v2564
      %v2609 = vpop.f32.mrf.mxu0
      %v2610 = vadd.f32 %v851, %v2609
      %2611 = vmatmul.f32.gmra.mxu0 %v2566
      %v2612 = vpop.f32.mrf.mxu0
      %v2613 = vadd.f32 %v852, %v2612
      %2614 = vdwg.mxu0
      %v2615 = vsel %vm1194, %v2598, -inf
      %2616 = vmax.xlane.f32.xlu0 %v2615
      %v2617 = vpop.xlane.xlu0 %2616
      %v2618 = vsel %vm1194, %v2601, -inf
      %2619 = vmax.xlane.f32.xlu0 %v2618
      %v2620 = vpop.xlane.xlu0 %2619
      %v2621 = vsel %vm1194, %v2604, -inf
      %2622 = vmax.xlane.f32.xlu0 %v2621
      %v2623 = vpop.xlane.xlu0 %2622
      %v2624 = vsel %vm1194, %v2607, -inf
      %2625 = vmax.xlane.f32.xlu0 %v2624
      %v2626 = vpop.xlane.xlu0 %2625
      %v2627 = vsel %vm1194, %v2610, -inf
      %2628 = vmax.xlane.f32.xlu0 %v2627
      %v2629 = vpop.xlane.xlu0 %2628
      %v2630 = vsel %vm1194, %v2613, -inf
      %2631 = vmax.xlane.f32.xlu0 %v2630
      %v2632 = vpop.xlane.xlu0 %2631
      %v2633 = vsub.f32 %v2598, %v2617
      %v2634 = vsub.f32 %v2601, %v2620
      %v2635 = vsub.f32 %v2604, %v2623
      %v2636 = vsub.f32 %v2607, %v2626
      %v2637 = vsub.f32 %v2610, %v2629
      %v2638 = vsub.f32 %v2613, %v2632
      %v2639 = vmul.f32 %v2633, 1.442695
      %v2640 = vpow.pop %v2639
      %v2641 = vmul.f32 %v2634, 1.442695
      %v2642 = vpow.pop %v2641
      %v2643 = vmul.f32 %v2635, 1.442695
      %v2644 = vpow.pop %v2643
      %v2645 = vmul.f32 %v2636, 1.442695
      %v2646 = vpow.pop %v2645
      %v2647 = vmul.f32 %v2637, 1.442695
      %v2648 = vpow.pop %v2647
      %v2649 = vmul.f32 %v2638, 1.442695
      %v2650 = vpow.pop %v2649
      %v2651 = vsel %vm1194, %v2640, 0.0
      %2652 = vadd.xlane.f32.xlu0 %v2651
      %v2653 = vpop.xlane.xlu0 %2652
      %v2654 = vsel %vm1194, %v2642, 0.0
      %2655 = vadd.xlane.f32.xlu0 %v2654
      %v2656 = vpop.xlane.xlu0 %2655
      %v2657 = vsel %vm1194, %v2644, 0.0
      %2658 = vadd.xlane.f32.xlu0 %v2657
      %v2659 = vpop.xlane.xlu0 %2658
      %v2660 = vsel %vm1194, %v2646, 0.0
      %2661 = vadd.xlane.f32.xlu0 %v2660
      %v2662 = vpop.xlane.xlu0 %2661
      %v2663 = vsel %vm1194, %v2648, 0.0
      %2664 = vadd.xlane.f32.xlu0 %v2663
      %v2665 = vpop.xlane.xlu0 %2664
      %v2666 = vsel %vm1194, %v2650, 0.0
      %2667 = vadd.xlane.f32.xlu0 %v2666
      %v2668 = vpop.xlane.xlu0 %2667
      %v2669 = vrcp.pop %v2653
      %v2670 = vrcp.pop %v2656
      %v2671 = vrcp.pop %v2659
      %v2672 = vrcp.pop %v2662
      %v2673 = vrcp.pop %v2665
      %v2674 = vrcp.pop %v2668
      %v2675 = vmul.f32 %v2640, %v2669
      %v2676 = vmul.f32 %v2642, %v2670
      %v2677 = vmul.f32 %v2644, %v2671
      %v2678 = vmul.f32 %v2646, %v2672
      %v2679 = vmul.f32 %v2648, %v2673
      %v2680 = vmul.f32 %v2650, %v2674
      %v2681 = vmul.f32 %v2521, %v592
      %v2682 = vmul.f32 %v2524, %v592
      %v2683 = vmul.f32 %v2527, %v592
      %v2684 = vmul.f32 %v2530, %v592
      %v2685 = vmul.f32 %v2533, %v592
      %v2686 = vmul.f32 %v2536, %v592
      %2687 = vrot.lane.b32.xlu0 %v2486, 96
      %v2688 = vpop.permute.xlu0 %2687
      %2689 = vrot.lane.b32.xlu0 %v2489, 96
      %v2690 = vpop.permute.xlu0 %2689
      %2691 = vrot.lane.b32.xlu0 %v2492, 96
      %v2692 = vpop.permute.xlu0 %2691
      %2693 = vrot.lane.b32.xlu0 %v2495, 96
      %v2694 = vpop.permute.xlu0 %2693
      %2695 = vrot.lane.b32.xlu0 %v2498, 96
      %v2696 = vpop.permute.xlu0 %2695
      %2697 = vrot.lane.b32.xlu0 %v2501, 96
      %v2698 = vpop.permute.xlu0 %2697
      %2699 = vrot.lane.b32.xlu0 %v2486, 32
      %v2700 = vpop.permute.xlu0 %2699
      %2701 = vrot.lane.b32.xlu0 %v2489, 32
      %v2702 = vpop.permute.xlu0 %2701
      %2703 = vrot.lane.b32.xlu0 %v2492, 32
      %v2704 = vpop.permute.xlu0 %2703
      %2705 = vrot.lane.b32.xlu0 %v2495, 32
      %v2706 = vpop.permute.xlu0 %2705
      %2707 = vrot.lane.b32.xlu0 %v2498, 32
      %v2708 = vpop.permute.xlu0 %2707
      %2709 = vrot.lane.b32.xlu0 %v2501, 32
      %v2710 = vpop.permute.xlu0 %2709
      %v2711 = vsel %vm1134, %v2688, 0
      %v2713 = vsel %vm1134, %v2690, 0
      %v2715 = vsel %vm1134, %v2692, 0
      %v2717 = vsel %vm1134, %v2694, 0
      %v2719 = vsel %vm1134, %v2696, 0
      %v2721 = vsel %vm1134, %v2698, 0
      %v2723 = vsel %vm1134, %v2700, 0
      %v2725 = vsel %vm1134, %v2702, 0
      %v2727 = vsel %vm1134, %v2704, 0
      %v2729 = vsel %vm1134, %v2706, 0
      %v2731 = vsel %vm1134, %v2708, 0
      %v2733 = vsel %vm1134, %v2710, 0
      %2735 = vmatpush.xpose.msra.mxu0 0.0
      %2736 = vmatpush.xpose.msra.mxu0 0.0
      %2737 = vmatpush.xpose.msra.mxu0 0.0
      %2738 = vmatpush.xpose.msra.mxu0 0.0
      %2739 = vmatpush.xpose.msra.mxu0 0.0
      %2740 = vmatpush.xpose.msra.mxu0 0.0
      %2741 = vmatpush.xpose.msra.mxu0 0.0
      %2742 = vmatpush.xpose.msra.mxu0 0.0
      %2743 = vmatpush.xpose.msra.mxu0 0.0
      %2744 = vmatpush.xpose.msra.mxu0 0.0
      %2745 = vmatpush.xpose.msra.mxu0 %v2733
      %2746 = vmatpush.xpose.msra.mxu0 %v2731
      %2747 = vmatpush.xpose.msra.mxu0 %v2729
      %2748 = vmatpush.xpose.msra.mxu0 %v2727
      %2749 = vmatpush.xpose.msra.mxu0 %v2725
      %2750 = vmatpush.xpose.msra.mxu0 %v2723
      %2751 = vmatmul.f32.gmra.mxu0 %v2711
      %v2752 = vpop.f32.mrf.mxu0
      %v2753 = vadd.f32 %v847, %v2752
      %2754 = vmatmul.f32.gmra.mxu0 %v2713
      %v2755 = vpop.f32.mrf.mxu0
      %v2756 = vadd.f32 %v848, %v2755
      %2757 = vmatmul.f32.gmra.mxu0 %v2715
      %v2758 = vpop.f32.mrf.mxu0
      %v2759 = vadd.f32 %v849, %v2758
      %2760 = vmatmul.f32.gmra.mxu0 %v2717
      %v2761 = vpop.f32.mrf.mxu0
      %v2762 = vadd.f32 %v850, %v2761
      %2763 = vmatmul.f32.gmra.mxu0 %v2719
      %v2764 = vpop.f32.mrf.mxu0
      %v2765 = vadd.f32 %v851, %v2764
      %2766 = vmatmul.f32.gmra.mxu0 %v2721
      %v2767 = vpop.f32.mrf.mxu0
      %v2768 = vadd.f32 %v852, %v2767
      %2769 = vdwg.mxu0
      %v2770 = vsel %vm1194, %v2753, -inf
      %2771 = vmax.xlane.f32.xlu0 %v2770
      %v2772 = vpop.xlane.xlu0 %2771
      %v2773 = vsel %vm1194, %v2756, -inf
      %2774 = vmax.xlane.f32.xlu0 %v2773
      %v2775 = vpop.xlane.xlu0 %2774
      %v2776 = vsel %vm1194, %v2759, -inf
      %2777 = vmax.xlane.f32.xlu0 %v2776
      %v2778 = vpop.xlane.xlu0 %2777
      %v2779 = vsel %vm1194, %v2762, -inf
      %2780 = vmax.xlane.f32.xlu0 %v2779
      %v2781 = vpop.xlane.xlu0 %2780
      %v2782 = vsel %vm1194, %v2765, -inf
      %2783 = vmax.xlane.f32.xlu0 %v2782
      %v2784 = vpop.xlane.xlu0 %2783
      %v2785 = vsel %vm1194, %v2768, -inf
      %2786 = vmax.xlane.f32.xlu0 %v2785
      %v2787 = vpop.xlane.xlu0 %2786
      %v2788 = vsub.f32 %v2753, %v2772
      %v2789 = vsub.f32 %v2756, %v2775
      %v2790 = vsub.f32 %v2759, %v2778
      %v2791 = vsub.f32 %v2762, %v2781
      %v2792 = vsub.f32 %v2765, %v2784
      %v2793 = vsub.f32 %v2768, %v2787
      %v2794 = vmul.f32 %v2788, 1.442695
      %v2795 = vpow.pop %v2794
      %v2796 = vmul.f32 %v2789, 1.442695
      %v2797 = vpow.pop %v2796
      %v2798 = vmul.f32 %v2790, 1.442695
      %v2799 = vpow.pop %v2798
      %v2800 = vmul.f32 %v2791, 1.442695
      %v2801 = vpow.pop %v2800
      %v2802 = vmul.f32 %v2792, 1.442695
      %v2803 = vpow.pop %v2802
      %v2804 = vmul.f32 %v2793, 1.442695
      %v2805 = vpow.pop %v2804
      %v2806 = vsel %vm1194, %v2795, 0.0
      %2807 = vadd.xlane.f32.xlu0 %v2806
      %v2808 = vpop.xlane.xlu0 %2807
      %v2809 = vsel %vm1194, %v2797, 0.0
      %2810 = vadd.xlane.f32.xlu0 %v2809
      %v2811 = vpop.xlane.xlu0 %2810
      %v2812 = vsel %vm1194, %v2799, 0.0
      %2813 = vadd.xlane.f32.xlu0 %v2812
      %v2814 = vpop.xlane.xlu0 %2813
      %v2815 = vsel %vm1194, %v2801, 0.0
      %2816 = vadd.xlane.f32.xlu0 %v2815
      %v2817 = vpop.xlane.xlu0 %2816
      %v2818 = vsel %vm1194, %v2803, 0.0
      %2819 = vadd.xlane.f32.xlu0 %v2818
      %v2820 = vpop.xlane.xlu0 %2819
      %v2821 = vsel %vm1194, %v2805, 0.0
      %2822 = vadd.xlane.f32.xlu0 %v2821
      %v2823 = vpop.xlane.xlu0 %2822
      %v2824 = vrcp.pop %v2808
      %v2825 = vrcp.pop %v2811
      %v2826 = vrcp.pop %v2814
      %v2827 = vrcp.pop %v2817
      %v2828 = vrcp.pop %v2820
      %v2829 = vrcp.pop %v2823
      %v2830 = vmul.f32 %v2795, %v2824
      %v2831 = vmul.f32 %v2797, %v2825
      %v2832 = vmul.f32 %v2799, %v2826
      %v2833 = vmul.f32 %v2801, %v2827
      %v2834 = vmul.f32 %v2803, %v2828
      %v2835 = vmul.f32 %v2805, %v2829
      %v2836 = vmul.f32 %v2521, %v597
      %v2837 = vmul.f32 %v2524, %v597
      %v2838 = vmul.f32 %v2527, %v597
      %v2839 = vmul.f32 %v2530, %v597
      %v2840 = vmul.f32 %v2533, %v597
      %v2841 = vmul.f32 %v2536, %v597
      %v2843 = vsel %vm1194, %v2830, 0
      %v2846 = vsel %vm1194, %v2831, 0
      %v2849 = vsel %vm1194, %v2832, 0
      %v2852 = vsel %vm1194, %v2833, 0
      %v2855 = vsel %vm1194, %v2834, 0
      %v2858 = vsel %vm1194, %v2835, 0
      %2860 = vmatpush.msra.mxu0 0.0
      %2861 = vmatpush.msra.mxu0 0.0
      %2862 = vmatpush.msra.mxu0 0.0
      %2863 = vmatpush.msra.mxu0 0.0
      %2864 = vmatpush.msra.mxu0 0.0
      %2865 = vmatpush.msra.mxu0 0.0
      %2866 = vmatpush.msra.mxu0 0.0
      %2867 = vmatpush.msra.mxu0 0.0
      %2868 = vmatpush.msra.mxu0 0.0
      %2869 = vmatpush.msra.mxu0 0.0
      %2870 = vmatpush.msra.mxu0 %v2841
      %2871 = vmatpush.msra.mxu0 %v2840
      %2872 = vmatpush.msra.mxu0 %v2839
      %2873 = vmatpush.msra.mxu0 %v2838
      %2874 = vmatpush.msra.mxu0 %v2837
      %2875 = vmatpush.msra.mxu0 %v2836
      %2876 = vmatmul.f32.gmra.mxu0 %v2843
      %v2877 = vpop.f32.mrf.mxu0
      %v2878 = vadd.f32 0.0, %v2877
      %2879 = vmatmul.f32.gmra.mxu0 %v2846
      %v2880 = vpop.f32.mrf.mxu0
      %v2881 = vadd.f32 0.0, %v2880
      %2882 = vmatmul.f32.gmra.mxu0 %v2849
      %v2883 = vpop.f32.mrf.mxu0
      %v2884 = vadd.f32 0.0, %v2883
      %2885 = vmatmul.f32.gmra.mxu0 %v2852
      %v2886 = vpop.f32.mrf.mxu0
      %v2887 = vadd.f32 0.0, %v2886
      %2888 = vmatmul.f32.gmra.mxu0 %v2855
      %v2889 = vpop.f32.mrf.mxu0
      %v2890 = vadd.f32 0.0, %v2889
      %2891 = vmatmul.f32.gmra.mxu0 %v2858
      %v2892 = vpop.f32.mrf.mxu0
      %v2893 = vadd.f32 0.0, %v2892
      %2894 = vdwg.mxu0
      %v2896 = vsel %vm1194, %v2675, 0
      %v2899 = vsel %vm1194, %v2676, 0
      %v2902 = vsel %vm1194, %v2677, 0
      %v2905 = vsel %vm1194, %v2678, 0
      %v2908 = vsel %vm1194, %v2679, 0
      %v2911 = vsel %vm1194, %v2680, 0
      %2913 = vmatpush.msra.mxu0 0.0
      %2914 = vmatpush.msra.mxu0 0.0
      %2915 = vmatpush.msra.mxu0 0.0
      %2916 = vmatpush.msra.mxu0 0.0
      %2917 = vmatpush.msra.mxu0 0.0
      %2918 = vmatpush.msra.mxu0 0.0
      %2919 = vmatpush.msra.mxu0 0.0
      %2920 = vmatpush.msra.mxu0 0.0
      %2921 = vmatpush.msra.mxu0 0.0
      %2922 = vmatpush.msra.mxu0 0.0
      %2923 = vmatpush.msra.mxu0 %v2686
      %2924 = vmatpush.msra.mxu0 %v2685
      %2925 = vmatpush.msra.mxu0 %v2684
      %2926 = vmatpush.msra.mxu0 %v2683
      %2927 = vmatpush.msra.mxu0 %v2682
      %2928 = vmatpush.msra.mxu0 %v2681
      %2929 = vmatmul.f32.gmra.mxu0 %v2896
      %v2930 = vpop.f32.mrf.mxu0
      %v2931 = vadd.f32 %v2878, %v2930
      %2932 = vmatmul.f32.gmra.mxu0 %v2899
      %v2933 = vpop.f32.mrf.mxu0
      %v2934 = vadd.f32 %v2881, %v2933
      %2935 = vmatmul.f32.gmra.mxu0 %v2902
      %v2936 = vpop.f32.mrf.mxu0
      %v2937 = vadd.f32 %v2884, %v2936
      %2938 = vmatmul.f32.gmra.mxu0 %v2905
      %v2939 = vpop.f32.mrf.mxu0
      %v2940 = vadd.f32 %v2887, %v2939
      %2941 = vmatmul.f32.gmra.mxu0 %v2908
      %v2942 = vpop.f32.mrf.mxu0
      %v2943 = vadd.f32 %v2890, %v2942
      %2944 = vmatmul.f32.gmra.mxu0 %v2911
      %v2945 = vpop.f32.mrf.mxu0
      %v2946 = vadd.f32 %v2893, %v2945
      %2947 = vdwg.mxu0
      %s2948 = scalar_lea.vmem %s562, 64
      %v2949 = vld [vmem:[%s2948] sm:$0xff]
      %v2950 = vld [vmem:[%s2948 + $0x8] sm:$0xff]
      %v2951 = vld [vmem:[%s2948 + $0x10] sm:$0xff]
      %v2952 = vld [vmem:[%s2948 + $0x18] sm:$0xff]
      %v2953 = vld [vmem:[%s2948 + $0x20] sm:$0xff]
      %v2954 = vld [vmem:[%s2948 + $0x28] sm:$0xff]
      %v2955 = vld [vmem:[%s2948 + $0x30] sm:$0xff]
      %v2956 = vld [vmem:[%s2948 + $0x38] sm:$0xff]
      %v2958 = vsel %vm621, %v2931, 0
      %v2961 = vsel %vm621, %v2934, 0
      %v2964 = vsel %vm621, %v2937, 0
      %v2967 = vsel %vm621, %v2940, 0
      %v2970 = vsel %vm621, %v2943, 0
      %v2973 = vsel %vm621, %v2946, 0
      %2975 = vmatpush.msra.mxu0 0.0
      %2976 = vmatpush.msra.mxu0 0.0
      %2977 = vmatpush.msra.mxu0 0.0
      %2978 = vmatpush.msra.mxu0 0.0
      %2979 = vmatpush.msra.mxu0 0.0
      %2980 = vmatpush.msra.mxu0 0.0
      %2981 = vmatpush.msra.mxu0 0.0
      %2982 = vmatpush.msra.mxu0 0.0
      %2983 = vmatpush.msra.mxu0 %v2956
      %2984 = vmatpush.msra.mxu0 %v2955
      %2985 = vmatpush.msra.mxu0 %v2954
      %2986 = vmatpush.msra.mxu0 %v2953
      %2987 = vmatpush.msra.mxu0 %v2952
      %2988 = vmatpush.msra.mxu0 %v2951
      %2989 = vmatpush.msra.mxu0 %v2950
      %2990 = vmatpush.msra.mxu0 %v2949
      %2991 = vmatmul.f32.gmra.mxu0 %v2958
      %v2992 = vpop.f32.mrf.mxu0
      %v2993 = vadd.f32 0.0, %v2992
      %2994 = vmatmul.f32.gmra.mxu0 %v2961
      %v2995 = vpop.f32.mrf.mxu0
      %v2996 = vadd.f32 0.0, %v2995
      %2997 = vmatmul.f32.gmra.mxu0 %v2964
      %v2998 = vpop.f32.mrf.mxu0
      %v2999 = vadd.f32 0.0, %v2998
      %3000 = vmatmul.f32.gmra.mxu0 %v2967
      %v3001 = vpop.f32.mrf.mxu0
      %v3002 = vadd.f32 0.0, %v3001
      %3003 = vmatmul.f32.gmra.mxu0 %v2970
      %v3004 = vpop.f32.mrf.mxu0
      %v3005 = vadd.f32 0.0, %v3004
      %3006 = vmatmul.f32.gmra.mxu0 %v2973
      %v3007 = vpop.f32.mrf.mxu0
      %v3008 = vadd.f32 0.0, %v3007
      %3009 = vdwg.mxu0
      %v3010 = vadd.f32 %v2268, %v2993
      %v3011 = vadd.f32 %v2269, %v2996
      %v3012 = vadd.f32 %v2270, %v2999
      %v3013 = vadd.f32 %v2271, %v3002
      %v3014 = vadd.f32 %v2272, %v3005
      %v3015 = vadd.f32 %v2273, %v3008
      %v3016 = vadd.f32 %v3010, %v2278
      %v3017 = vadd.f32 %v3011, %v2278
      %v3018 = vadd.f32 %v3012, %v2278
      %v3019 = vadd.f32 %v3013, %v2278
      %v3020 = vadd.f32 %v3014, %v2278
      %v3021 = vadd.f32 %v3015, %v2278
      %v3022 = vsel %vm621, %v3016, 0.0
      %3023 = vadd.xlane.f32.xlu0 %v3022
      %v3024 = vpop.xlane.xlu0 %3023
      %v3025 = vsel %vm621, %v3017, 0.0
      %3026 = vadd.xlane.f32.xlu0 %v3025
      %v3027 = vpop.xlane.xlu0 %3026
      %v3028 = vsel %vm621, %v3018, 0.0
      %3029 = vadd.xlane.f32.xlu0 %v3028
      %v3030 = vpop.xlane.xlu0 %3029
      %v3031 = vsel %vm621, %v3019, 0.0
      %3032 = vadd.xlane.f32.xlu0 %v3031
      %v3033 = vpop.xlane.xlu0 %3032
      %v3034 = vsel %vm621, %v3020, 0.0
      %3035 = vadd.xlane.f32.xlu0 %v3034
      %v3036 = vpop.xlane.xlu0 %3035
      %v3037 = vsel %vm621, %v3021, 0.0
      %3038 = vadd.xlane.f32.xlu0 %v3037
      %v3039 = vpop.xlane.xlu0 %3038
      %v3040 = vmul.f32 %v3024, %v699
      %v3041 = vmul.f32 %v3027, %v699
      %v3042 = vmul.f32 %v3030, %v699
      %v3043 = vmul.f32 %v3033, %v699
      %v3044 = vmul.f32 %v3036, %v699
      %v3045 = vmul.f32 %v3039, %v699
      %v3046 = vsub.f32 %v3016, %v3040
      %v3047 = vsub.f32 %v3017, %v3041
      %v3048 = vsub.f32 %v3018, %v3042
      %v3049 = vsub.f32 %v3019, %v3043
      %v3050 = vsub.f32 %v3020, %v3044
      %v3051 = vsub.f32 %v3021, %v3045
      %v3052 = vmul.f32 %v3046, %v3046
      %v3053 = vmul.f32 %v3047, %v3047
      %v3054 = vmul.f32 %v3048, %v3048
      %v3055 = vmul.f32 %v3049, %v3049
      %v3056 = vmul.f32 %v3050, %v3050
      %v3057 = vmul.f32 %v3051, %v3051
      %v3058 = vsel %vm621, %v3052, 0.0
      %3059 = vadd.xlane.f32.xlu0 %v3058
      %v3060 = vpop.xlane.xlu0 %3059
      %v3061 = vsel %vm621, %v3053, 0.0
      %3062 = vadd.xlane.f32.xlu0 %v3061
      %v3063 = vpop.xlane.xlu0 %3062
      %v3064 = vsel %vm621, %v3054, 0.0
      %3065 = vadd.xlane.f32.xlu0 %v3064
      %v3066 = vpop.xlane.xlu0 %3065
      %v3067 = vsel %vm621, %v3055, 0.0
      %3068 = vadd.xlane.f32.xlu0 %v3067
      %v3069 = vpop.xlane.xlu0 %3068
      %v3070 = vsel %vm621, %v3056, 0.0
      %3071 = vadd.xlane.f32.xlu0 %v3070
      %v3072 = vpop.xlane.xlu0 %3071
      %v3073 = vsel %vm621, %v3057, 0.0
      %3074 = vadd.xlane.f32.xlu0 %v3073
      %v3075 = vpop.xlane.xlu0 %3074
      %v3076 = vmul.f32 %v3060, %v699
      %v3077 = vmul.f32 %v3063, %v699
      %v3078 = vmul.f32 %v3066, %v699
      %v3079 = vmul.f32 %v3069, %v699
      %v3080 = vmul.f32 %v3072, %v699
      %v3081 = vmul.f32 %v3075, %v699
      %v3082 = vadd.f32 %v3076, 1e-05
      %v3083 = vadd.f32 %v3077, 1e-05
      %v3084 = vadd.f32 %v3078, 1e-05
      %v3085 = vadd.f32 %v3079, 1e-05
      %v3086 = vadd.f32 %v3080, 1e-05
      %v3087 = vadd.f32 %v3081, 1e-05
      %v3088 = vrsqrt.pop %v3082
      %v3089 = vmul.f32 %v3088, %v3082
      %v3090 = vmul.f32 %v3089, %v3088
      %v3091 = vmul.f32 0.5, %v3090
      %v3092 = vsub.f32 1.5, %v3091
      %v3093 = vmul.f32 %v3088, %v3092
      %vm3094 = vweird.f32 %v3082
      %vm3095 = vweird.f32 %v3088
      %vm3096 = vmor %vm3094, %vm3095
      %v3097 = vsel %vm3096, %v3088, %v3093
      %v3098 = vrsqrt.pop %v3083
      %v3099 = vmul.f32 %v3098, %v3083
      %v3100 = vmul.f32 %v3099, %v3098
      %v3101 = vmul.f32 0.5, %v3100
      %v3102 = vsub.f32 1.5, %v3101
      %v3103 = vmul.f32 %v3098, %v3102
      %vm3104 = vweird.f32 %v3083
      %vm3105 = vweird.f32 %v3098
      %vm3106 = vmor %vm3104, %vm3105
      %v3107 = vsel %vm3106, %v3098, %v3103
      %v3108 = vrsqrt.pop %v3084
      %v3109 = vmul.f32 %v3108, %v3084
      %v3110 = vmul.f32 %v3109, %v3108
      %v3111 = vmul.f32 0.5, %v3110
      %v3112 = vsub.f32 1.5, %v3111
      %v3113 = vmul.f32 %v3108, %v3112
      %vm3114 = vweird.f32 %v3084
      %vm3115 = vweird.f32 %v3108
      %vm3116 = vmor %vm3114, %vm3115
      %v3117 = vsel %vm3116, %v3108, %v3113
      %v3118 = vrsqrt.pop %v3085
      %v3119 = vmul.f32 %v3118, %v3085
      %v3120 = vmul.f32 %v3119, %v3118
      %v3121 = vmul.f32 0.5, %v3120
      %v3122 = vsub.f32 1.5, %v3121
      %v3123 = vmul.f32 %v3118, %v3122
      %vm3124 = vweird.f32 %v3085
      %vm3125 = vweird.f32 %v3118
      %vm3126 = vmor %vm3124, %vm3125
      %v3127 = vsel %vm3126, %v3118, %v3123
      %v3128 = vrsqrt.pop %v3086
      %v3129 = vmul.f32 %v3128, %v3086
      %v3130 = vmul.f32 %v3129, %v3128
      %v3131 = vmul.f32 0.5, %v3130
      %v3132 = vsub.f32 1.5, %v3131
      %v3133 = vmul.f32 %v3128, %v3132
      %vm3134 = vweird.f32 %v3086
      %vm3135 = vweird.f32 %v3128
      %vm3136 = vmor %vm3134, %vm3135
      %v3137 = vsel %vm3136, %v3128, %v3133
      %v3138 = vrsqrt.pop %v3087
      %v3139 = vmul.f32 %v3138, %v3087
      %v3140 = vmul.f32 %v3139, %v3138
      %v3141 = vmul.f32 0.5, %v3140
      %v3142 = vsub.f32 1.5, %v3141
      %v3143 = vmul.f32 %v3138, %v3142
      %vm3144 = vweird.f32 %v3087
      %vm3145 = vweird.f32 %v3138
      %vm3146 = vmor %vm3144, %vm3145
      %v3147 = vsel %vm3146, %v3138, %v3143
      %v3148 = vmul.f32 %v3046, %v3097
      %v3149 = vmul.f32 %v3047, %v3107
      %v3150 = vmul.f32 %v3048, %v3117
      %v3151 = vmul.f32 %v3049, %v3127
      %v3152 = vmul.f32 %v3050, %v3137
      %v3153 = vmul.f32 %v3051, %v3147
      %v3154 = vmul.f32 %v3148, %v2279
      %v3155 = vmul.f32 %v3149, %v2279
      %v3156 = vmul.f32 %v3150, %v2279
      %v3157 = vmul.f32 %v3151, %v2279
      %v3158 = vmul.f32 %v3152, %v2279
      %v3159 = vmul.f32 %v3153, %v2279
      %v3160 = vadd.f32 %v3154, %v2280
      %v3161 = vadd.f32 %v3155, %v2280
      %v3162 = vadd.f32 %v3156, %v2280
      %v3163 = vadd.f32 %v3157, %v2280
      %v3164 = vadd.f32 %v3158, %v2280
      %v3165 = vadd.f32 %v3159, %v2280
      %s3166 = scalar_lea.vmem %s567, 128
      %v3167 = vld [vmem:[%s3166] sm:$0xff]
      %v3168 = vld [vmem:[%s3166 + $0x8] sm:$0xff]
      %v3169 = vld [vmem:[%s3166 + $0x10] sm:$0xff]
      %v3170 = vld [vmem:[%s3166 + $0x18] sm:$0xff]
      %v3171 = vld [vmem:[%s3166 + $0x20] sm:$0xff]
      %v3172 = vld [vmem:[%s3166 + $0x28] sm:$0xff]
      %v3173 = vld [vmem:[%s3166 + $0x30] sm:$0xff]
      %v3174 = vld [vmem:[%s3166 + $0x38] sm:$0xff]
      %v3175 = vld [vmem:[%s3166 + $0x40] sm:$0xff]
      %v3176 = vld [vmem:[%s3166 + $0x48] sm:$0xff]
      %v3177 = vld [vmem:[%s3166 + $0x50] sm:$0xff]
      %v3178 = vld [vmem:[%s3166 + $0x58] sm:$0xff]
      %v3179 = vld [vmem:[%s3166 + $0x60] sm:$0xff]
      %v3180 = vld [vmem:[%s3166 + $0x68] sm:$0xff]
      %v3181 = vld [vmem:[%s3166 + $0x70] sm:$0xff]
      %v3182 = vld [vmem:[%s3166 + $0x78] sm:$0xff]
      %v3184 = vperm.slane %v2282, 0
      %v3185 = vperm.slane %v2282, 1
      %v3189 = vsel %vm621, %v3160, 0
      %v3192 = vsel %vm621, %v3161, 0
      %v3195 = vsel %vm621, %v3162, 0
      %v3198 = vsel %vm621, %v3163, 0
      %v3201 = vsel %vm621, %v3164, 0
      %v3204 = vsel %vm621, %v3165, 0
      %3206 = vmatpush.msra.mxu0 0.0
      %3207 = vmatpush.msra.mxu0 0.0
      %3208 = vmatpush.msra.mxu0 0.0
      %3209 = vmatpush.msra.mxu0 0.0
      %3210 = vmatpush.msra.mxu0 0.0
      %3211 = vmatpush.msra.mxu0 0.0
      %3212 = vmatpush.msra.mxu0 0.0
      %3213 = vmatpush.msra.mxu0 0.0
      %3214 = vmatpush.msra.mxu0 %v3181
      %3215 = vmatpush.msra.mxu0 %v3179
      %3216 = vmatpush.msra.mxu0 %v3177
      %3217 = vmatpush.msra.mxu0 %v3175
      %3218 = vmatpush.msra.mxu0 %v3173
      %3219 = vmatpush.msra.mxu0 %v3171
      %3220 = vmatpush.msra.mxu0 %v3169
      %3221 = vmatpush.msra.mxu0 %v3167
      %3222 = vmatmul.f32.gmra.mxu0 %v3189
      %v3223 = vpop.f32.mrf.mxu0
      %v3224 = vadd.f32 %v3184, %v3223
      %3225 = vmatmul.f32.gmra.mxu0 %v3192
      %v3226 = vpop.f32.mrf.mxu0
      %v3227 = vadd.f32 %v3184, %v3226
      %3228 = vmatmul.f32.gmra.mxu0 %v3195
      %v3229 = vpop.f32.mrf.mxu0
      %v3230 = vadd.f32 %v3184, %v3229
      %3231 = vmatmul.f32.gmra.mxu0 %v3198
      %v3232 = vpop.f32.mrf.mxu0
      %v3233 = vadd.f32 %v3184, %v3232
      %3234 = vmatmul.f32.gmra.mxu0 %v3201
      %v3235 = vpop.f32.mrf.mxu0
      %v3236 = vadd.f32 %v3184, %v3235
      %3237 = vmatmul.f32.gmra.mxu0 %v3204
      %v3238 = vpop.f32.mrf.mxu0
      %v3239 = vadd.f32 %v3184, %v3238
      %3240 = vdwg.mxu0
      %3241 = vmatpush.msra.mxu0 0.0
      %3242 = vmatpush.msra.mxu0 0.0
      %3243 = vmatpush.msra.mxu0 0.0
      %3244 = vmatpush.msra.mxu0 0.0
      %3245 = vmatpush.msra.mxu0 0.0
      %3246 = vmatpush.msra.mxu0 0.0
      %3247 = vmatpush.msra.mxu0 0.0
      %3248 = vmatpush.msra.mxu0 0.0
      %3249 = vmatpush.msra.mxu0 %v3182
      %3250 = vmatpush.msra.mxu0 %v3180
      %3251 = vmatpush.msra.mxu0 %v3178
      %3252 = vmatpush.msra.mxu0 %v3176
      %3253 = vmatpush.msra.mxu0 %v3174
      %3254 = vmatpush.msra.mxu0 %v3172
      %3255 = vmatpush.msra.mxu0 %v3170
      %3256 = vmatpush.msra.mxu0 %v3168
      %3257 = vmatmul.f32.gmra.mxu0 %v3189
      %v3258 = vpop.f32.mrf.mxu0
      %v3259 = vadd.f32 %v3185, %v3258
      %3260 = vmatmul.f32.gmra.mxu0 %v3192
      %v3261 = vpop.f32.mrf.mxu0
      %v3262 = vadd.f32 %v3185, %v3261
      %3263 = vmatmul.f32.gmra.mxu0 %v3195
      %v3264 = vpop.f32.mrf.mxu0
      %v3265 = vadd.f32 %v3185, %v3264
      %3266 = vmatmul.f32.gmra.mxu0 %v3198
      %v3267 = vpop.f32.mrf.mxu0
      %v3268 = vadd.f32 %v3185, %v3267
      %3269 = vmatmul.f32.gmra.mxu0 %v3201
      %v3270 = vpop.f32.mrf.mxu0
      %v3271 = vadd.f32 %v3185, %v3270
      %3272 = vmatmul.f32.gmra.mxu0 %v3204
      %v3273 = vpop.f32.mrf.mxu0
      %v3274 = vadd.f32 %v3185, %v3273
      %3275 = vdwg.mxu0
      %v3276 = vmul.f32 %v3224, 0.5
      %v3277 = vmul.f32 %v3259, 0.5
      %v3278 = vmul.f32 %v3227, 0.5
      %v3279 = vmul.f32 %v3262, 0.5
      %v3280 = vmul.f32 %v3230, 0.5
      %v3281 = vmul.f32 %v3265, 0.5
      %v3282 = vmul.f32 %v3233, 0.5
      %v3283 = vmul.f32 %v3268, 0.5
      %v3284 = vmul.f32 %v3236, 0.5
      %v3285 = vmul.f32 %v3271, 0.5
      %v3286 = vmul.f32 %v3239, 0.5
      %v3287 = vmul.f32 %v3274, 0.5
      %v3288 = vmul.f32 %v3224, 0.70710677
      %v3289 = vmul.f32 %v3259, 0.70710677
      %v3290 = vmul.f32 %v3227, 0.70710677
      %v3291 = vmul.f32 %v3262, 0.70710677
      %v3292 = vmul.f32 %v3230, 0.70710677
      %v3293 = vmul.f32 %v3265, 0.70710677
      %v3294 = vmul.f32 %v3233, 0.70710677
      %v3295 = vmul.f32 %v3268, 0.70710677
      %v3296 = vmul.f32 %v3236, 0.70710677
      %v3297 = vmul.f32 %v3271, 0.70710677
      %v3298 = vmul.f32 %v3239, 0.70710677
      %v3299 = vmul.f32 %v3274, 0.70710677
      %vm3300 = vcmp.ge.f32.partialorder %v3288, 0.0
      %vm3301 = vcmp.ge.f32.partialorder %v3289, 0.0
      %vm3302 = vcmp.ge.f32.partialorder %v3290, 0.0
      %vm3303 = vcmp.ge.f32.partialorder %v3291, 0.0
      %vm3304 = vcmp.ge.f32.partialorder %v3292, 0.0
      %vm3305 = vcmp.ge.f32.partialorder %v3293, 0.0
      %vm3306 = vcmp.ge.f32.partialorder %v3294, 0.0
      %vm3307 = vcmp.ge.f32.partialorder %v3295, 0.0
      %vm3308 = vcmp.ge.f32.partialorder %v3296, 0.0
      %vm3309 = vcmp.ge.f32.partialorder %v3297, 0.0
      %vm3310 = vcmp.ge.f32.partialorder %v3298, 0.0
      %vm3311 = vcmp.ge.f32.partialorder %v3299, 0.0
      %v3312 = vsel %vm3300, 1.0, -1.0
      %v3313 = vsel %vm3301, 1.0, -1.0
      %v3314 = vsel %vm3302, 1.0, -1.0
      %v3315 = vsel %vm3303, 1.0, -1.0
      %v3316 = vsel %vm3304, 1.0, -1.0
      %v3317 = vsel %vm3305, 1.0, -1.0
      %v3318 = vsel %vm3306, 1.0, -1.0
      %v3319 = vsel %vm3307, 1.0, -1.0
      %v3320 = vsel %vm3308, 1.0, -1.0
      %v3321 = vsel %vm3309, 1.0, -1.0
      %v3322 = vsel %vm3310, 1.0, -1.0
      %v3323 = vsel %vm3311, 1.0, -1.0
      %v3324 = vand.u32 2147483647, %v3288
      %v3325 = vand.u32 2147483647, %v3289
      %v3326 = vand.u32 2147483647, %v3290
      %v3327 = vand.u32 2147483647, %v3291
      %v3328 = vand.u32 2147483647, %v3292
      %v3329 = vand.u32 2147483647, %v3293
      %v3330 = vand.u32 2147483647, %v3294
      %v3331 = vand.u32 2147483647, %v3295
      %v3332 = vand.u32 2147483647, %v3296
      %v3333 = vand.u32 2147483647, %v3297
      %v3334 = vand.u32 2147483647, %v3298
      %v3335 = vand.u32 2147483647, %v3299
      %v3336 = vmul.f32 %v3324, 0.3275911
      %v3337 = vmul.f32 %v3325, 0.3275911
      %v3338 = vmul.f32 %v3326, 0.3275911
      %v3339 = vmul.f32 %v3327, 0.3275911
      %v3340 = vmul.f32 %v3328, 0.3275911
      %v3341 = vmul.f32 %v3329, 0.3275911
      %v3342 = vmul.f32 %v3330, 0.3275911
      %v3343 = vmul.f32 %v3331, 0.3275911
      %v3344 = vmul.f32 %v3332, 0.3275911
      %v3345 = vmul.f32 %v3333, 0.3275911
      %v3346 = vmul.f32 %v3334, 0.3275911
      %v3347 = vmul.f32 %v3335, 0.3275911
      %v3348 = vadd.f32 %v3336, 1.0
      %v3349 = vadd.f32 %v3337, 1.0
      %v3350 = vadd.f32 %v3338, 1.0
      %v3351 = vadd.f32 %v3339, 1.0
      %v3352 = vadd.f32 %v3340, 1.0
      %v3353 = vadd.f32 %v3341, 1.0
      %v3354 = vadd.f32 %v3342, 1.0
      %v3355 = vadd.f32 %v3343, 1.0
      %v3356 = vadd.f32 %v3344, 1.0
      %v3357 = vadd.f32 %v3345, 1.0
      %v3358 = vadd.f32 %v3346, 1.0
      %v3359 = vadd.f32 %v3347, 1.0
      %v3360 = vrcp.pop %v3348
      %v3361 = vrcp.pop %v3349
      %v3362 = vrcp.pop %v3350
      %v3363 = vrcp.pop %v3351
      %v3364 = vrcp.pop %v3352
      %v3365 = vrcp.pop %v3353
      %v3366 = vrcp.pop %v3354
      %v3367 = vrcp.pop %v3355
      %v3368 = vrcp.pop %v3356
      %v3369 = vrcp.pop %v3357
      %v3370 = vrcp.pop %v3358
      %v3371 = vrcp.pop %v3359
      %v3372 = vmul.f32 %v3360, 1.0614054
      %v3373 = vmul.f32 %v3361, 1.0614054
      %v3374 = vmul.f32 %v3362, 1.0614054
      %v3375 = vmul.f32 %v3363, 1.0614054
      %v3376 = vmul.f32 %v3364, 1.0614054
      %v3377 = vmul.f32 %v3365, 1.0614054
      %v3378 = vmul.f32 %v3366, 1.0614054
      %v3379 = vmul.f32 %v3367, 1.0614054
      %v3380 = vmul.f32 %v3368, 1.0614054
      %v3381 = vmul.f32 %v3369, 1.0614054
      %v3382 = vmul.f32 %v3370, 1.0614054
      %v3383 = vmul.f32 %v3371, 1.0614054
      %v3384 = vadd.f32 %v3372, -1.4531521
      %v3385 = vadd.f32 %v3373, -1.4531521
      %v3386 = vadd.f32 %v3374, -1.4531521
      %v3387 = vadd.f32 %v3375, -1.4531521
      %v3388 = vadd.f32 %v3376, -1.4531521
      %v3389 = vadd.f32 %v3377, -1.4531521
      %v3390 = vadd.f32 %v3378, -1.4531521
      %v3391 = vadd.f32 %v3379, -1.4531521
      %v3392 = vadd.f32 %v3380, -1.4531521
      %v3393 = vadd.f32 %v3381, -1.4531521
      %v3394 = vadd.f32 %v3382, -1.4531521
      %v3395 = vadd.f32 %v3383, -1.4531521
      %v3396 = vmul.f32 %v3384, %v3360
      %v3397 = vmul.f32 %v3385, %v3361
      %v3398 = vmul.f32 %v3386, %v3362
      %v3399 = vmul.f32 %v3387, %v3363
      %v3400 = vmul.f32 %v3388, %v3364
      %v3401 = vmul.f32 %v3389, %v3365
      %v3402 = vmul.f32 %v3390, %v3366
      %v3403 = vmul.f32 %v3391, %v3367
      %v3404 = vmul.f32 %v3392, %v3368
      %v3405 = vmul.f32 %v3393, %v3369
      %v3406 = vmul.f32 %v3394, %v3370
      %v3407 = vmul.f32 %v3395, %v3371
      %v3408 = vadd.f32 %v3396, 1.4214138
      %v3409 = vadd.f32 %v3397, 1.4214138
      %v3410 = vadd.f32 %v3398, 1.4214138
      %v3411 = vadd.f32 %v3399, 1.4214138
      %v3412 = vadd.f32 %v3400, 1.4214138
      %v3413 = vadd.f32 %v3401, 1.4214138
      %v3414 = vadd.f32 %v3402, 1.4214138
      %v3415 = vadd.f32 %v3403, 1.4214138
      %v3416 = vadd.f32 %v3404, 1.4214138
      %v3417 = vadd.f32 %v3405, 1.4214138
      %v3418 = vadd.f32 %v3406, 1.4214138
      %v3419 = vadd.f32 %v3407, 1.4214138
      %v3420 = vmul.f32 %v3408, %v3360
      %v3421 = vmul.f32 %v3409, %v3361
      %v3422 = vmul.f32 %v3410, %v3362
      %v3423 = vmul.f32 %v3411, %v3363
      %v3424 = vmul.f32 %v3412, %v3364
      %v3425 = vmul.f32 %v3413, %v3365
      %v3426 = vmul.f32 %v3414, %v3366
      %v3427 = vmul.f32 %v3415, %v3367
      %v3428 = vmul.f32 %v3416, %v3368
      %v3429 = vmul.f32 %v3417, %v3369
      %v3430 = vmul.f32 %v3418, %v3370
      %v3431 = vmul.f32 %v3419, %v3371
      %v3432 = vadd.f32 %v3420, -0.28449672
      %v3433 = vadd.f32 %v3421, -0.28449672
      %v3434 = vadd.f32 %v3422, -0.28449672
      %v3435 = vadd.f32 %v3423, -0.28449672
      %v3436 = vadd.f32 %v3424, -0.28449672
      %v3437 = vadd.f32 %v3425, -0.28449672
      %v3438 = vadd.f32 %v3426, -0.28449672
      %v3439 = vadd.f32 %v3427, -0.28449672
      %v3440 = vadd.f32 %v3428, -0.28449672
      %v3441 = vadd.f32 %v3429, -0.28449672
      %v3442 = vadd.f32 %v3430, -0.28449672
      %v3443 = vadd.f32 %v3431, -0.28449672
      %v3444 = vmul.f32 %v3432, %v3360
      %v3445 = vmul.f32 %v3433, %v3361
      %v3446 = vmul.f32 %v3434, %v3362
      %v3447 = vmul.f32 %v3435, %v3363
      %v3448 = vmul.f32 %v3436, %v3364
      %v3449 = vmul.f32 %v3437, %v3365
      %v3450 = vmul.f32 %v3438, %v3366
      %v3451 = vmul.f32 %v3439, %v3367
      %v3452 = vmul.f32 %v3440, %v3368
      %v3453 = vmul.f32 %v3441, %v3369
      %v3454 = vmul.f32 %v3442, %v3370
      %v3455 = vmul.f32 %v3443, %v3371
      %v3456 = vadd.f32 %v3444, 0.2548296
      %v3457 = vadd.f32 %v3445, 0.2548296
      %v3458 = vadd.f32 %v3446, 0.2548296
      %v3459 = vadd.f32 %v3447, 0.2548296
      %v3460 = vadd.f32 %v3448, 0.2548296
      %v3461 = vadd.f32 %v3449, 0.2548296
      %v3462 = vadd.f32 %v3450, 0.2548296
      %v3463 = vadd.f32 %v3451, 0.2548296
      %v3464 = vadd.f32 %v3452, 0.2548296
      %v3465 = vadd.f32 %v3453, 0.2548296
      %v3466 = vadd.f32 %v3454, 0.2548296
      %v3467 = vadd.f32 %v3455, 0.2548296
      %v3468 = vmul.f32 %v3456, %v3360
      %v3469 = vmul.f32 %v3457, %v3361
      %v3470 = vmul.f32 %v3458, %v3362
      %v3471 = vmul.f32 %v3459, %v3363
      %v3472 = vmul.f32 %v3460, %v3364
      %v3473 = vmul.f32 %v3461, %v3365
      %v3474 = vmul.f32 %v3462, %v3366
      %v3475 = vmul.f32 %v3463, %v3367
      %v3476 = vmul.f32 %v3464, %v3368
      %v3477 = vmul.f32 %v3465, %v3369
      %v3478 = vmul.f32 %v3466, %v3370
      %v3479 = vmul.f32 %v3467, %v3371
      %v3480 = vsub.f32 0.0, %v3324
      %v3481 = vsub.f32 0.0, %v3325
      %v3482 = vsub.f32 0.0, %v3326
      %v3483 = vsub.f32 0.0, %v3327
      %v3484 = vsub.f32 0.0, %v3328
      %v3485 = vsub.f32 0.0, %v3329
      %v3486 = vsub.f32 0.0, %v3330
      %v3487 = vsub.f32 0.0, %v3331
      %v3488 = vsub.f32 0.0, %v3332
      %v3489 = vsub.f32 0.0, %v3333
      %v3490 = vsub.f32 0.0, %v3334
      %v3491 = vsub.f32 0.0, %v3335
      %v3492 = vmul.f32 %v3480, %v3324
      %v3493 = vmul.f32 %v3481, %v3325
      %v3494 = vmul.f32 %v3482, %v3326
      %v3495 = vmul.f32 %v3483, %v3327
      %v3496 = vmul.f32 %v3484, %v3328
      %v3497 = vmul.f32 %v3485, %v3329
      %v3498 = vmul.f32 %v3486, %v3330
      %v3499 = vmul.f32 %v3487, %v3331
      %v3500 = vmul.f32 %v3488, %v3332
      %v3501 = vmul.f32 %v3489, %v3333
      %v3502 = vmul.f32 %v3490, %v3334
      %v3503 = vmul.f32 %v3491, %v3335
      %v3504 = vmul.f32 %v3492, 1.442695
      %v3505 = vpow.pop %v3504
      %v3506 = vmul.f32 %v3493, 1.442695
      %v3507 = vpow.pop %v3506
      %v3508 = vmul.f32 %v3494, 1.442695
      %v3509 = vpow.pop %v3508
      %v3510 = vmul.f32 %v3495, 1.442695
      %v3511 = vpow.pop %v3510
      %v3512 = vmul.f32 %v3496, 1.442695
      %v3513 = vpow.pop %v3512
      %v3514 = vmul.f32 %v3497, 1.442695
      %v3515 = vpow.pop %v3514
      %v3516 = vmul.f32 %v3498, 1.442695
      %v3517 = vpow.pop %v3516
      %v3518 = vmul.f32 %v3499, 1.442695
      %v3519 = vpow.pop %v3518
      %v3520 = vmul.f32 %v3500, 1.442695
      %v3521 = vpow.pop %v3520
      %v3522 = vmul.f32 %v3501, 1.442695
      %v3523 = vpow.pop %v3522
      %v3524 = vmul.f32 %v3502, 1.442695
      %v3525 = vpow.pop %v3524
      %v3526 = vmul.f32 %v3503, 1.442695
      %v3527 = vpow.pop %v3526
      %v3528 = vmul.f32 %v3468, %v3505
      %v3529 = vmul.f32 %v3469, %v3507
      %v3530 = vmul.f32 %v3470, %v3509
      %v3531 = vmul.f32 %v3471, %v3511
      %v3532 = vmul.f32 %v3472, %v3513
      %v3533 = vmul.f32 %v3473, %v3515
      %v3534 = vmul.f32 %v3474, %v3517
      %v3535 = vmul.f32 %v3475, %v3519
      %v3536 = vmul.f32 %v3476, %v3521
      %v3537 = vmul.f32 %v3477, %v3523
      %v3538 = vmul.f32 %v3478, %v3525
      %v3539 = vmul.f32 %v3479, %v3527
      %v3540 = vsub.f32 1.0, %v3528
      %v3541 = vsub.f32 1.0, %v3529
      %v3542 = vsub.f32 1.0, %v3530
      %v3543 = vsub.f32 1.0, %v3531
      %v3544 = vsub.f32 1.0, %v3532
      %v3545 = vsub.f32 1.0, %v3533
      %v3546 = vsub.f32 1.0, %v3534
      %v3547 = vsub.f32 1.0, %v3535
      %v3548 = vsub.f32 1.0, %v3536
      %v3549 = vsub.f32 1.0, %v3537
      %v3550 = vsub.f32 1.0, %v3538
      %v3551 = vsub.f32 1.0, %v3539
      %v3552 = vmul.f32 %v3312, %v3540
      %v3553 = vmul.f32 %v3313, %v3541
      %v3554 = vmul.f32 %v3314, %v3542
      %v3555 = vmul.f32 %v3315, %v3543
      %v3556 = vmul.f32 %v3316, %v3544
      %v3557 = vmul.f32 %v3317, %v3545
      %v3558 = vmul.f32 %v3318, %v3546
      %v3559 = vmul.f32 %v3319, %v3547
      %v3560 = vmul.f32 %v3320, %v3548
      %v3561 = vmul.f32 %v3321, %v3549
      %v3562 = vmul.f32 %v3322, %v3550
      %v3563 = vmul.f32 %v3323, %v3551
      %v3564 = vadd.f32 %v3552, 1.0
      %v3565 = vadd.f32 %v3553, 1.0
      %v3566 = vadd.f32 %v3554, 1.0
      %v3567 = vadd.f32 %v3555, 1.0
      %v3568 = vadd.f32 %v3556, 1.0
      %v3569 = vadd.f32 %v3557, 1.0
      %v3570 = vadd.f32 %v3558, 1.0
      %v3571 = vadd.f32 %v3559, 1.0
      %v3572 = vadd.f32 %v3560, 1.0
      %v3573 = vadd.f32 %v3561, 1.0
      %v3574 = vadd.f32 %v3562, 1.0
      %v3575 = vadd.f32 %v3563, 1.0
      %v3576 = vmul.f32 %v3276, %v3564
      %v3577 = vmul.f32 %v3277, %v3565
      %v3578 = vmul.f32 %v3278, %v3566
      %v3579 = vmul.f32 %v3279, %v3567
      %v3580 = vmul.f32 %v3280, %v3568
      %v3581 = vmul.f32 %v3281, %v3569
      %v3582 = vmul.f32 %v3282, %v3570
      %v3583 = vmul.f32 %v3283, %v3571
      %v3584 = vmul.f32 %v3284, %v3572
      %v3585 = vmul.f32 %v3285, %v3573
      %v3586 = vmul.f32 %v3286, %v3574
      %v3587 = vmul.f32 %v3287, %v3575
      %s3588 = scalar_lea.vmem %s572, 256
      %v3589 = vld [vmem:[%s3588] sm:$0xff]
      %v3590 = vld [vmem:[%s3588 + $0x8] sm:$0xff]
      %v3591 = vld [vmem:[%s3588 + $0x10] sm:$0xff]
      %v3592 = vld [vmem:[%s3588 + $0x18] sm:$0xff]
      %v3593 = vld [vmem:[%s3588 + $0x20] sm:$0xff]
      %v3594 = vld [vmem:[%s3588 + $0x28] sm:$0xff]
      %v3595 = vld [vmem:[%s3588 + $0x30] sm:$0xff]
      %v3596 = vld [vmem:[%s3588 + $0x38] sm:$0xff]
      %v3597 = vld [vmem:[%s3588 + $0x40] sm:$0xff]
      %v3598 = vld [vmem:[%s3588 + $0x48] sm:$0xff]
      %v3599 = vld [vmem:[%s3588 + $0x50] sm:$0xff]
      %v3600 = vld [vmem:[%s3588 + $0x58] sm:$0xff]
      %v3601 = vld [vmem:[%s3588 + $0x60] sm:$0xff]
      %v3602 = vld [vmem:[%s3588 + $0x68] sm:$0xff]
      %v3603 = vld [vmem:[%s3588 + $0x70] sm:$0xff]
      %v3604 = vld [vmem:[%s3588 + $0x78] sm:$0xff]
      %v3605 = vld [vmem:[%s3588 + $0x80] sm:$0xff]
      %v3606 = vld [vmem:[%s3588 + $0x88] sm:$0xff]
      %v3607 = vld [vmem:[%s3588 + $0x90] sm:$0xff]
      %v3608 = vld [vmem:[%s3588 + $0x98] sm:$0xff]
      %v3609 = vld [vmem:[%s3588 + $0xa0] sm:$0xff]
      %v3610 = vld [vmem:[%s3588 + $0xa8] sm:$0xff]
      %v3611 = vld [vmem:[%s3588 + $0xb0] sm:$0xff]
      %v3612 = vld [vmem:[%s3588 + $0xb8] sm:$0xff]
      %v3613 = vld [vmem:[%s3588 + $0xc0] sm:$0xff]
      %v3614 = vld [vmem:[%s3588 + $0xc8] sm:$0xff]
      %v3615 = vld [vmem:[%s3588 + $0xd0] sm:$0xff]
      %v3616 = vld [vmem:[%s3588 + $0xd8] sm:$0xff]
      %v3617 = vld [vmem:[%s3588 + $0xe0] sm:$0xff]
      %v3618 = vld [vmem:[%s3588 + $0xe8] sm:$0xff]
      %v3619 = vld [vmem:[%s3588 + $0xf0] sm:$0xff]
      %v3620 = vld [vmem:[%s3588 + $0xf8] sm:$0xff]
      %3621 = vmatpush.msra.mxu0 %v3604
      %3622 = vmatpush.msra.mxu0 %v3603
      %3623 = vmatpush.msra.mxu0 %v3602
      %3624 = vmatpush.msra.mxu0 %v3601
      %3625 = vmatpush.msra.mxu0 %v3600
      %3626 = vmatpush.msra.mxu0 %v3599
      %3627 = vmatpush.msra.mxu0 %v3598
      %3628 = vmatpush.msra.mxu0 %v3597
      %3629 = vmatpush.msra.mxu0 %v3596
      %3630 = vmatpush.msra.mxu0 %v3595
      %3631 = vmatpush.msra.mxu0 %v3594
      %3632 = vmatpush.msra.mxu0 %v3593
      %3633 = vmatpush.msra.mxu0 %v3592
      %3634 = vmatpush.msra.mxu0 %v3591
      %3635 = vmatpush.msra.mxu0 %v3590
      %3636 = vmatpush.msra.mxu0 %v3589
      %3637 = vmatmul.f32.gmra.mxu0 %v3576
      %v3638 = vpop.f32.mrf.mxu0
      %v3639 = vadd.f32 %v2283, %v3638
      %3640 = vmatmul.f32.gmra.mxu0 %v3578
      %v3641 = vpop.f32.mrf.mxu0
      %v3642 = vadd.f32 %v2283, %v3641
      %3643 = vmatmul.f32.gmra.mxu0 %v3580
      %v3644 = vpop.f32.mrf.mxu0
      %v3645 = vadd.f32 %v2283, %v3644
      %3646 = vmatmul.f32.gmra.mxu0 %v3582
      %v3647 = vpop.f32.mrf.mxu0
      %v3648 = vadd.f32 %v2283, %v3647
      %3649 = vmatmul.f32.gmra.mxu0 %v3584
      %v3650 = vpop.f32.mrf.mxu0
      %v3651 = vadd.f32 %v2283, %v3650
      %3652 = vmatmul.f32.gmra.mxu0 %v3586
      %v3653 = vpop.f32.mrf.mxu0
      %v3654 = vadd.f32 %v2283, %v3653
      %3655 = vdwg.mxu0
      %3656 = vmatpush.msra.mxu0 %v3620
      %3657 = vmatpush.msra.mxu0 %v3619
      %3658 = vmatpush.msra.mxu0 %v3618
      %3659 = vmatpush.msra.mxu0 %v3617
      %3660 = vmatpush.msra.mxu0 %v3616
      %3661 = vmatpush.msra.mxu0 %v3615
      %3662 = vmatpush.msra.mxu0 %v3614
      %3663 = vmatpush.msra.mxu0 %v3613
      %3664 = vmatpush.msra.mxu0 %v3612
      %3665 = vmatpush.msra.mxu0 %v3611
      %3666 = vmatpush.msra.mxu0 %v3610
      %3667 = vmatpush.msra.mxu0 %v3609
      %3668 = vmatpush.msra.mxu0 %v3608
      %3669 = vmatpush.msra.mxu0 %v3607
      %3670 = vmatpush.msra.mxu0 %v3606
      %3671 = vmatpush.msra.mxu0 %v3605
      %3672 = vmatmul.f32.gmra.mxu0 %v3577
      %v3673 = vpop.f32.mrf.mxu0
      %v3674 = vadd.f32 %v3639, %v3673
      %3675 = vmatmul.f32.gmra.mxu0 %v3579
      %v3676 = vpop.f32.mrf.mxu0
      %v3677 = vadd.f32 %v3642, %v3676
      %3678 = vmatmul.f32.gmra.mxu0 %v3581
      %v3679 = vpop.f32.mrf.mxu0
      %v3680 = vadd.f32 %v3645, %v3679
      %3681 = vmatmul.f32.gmra.mxu0 %v3583
      %v3682 = vpop.f32.mrf.mxu0
      %v3683 = vadd.f32 %v3648, %v3682
      %3684 = vmatmul.f32.gmra.mxu0 %v3585
      %v3685 = vpop.f32.mrf.mxu0
      %v3686 = vadd.f32 %v3651, %v3685
      %3687 = vmatmul.f32.gmra.mxu0 %v3587
      %v3688 = vpop.f32.mrf.mxu0
      %v3689 = vadd.f32 %v3654, %v3688
      %3690 = vdwg.mxu0
      %v3691 = vadd.f32 %v3016, %v3674
      %v3692 = vadd.f32 %v3017, %v3677
      %v3693 = vadd.f32 %v3018, %v3680
      %v3694 = vadd.f32 %v3019, %v3683
      %v3695 = vadd.f32 %v3020, %v3686
      %v3696 = vadd.f32 %v3021, %v3689
      %v3697 = vld [vmem:[%s537] sm:$0x3]
      %v3699 = vsel %vm1194, %v3697, 0
      %3701 = vmatpush.msra.mxu0 0.0
      %3702 = vmatpush.msra.mxu0 0.0
      %3703 = vmatpush.msra.mxu0 0.0
      %3704 = vmatpush.msra.mxu0 0.0
      %3705 = vmatpush.msra.mxu0 0.0
      %3706 = vmatpush.msra.mxu0 0.0
      %3707 = vmatpush.msra.mxu0 0.0
      %3708 = vmatpush.msra.mxu0 0.0
      %3709 = vmatpush.msra.mxu0 0.0
      %3710 = vmatpush.msra.mxu0 0.0
      %3711 = vmatpush.msra.mxu0 %v3696
      %3712 = vmatpush.msra.mxu0 %v3695
      %3713 = vmatpush.msra.mxu0 %v3694
      %3714 = vmatpush.msra.mxu0 %v3693
      %3715 = vmatpush.msra.mxu0 %v3692
      %3716 = vmatpush.msra.mxu0 %v3691
      %3717 = vmatmul.f32.gmra.mxu0 %v3699
      %v3718 = vpop.f32.mrf.mxu0
      %v3719 = vadd.f32 0.0, %v3718
      %3720 = vdwg.mxu0
      %vm3721 = vcmask 517120
      %v3722 = vsel %vm3721, %v3719, 0.0
      %3723 = vadd.xlane.f32.xlu0 %v3722
      %v3724 = vpop.xlane.xlu0 %3723
      %v3725 = vmul.f32 %v3724, %v699
      %v3726 = vsub.f32 %v3719, %v3725
      %v3727 = vmul.f32 %v3726, %v3726
      %v3728 = vsel %vm3721, %v3727, 0.0
      %3729 = vadd.xlane.f32.xlu0 %v3728
      %v3730 = vpop.xlane.xlu0 %3729
      %v3731 = vmul.f32 %v3730, %v699
      %v3732 = vadd.f32 %v3731, 1e-05
      %v3733 = vrsqrt.pop %v3732
      %v3734 = vmul.f32 %v3733, %v3732
      %v3735 = vmul.f32 %v3734, %v3733
      %v3736 = vmul.f32 0.5, %v3735
      %v3737 = vsub.f32 1.5, %v3736
      %v3738 = vmul.f32 %v3733, %v3737
      %vm3739 = vweird.f32 %v3732
      %vm3740 = vweird.f32 %v3733
      %vm3741 = vmor %vm3739, %vm3740
      %v3742 = vsel %vm3741, %v3733, %v3738
      %v3743 = vmul.f32 %v3726, %v3742
      %v3744 = vmul.f32 %v3743, %v584
      %v3745 = vadd.f32 %v3744, %v585
      %v3746 = vld [vmem:[%s577] sm:$0xff]
      %v3747 = vld [vmem:[%s577 + $0x8] sm:$0xff]
      %v3748 = vld [vmem:[%s577 + $0x10] sm:$0xff]
      %v3749 = vld [vmem:[%s577 + $0x18] sm:$0xff]
      %v3750 = vld [vmem:[%s577 + $0x20] sm:$0xff]
      %v3751 = vld [vmem:[%s577 + $0x28] sm:$0xff]
      %v3752 = vld [vmem:[%s577 + $0x30] sm:$0xff]
      %v3753 = vld [vmem:[%s577 + $0x38] sm:$0xff]
      %v3755 = vsel %vm621, %v3745, 0
      %3757 = vmatpush.msra.mxu0 0.0
      %3758 = vmatpush.msra.mxu0 0.0
      %3759 = vmatpush.msra.mxu0 0.0
      %3760 = vmatpush.msra.mxu0 0.0
      %3761 = vmatpush.msra.mxu0 0.0
      %3762 = vmatpush.msra.mxu0 0.0
      %3763 = vmatpush.msra.mxu0 0.0
      %3764 = vmatpush.msra.mxu0 0.0
      %3765 = vmatpush.msra.mxu0 %v3753
      %3766 = vmatpush.msra.mxu0 %v3752
      %3767 = vmatpush.msra.mxu0 %v3751
      %3768 = vmatpush.msra.mxu0 %v3750
      %3769 = vmatpush.msra.mxu0 %v3749
      %3770 = vmatpush.msra.mxu0 %v3748
      %3771 = vmatpush.msra.mxu0 %v3747
      %3772 = vmatpush.msra.mxu0 %v3746
      %3773 = vmatmul.f32.gmra.mxu0 %v3755
      %v3774 = vpop.f32.mrf.mxu0
      %v3775 = vadd.f32 0.0, %v3774
      %3776 = vdwg.mxu0
      %v3777 = vmul.f32 %v3775, %v3775
      %vm3778 = vcmask 1041408
      %v3779 = vsel %vm3778, %v3777, 0.0
      %3780 = vadd.xlane.f32.xlu0 %v3779
      %v3781 = vpop.xlane.xlu0 %3780
      %v3782 = vmax.f32 %v3781, 1e-24
      %v3783 = vrsqrt.pop %v3782
      %v3784 = vmul.f32 %v3783, %v3782
      %v3785 = vmul.f32 %v3784, %v3783
      %v3786 = vmul.f32 0.5, %v3785
      %v3787 = vsub.f32 1.5, %v3786
      %v3788 = vmul.f32 %v3783, %v3787
      %vm3789 = vweird.f32 %v3782
      %vm3790 = vweird.f32 %v3783
      %vm3791 = vmor %vm3789, %vm3790
      %v3792 = vsel %vm3791, %v3783, %v3788
      %v3793 = vmul.f32 %v3775, %v3792
      %3794 = vst [vmem:[%s581] sm:$0x3] %v3793
      %p3795 = scmp.lt.s32.totalorder %s22, 1
      %s3796 = scalar_select %p3795, %s22, 1
      %s3797 = smul.addr %s3796, 2
      %s3798 = scalar_lea.vmem %s11, %s3797
      // Predicated region
      $region65: #{custom_text_clip_forward.1} parent=63 // pred_check
        %p3799 = pneg %p326
      $region66: #{custom_text_clip_forward.1} parent=63 // pred_check_branch
        %3801 = sbr.rel (%p3799) target = $region68
      $region67: #{custom_text_clip_forward.1} parent=63 // pred_region
        _
      $region68: #{custom_text_clip_forward.1} parent=63 // pred_fallthru
        _
    $region64: #{custom_text_clip_forward.1} parent=5 // pred_fallthru
      _
    %p3802 = scmp.le.s32.totalorder 2, %s17
    // Predicated region
    $region69: #{custom_text_clip_forward.1} parent=5 // pred_check
      %p3803 = pneg %p3802
    $region70: #{custom_text_clip_forward.1} parent=5 // pred_check_branch
      %3805 = sbr.rel (%p3803) target = $region72
    $region71: #{custom_text_clip_forward.1} parent=5 // pred_region
      %s3806 = ssub.s32 %s17, 2
      // Predicated region
      $region73: #{custom_text_clip_forward.1} parent=71 // pred_check
        %p3807 = pneg %p332
      $region74: #{custom_text_clip_forward.1} parent=71 // pred_check_branch
        %3809 = sbr.rel (%p3807) target = $region76
      $region75: #{custom_text_clip_forward.1} parent=71 // pred_region
        %p3810 = scmp.lt.s32.totalorder %s23, 1
        %s3811 = scalar_select %p3810, %s23, 1
        %s3812 = smul.addr %s3811, 2
        %s3813 = scalar_lea.vmem %s11, %s3812
      $region76: #{custom_text_clip_forward.1} parent=71 // pred_fallthru
        _
    $region72: #{custom_text_clip_forward.1} parent=5 // pred_fallthru
      _
  $region6: #{custom_text_clip_forward.1} parent=0 // loop_footer
    %s21 = sadd.s32 1, %s17
  $region7: #{custom_text_clip_forward.1} parent=0 // loop_footer_branch
    %16 = sbr.rel target = $region3
  $region8: #{custom_text_clip_forward.1} parent=0 // loop_exit
    _

</llo_original>
